<compile_context>
chip_gen: v5e
topology: v5e:2x2
jax: 0.10.0
libtpu: 0.0.40
codegen_flags: <defaults>
</compile_context>

<pallas_src>
import jax
import jax.numpy as jnp
from jax.experimental import pallas as pl
from jax.experimental.pallas import tpu as pltpu

EPS = 1e-5

_COMPILER_PARAMS = pltpu.CompilerParams(
    dimension_semantics=("parallel",),      # batch axis: independent per image
    vmem_limit_bytes=48 * 1024 * 1024,      # explicit budget, fits v7x's 64 MiB
)


# ------------------------------ spec helpers ---------------------------------
def _full_spec(shape):
    ndim = len(shape)
    return pl.BlockSpec(tuple(shape), lambda i: (0,) * ndim)


def _per_img_spec(shape):
    ndim = len(shape)
    return pl.BlockSpec((1,) + tuple(shape[1:]),
                        lambda i: (i,) + (0,) * (ndim - 1))


# ------------------------------- kernel bodies --------------------------------
def _make_conv1_kernel(h, w, c_in, planes, stride, h_out, w_out, has_ds):
    """conv1 (3x3, stride s, pad 1) + optional 1x1 downsample conv + BN stats."""
    hw = h_out * w_out

    def kernel(*args):
        if has_ds:
            (x_ref, w1_ref, wd_ref,
             y1_ref, st1_ref, yd_ref, std_ref,
             xpad_ref, patch_ref) = args
        else:
            (x_ref, w1_ref,
             y1_ref, st1_ref,
             xpad_ref, patch_ref) = args

        # zero only the 1-pixel border strips of the padded scratch
        xpad_ref[0:1, :, :] = jnp.zeros((1, w + 2, c_in), jnp.float32)
        xpad_ref[h + 1:h + 2, :, :] = jnp.zeros((1, w + 2, c_in), jnp.float32)
        xpad_ref[:, 0:1, :] = jnp.zeros((h + 2, 1, c_in), jnp.float32)
        xpad_ref[:, w + 1:w + 2, :] = jnp.zeros((h + 2, 1, c_in), jnp.float32)

        x = x_ref[0]                                     # (h, w, c_in) f32
        xpad_ref[1:h + 1, 1:w + 1, :] = x
        xv = xpad_ref[...]                               # (h+2, w+2, c_in)

        # im2col: build the (h_out, w, 9*c_in) patch matrix once; stride only
        # on the outer (H) axis here, W-stride applied once below.
        for kh in range(3):
            for kw in range(3):
                j = kh * 3 + kw
                slab = jax.lax.slice(
                    xv, (kh, kw, 0),
                    (kh + (h_out - 1) * stride + 1, kw + w, c_in),
                    (stride, 1, 1))                      # (h_out, w, c_in)
                patch_ref[:, :, j * c_in:(j + 1) * c_in] = slab

        pv = patch_ref[...]                              # (h_out, w, 9*c_in)
        if stride > 1:
            pv = pv[:, ::stride, :]                      # single W subsample
        pv = pv.reshape(hw, 9 * c_in).astype(jnp.bfloat16)

        # single K = 9*c_in MXU matmul, f32 accumulation
        acc = jnp.dot(pv, w1_ref[...], preferred_element_type=jnp.float32)
        y1_ref[...] = acc.reshape(1, hw, planes)
        st1_ref[0:1, 0:1, :] = jnp.sum(acc, axis=0).reshape(1, 1, planes)
        st1_ref[0:1, 1:2, :] = jnp.sum(acc * acc, axis=0).reshape(1, 1, planes)

        if has_ds:
            xs = x[::stride, ::stride, :] if stride > 1 else x
            xs = xs.reshape(hw, c_in).astype(jnp.bfloat16)
            accd = jnp.dot(xs, wd_ref[...], preferred_element_type=jnp.float32)
            yd_ref[...] = accd.reshape(1, hw, planes)
            std_ref[0:1, 0:1, :] = jnp.sum(accd, axis=0).reshape(1, 1, planes)
            std_ref[0:1, 1:2, :] = jnp.sum(accd * accd, axis=0).reshape(1, 1, planes)

    return kernel


def _make_conv2_kernel(h_out, w_out, planes):
    """folded bn1 + relu fused with conv2 (3x3, stride 1, pad 1) + BN2 stats."""
    hw = h_out * w_out

    def kernel(y1_ref, s1_ref, b1_ref, w2_ref, y2_ref, st2_ref,
               zpad_ref, patch_ref):
        # bn1 folded to scale/shift, relu, all in f32
        z = jnp.maximum(y1_ref[...] * s1_ref[...] + b1_ref[...], 0.0)
        z = z.reshape(h_out, w_out, planes)

        zpad_ref[0:1, :, :] = jnp.zeros((1, w_out + 2, planes), jnp.float32)
        zpad_ref[h_out + 1:h_out + 2, :, :] = jnp.zeros((1, w_out + 2, planes),
                                                        jnp.float32)
        zpad_ref[:, 0:1, :] = jnp.zeros((h_out + 2, 1, planes), jnp.float32)
        zpad_ref[:, w_out + 1:w_out + 2, :] = jnp.zeros((h_out + 2, 1, planes),
                                                        jnp.float32)
        zpad_ref[1:h_out + 1, 1:w_out + 1, :] = z
        zv = zpad_ref[...]

        for kh in range(3):
            for kw in range(3):
                j = kh * 3 + kw
                slab = jax.lax.slice(zv, (kh, kw, 0),
                                     (kh + h_out, kw + w_out, planes))
                patch_ref[:, :, j * planes:(j + 1) * planes] = slab

        pv = patch_ref[...].reshape(hw, 9 * planes).astype(jnp.bfloat16)
        acc = jnp.dot(pv, w2_ref[...], preferred_element_type=jnp.float32)
        y2_ref[...] = acc.reshape(1, hw, planes)
        st2_ref[0:1, 0:1, :] = jnp.sum(acc, axis=0).reshape(1, 1, planes)
        st2_ref[0:1, 1:2, :] = jnp.sum(acc * acc, axis=0).reshape(1, 1, planes)

    return kernel


def _make_final_kernel(has_ds):
    """folded bn2 + shortcut (identity or folded bn_ds) + relu."""
    def kernel(*args):
        if has_ds:
            y2_ref, sc_ref, s2_ref, b2_ref, sd_ref, bd_ref, o_ref = args
        else:
            y2_ref, sc_ref, s2_ref, b2_ref, o_ref = args
        out = y2_ref[...] * s2_ref[...] + b2_ref[...]
        sc = sc_ref[...]
        if has_ds:
            out = out + (sc * sd_ref[...] + bd_ref[...])
        else:
            out = out + sc
        o_ref[...] = jnp.maximum(out, 0.0)
    return kernel


# ------------------------------- host wrapper ---------------------------------
def _fold_bn(stats, gamma, beta, count):
    """stats: (N, 2, C) per-image [sum, sumsq] -> per-channel scale/shift."""
    s = jnp.sum(stats[:, 0, :], axis=0)
    ss = jnp.sum(stats[:, 1, :], axis=0)
    mean = s / count
    var = jnp.maximum(ss / count - mean * mean, 0.0)
    scale = gamma.reshape(-1) * jax.lax.rsqrt(var + EPS)
    shift = beta.reshape(-1) - mean * scale
    return scale.reshape(1, -1), shift.reshape(1, -1)


def basic_block(x_nchw, params, stride=1):
    """params = (w1, g1, b1, w2, g2, b2[, wd, gd, bd]); x is NCHW like PyTorch."""
    w1, g1, b1, w2, g2, b2 = params[:6]
    has_ds = len(params) > 6
    n, c_in, h, w = x_nchw.shape
    planes = w1.shape[-1]
    if not has_ds:
        assert stride == 1 and c_in == planes, (
            "identity shortcut requires stride == 1 and in_planes == planes")
    h_out = (h + 2 - 3) // stride + 1
    w_out = (w + 2 - 3) // stride + 1
    hw = h_out * w_out

    # TODO(synk): fold the NCHW->NHWC transpose into the kernel DMA index_map
    # instead of paying a separate XLA transpose pass.
    x_nhwc = jnp.transpose(x_nchw, (0, 2, 3, 1)).astype(jnp.float32)

    # host-side weight prep: (3,3,Cin,Cout) -> (9*Cin, Cout), bf16 for the MXU
    w1f = w1.reshape(9 * c_in, planes).astype(jnp.bfloat16)
    w2f = w2.reshape(9 * planes, planes).astype(jnp.bfloat16)

    # ---- pass 1: conv1 (+ optional 1x1 downsample conv) + BN statistics -----
    ins_a = [x_nhwc, w1f]
    in_specs_a = [_per_img_spec(x_nhwc.shape), _full_spec(w1f.shape)]
    out_shape_a = [jax.ShapeDtypeStruct((n, hw, planes), jnp.float32),
                   jax.ShapeDtypeStruct((n, 2, planes), jnp.float32)]
    out_specs_a = [_per_img_spec((n, hw, planes)), _per_img_spec((n, 2, planes))]
    if has_ds:
        wdf = params[6].astype(jnp.bfloat16)
        ins_a.append(wdf)
        in_specs_a.append(_full_spec(wdf.shape))
        out_shape_a += [jax.ShapeDtypeStruct((n, hw, planes), jnp.float32),
                        jax.ShapeDtypeStruct((n, 2, planes), jnp.float32)]
        out_specs_a += [_per_img_spec((n, hw, planes)),
                        _per_img_spec((n, 2, planes))]

    res_a = pl.pallas_call(
        _make_conv1_kernel(h, w, c_in, planes, stride, h_out, w_out, has_ds),
        grid=(n,),
        out_shape=tuple(out_shape_a),
        in_specs=in_specs_a,
        out_specs=tuple(out_specs_a),
        scratch_shapes=[pltpu.VMEM((h + 2, w + 2, c_in), jnp.float32),
                        pltpu.VMEM((h_out, w, 9 * c_in), jnp.float32)],
        compiler_params=_COMPILER_PARAMS,
    )(*ins_a)
    if has_ds:
        y1, st1, yd, std = res_a
    else:
        y1, st1 = res_a

    count = float(n * hw)
    s1v, b1v = _fold_bn(st1, g1, b1, count)

    # ---- pass 2: folded bn1 + relu + conv2 + BN2 statistics ------------------
    y2, st2 = pl.pallas_call(
        _make_conv2_kernel(h_out, w_out, planes),
        grid=(n,),
        out_shape=(jax.ShapeDtypeStruct((n, hw, planes), jnp.float32),
                   jax.ShapeDtypeStruct((n, 2, planes), jnp.float32)),
        in_specs=[_per_img_spec((n, hw, planes)),
                  _full_spec((1, planes)), _full_spec((1, planes)),
                  _full_spec(w2f.shape)],
        out_specs=(_per_img_spec((n, hw, planes)),
                   _per_img_spec((n, 2, planes))),
        scratch_shapes=[pltpu.VMEM((h_out + 2, w_out + 2, planes), jnp.float32),
                        pltpu.VMEM((h_out, w_out, 9 * planes), jnp.float32)],
        compiler_params=_COMPILER_PARAMS,
    )(y1, s1v, b1v, w2f)

    s2v, b2v = _fold_bn(st2, g2, b2, count)

    # ---- pass 3: folded bn2 + shortcut (+ folded bn_ds) + relu ---------------
    if has_ds:
        gd, bd = params[7], params[8]
        sdv, bdv = _fold_bn(std, gd, bd, count)
        ins_c = [y2, yd, s2v, b2v, sdv, bdv]
        in_specs_c = [_per_img_spec((n, hw, planes)),
                      _per_img_spec((n, hw, planes)),
                      _full_spec((1, planes)), _full_spec((1, planes)),
                      _full_spec((1, planes)), _full_spec((1, planes))]
    else:
        sc = x_nhwc.reshape(n, h * w, c_in)        # free host reshape (NHWC)
        ins_c = [y2, sc, s2v, b2v]
        in_specs_c = [_per_img_spec((n, hw, planes)),
                      _per_img_spec((n, hw, planes)),
                      _full_spec((1, planes)), _full_spec((1, planes))]

    out_flat = pl.pallas_call(
        _make_final_kernel(has_ds),
        grid=(n,),
        out_shape=jax.ShapeDtypeStruct((n, hw, planes), jnp.float32),
        in_specs=in_specs_c,
        out_specs=_per_img_spec((n, hw, planes)),
        compiler_params=_COMPILER_PARAMS,
    )(*ins_c)

    out_nhwc = out_flat.reshape(n, h_out, w_out, planes)
    return jnp.transpose(out_nhwc, (0, 3, 1, 2))


# ----------------------------- pure-JAX reference ------------------------------
def _ref_forward(x, params, stride):
    w1, g1, b1, w2, g2, b2 = params[:6]
    has_ds = len(params) > 6

    def conv(x, w_hwio, s, pad):
        return jax.lax.conv_general_dilated(
            x, w_hwio, (s, s), ((pad, pad), (pad, pad)),
            dimension_numbers=("NCHW", "HWIO", "NCHW"))

    def bn(x, g, b):
        mean = x.mean(axis=(0, 2, 3), keepdims=True)
        var = ((x - mean) ** 2).mean(axis=(0, 2, 3), keepdims=True)
        return ((x - mean) / jnp.sqrt(var + EPS) * g.reshape(1, -1, 1, 1)
                + b.reshape(1, -1, 1, 1))

    out = jax.nn.relu(bn(conv(x, w1, stride, 1), g1, b1))
    out = bn(conv(out, w2, 1, 1), g2, b2)
    if has_ds:
        wd, gd, bd = params[6:]
        sc = bn(conv(x, wd.reshape(1, 1, *wd.shape), stride, 0), gd, bd)
    else:
        sc = x
    return jax.nn.relu(out + sc)


# ------------------------------------- main -------------------------------------
if __name__ == "__main__":
    root = jax.random.PRNGKey(0)

    def make_params(key, c_in, planes, has_ds):
        ks = jax.random.split(key, 9)
        w1 = jax.random.normal(ks[0], (3, 3, c_in, planes), jnp.float32) * 0.1
        w2 = jax.random.normal(ks[1], (3, 3, planes, planes), jnp.float32) * 0.1
        g1 = 1.0 + 0.1 * jax.random.normal(ks[2], (planes,), jnp.float32)
        b1 = 0.1 * jax.random.normal(ks[3], (planes,), jnp.float32)
        g2 = 1.0 + 0.1 * jax.random.normal(ks[4], (planes,), jnp.float32)
        b2 = 0.1 * jax.random.normal(ks[5], (planes,), jnp.float32)
        p = [w1, g1, b1, w2, g2, b2]
        if has_ds:
            wd = jax.random.normal(ks[6], (c_in, planes), jnp.float32) * 0.1
            gd = 1.0 + 0.1 * jax.random.normal(ks[7], (planes,), jnp.float32)
            bd = 0.1 * jax.random.normal(ks[8], (planes,), jnp.float32)
            p += [wd, gd, bd]
        return tuple(p)

    N, H, W = 2, 16, 16
    configs = [
        (4, 8, 1),   # downsample branch (channel change), stride 1
        (4, 8, 2),   # downsample branch, stride 2
        (8, 8, 1),   # identity shortcut
    ]
    for idx, (c_in, planes, stride) in enumerate(configs):
        kp, kx = jax.random.split(jax.random.fold_in(root, idx))
        has_ds = (stride != 1) or (c_in != planes)
        params = make_params(kp, c_in, planes, has_ds)
        x = jax.random.normal(kx, (N, c_in, H, W), jnp.float32)

        out = jax.block_until_ready(basic_block(x, params, stride=stride))
        ref = jax.block_until_ready(_ref_forward(x, params, stride))

        assert out.shape == ref.shape, (out.shape, ref.shape)
        max_err = float(jnp.max(jnp.abs(out - ref)))
        # bf16 matmuls vs f32 reference -> slightly looser tolerance
        assert jnp.allclose(out, ref, rtol=5e-2, atol=5e-2), (idx, max_err)

    print("KERNEL_OK")
</pallas_src>

<mosaic_0001>
module attributes {stable_mosaic.version = 11 : i64} {
  func.func @kernel(%arg0: i32, %arg1: memref<1x16x16x4xf32, #tpu.memory_space<vmem>>, %arg2: memref<36x8xbf16, #tpu.memory_space<vmem>>, %arg3: memref<4x8xbf16, #tpu.memory_space<vmem>>, %arg4: memref<1x256x8xf32, #tpu.memory_space<vmem>>, %arg5: memref<1x2x8xf32, #tpu.memory_space<vmem>>, %arg6: memref<1x256x8xf32, #tpu.memory_space<vmem>>, %arg7: memref<1x2x8xf32, #tpu.memory_space<vmem>>, %arg8: memref<18x18x4xf32, #tpu.memory_space<vmem>>, %arg9: memref<16x16x36xf32, #tpu.memory_space<vmem>>) attributes {dimension_semantics = [#tpu.dimension_semantics<parallel>], iteration_bounds = array<i64: 2>, scalar_prefetch = 0 : i64, scratch_operands = 2 : i64, tpu.core_type = #tpu.core_type<tc>, window_params = [{transform_indices = @transform_0, window_bounds = array<i64: 1, 16, 16, 4>}, {pipeline_mode = #tpu.pipeline_mode<synchronous>, transform_indices = @transform_1, window_bounds = array<i64: 36, 8>}, {pipeline_mode = #tpu.pipeline_mode<synchronous>, transform_indices = @transform_2, window_bounds = array<i64: 4, 8>}, {transform_indices = @transform_3, window_bounds = array<i64: 1, 256, 8>}, {transform_indices = @transform_4, window_bounds = array<i64: 1, 2, 8>}, {transform_indices = @transform_5, window_bounds = array<i64: 1, 256, 8>}, {transform_indices = @transform_6, window_bounds = array<i64: 1, 2, 8>}]} {
    %cst = arith.constant 0.000000e+00 : f32
    %0 = vector.broadcast %cst : f32 to vector<1x18x4xf32>
    %c0 = arith.constant 0 : index
    %c0_0 = arith.constant 0 : index
    %c0_1 = arith.constant 0 : index
    %1 = vector.load %arg8[%c0, %c0_0, %c0_1] : memref<18x18x4xf32, #tpu.memory_space<vmem>>, vector<1x18x4xf32>
    tpu.vector_store %arg8[%c0, %c0_0, %c0_1], %0 {strides = array<i32>} : memref<18x18x4xf32, #tpu.memory_space<vmem>>, vector<1x18x4xf32>,
    %cst_2 = arith.constant 0.000000e+00 : f32
    %2 = vector.broadcast %cst_2 : f32 to vector<1x18x4xf32>
    %c17 = arith.constant 17 : index
    %c0_3 = arith.constant 0 : index
    %c0_4 = arith.constant 0 : index
    %3 = vector.load %arg8[%c17, %c0_3, %c0_4] : memref<18x18x4xf32, #tpu.memory_space<vmem>>, vector<1x18x4xf32>
    tpu.vector_store %arg8[%c17, %c0_3, %c0_4], %2 {strides = array<i32>} : memref<18x18x4xf32, #tpu.memory_space<vmem>>, vector<1x18x4xf32>,
    %cst_5 = arith.constant 0.000000e+00 : f32
    %4 = vector.broadcast %cst_5 : f32 to vector<18x1x4xf32>
    %c0_6 = arith.constant 0 : index
    %c0_7 = arith.constant 0 : index
    %c0_8 = arith.constant 0 : index
    %5 = vector.load %arg8[%c0_6, %c0_7, %c0_8] : memref<18x18x4xf32, #tpu.memory_space<vmem>>, vector<18x1x4xf32>
    tpu.vector_store %arg8[%c0_6, %c0_7, %c0_8], %4 {strides = array<i32>} : memref<18x18x4xf32, #tpu.memory_space<vmem>>, vector<18x1x4xf32>,
    %cst_9 = arith.constant 0.000000e+00 : f32
    %6 = vector.broadcast %cst_9 : f32 to vector<18x1x4xf32>
    %c0_10 = arith.constant 0 : index
    %c17_11 = arith.constant 17 : index
    %c0_12 = arith.constant 0 : index
    %7 = vector.load %arg8[%c0_10, %c17_11, %c0_12] : memref<18x18x4xf32, #tpu.memory_space<vmem>>, vector<18x1x4xf32>
    tpu.vector_store %arg8[%c0_10, %c17_11, %c0_12], %6 {strides = array<i32>} : memref<18x18x4xf32, #tpu.memory_space<vmem>>, vector<18x1x4xf32>,
    %c0_13 = arith.constant 0 : index
    %c0_14 = arith.constant 0 : index
    %c0_15 = arith.constant 0 : index
    %c0_16 = arith.constant 0 : index
    %8 = vector.load %arg1[%c0_13, %c0_14, %c0_15, %c0_16] : memref<1x16x16x4xf32, #tpu.memory_space<vmem>>, vector<1x16x16x4xf32>
    %9 = vector.shape_cast %8 : vector<1x16x16x4xf32> to vector<16x16x4xf32>
    %c1 = arith.constant 1 : index
    %c1_17 = arith.constant 1 : index
    %c0_18 = arith.constant 0 : index
    %10 = vector.load %arg8[%c1, %c1_17, %c0_18] : memref<18x18x4xf32, #tpu.memory_space<vmem>>, vector<16x16x4xf32>
    tpu.vector_store %arg8[%c1, %c1_17, %c0_18], %9 {strides = array<i32>} : memref<18x18x4xf32, #tpu.memory_space<vmem>>, vector<16x16x4xf32>,
    %c0_19 = arith.constant 0 : index
    %c0_20 = arith.constant 0 : index
    %c0_21 = arith.constant 0 : index
    %11 = vector.load %arg8[%c0_19, %c0_20, %c0_21] : memref<18x18x4xf32, #tpu.memory_space<vmem>>, vector<18x18x4xf32>
    %12 = vector.extract_strided_slice %11 {offsets = [0, 0, 0], sizes = [16, 16, 4], strides = [1, 1, 1]} : vector<18x18x4xf32> to vector<16x16x4xf32>
    %c0_22 = arith.constant 0 : index
    %c0_23 = arith.constant 0 : index
    %c0_24 = arith.constant 0 : index
    %13 = vector.load %arg9[%c0_22, %c0_23, %c0_24] : memref<16x16x36xf32, #tpu.memory_space<vmem>>, vector<16x16x4xf32>
    tpu.vector_store %arg9[%c0_22, %c0_23, %c0_24], %12 {strides = array<i32>} : memref<16x16x36xf32, #tpu.memory_space<vmem>>, vector<16x16x4xf32>,
    %14 = vector.extract_strided_slice %11 {offsets = [0, 1, 0], sizes = [16, 16, 4], strides = [1, 1, 1]} : vector<18x18x4xf32> to vector<16x16x4xf32>
    %c0_25 = arith.constant 0 : index
    %c0_26 = arith.constant 0 : index
    %c4 = arith.constant 4 : index
    %15 = vector.load %arg9[%c0_25, %c0_26, %c4] : memref<16x16x36xf32, #tpu.memory_space<vmem>>, vector<16x16x4xf32>
    tpu.vector_store %arg9[%c0_25, %c0_26, %c4], %14 {strides = array<i32>} : memref<16x16x36xf32, #tpu.memory_space<vmem>>, vector<16x16x4xf32>,
    %16 = vector.extract_strided_slice %11 {offsets = [0, 2, 0], sizes = [16, 16, 4], strides = [1, 1, 1]} : vector<18x18x4xf32> to vector<16x16x4xf32>
    %c0_27 = arith.constant 0 : index
    %c0_28 = arith.constant 0 : index
    %c8 = arith.constant 8 : index
    %17 = vector.load %arg9[%c0_27, %c0_28, %c8] : memref<16x16x36xf32, #tpu.memory_space<vmem>>, vector<16x16x4xf32>
    tpu.vector_store %arg9[%c0_27, %c0_28, %c8], %16 {strides = array<i32>} : memref<16x16x36xf32, #tpu.memory_space<vmem>>, vector<16x16x4xf32>,
    %18 = vector.extract_strided_slice %11 {offsets = [1, 0, 0], sizes = [16, 16, 4], strides = [1, 1, 1]} : vector<18x18x4xf32> to vector<16x16x4xf32>
    %c0_29 = arith.constant 0 : index
    %c0_30 = arith.constant 0 : index
    %c12 = arith.constant 12 : index
    %19 = vector.load %arg9[%c0_29, %c0_30, %c12] : memref<16x16x36xf32, #tpu.memory_space<vmem>>, vector<16x16x4xf32>
    tpu.vector_store %arg9[%c0_29, %c0_30, %c12], %18 {strides = array<i32>} : memref<16x16x36xf32, #tpu.memory_space<vmem>>, vector<16x16x4xf32>,
    %20 = vector.extract_strided_slice %11 {offsets = [1, 1, 0], sizes = [16, 16, 4], strides = [1, 1, 1]} : vector<18x18x4xf32> to vector<16x16x4xf32>
    %c0_31 = arith.constant 0 : index
    %c0_32 = arith.constant 0 : index
    %c16 = arith.constant 16 : index
    %21 = vector.load %arg9[%c0_31, %c0_32, %c16] : memref<16x16x36xf32, #tpu.memory_space<vmem>>, vector<16x16x4xf32>
    tpu.vector_store %arg9[%c0_31, %c0_32, %c16], %20 {strides = array<i32>} : memref<16x16x36xf32, #tpu.memory_space<vmem>>, vector<16x16x4xf32>,
    %22 = vector.extract_strided_slice %11 {offsets = [1, 2, 0], sizes = [16, 16, 4], strides = [1, 1, 1]} : vector<18x18x4xf32> to vector<16x16x4xf32>
    %c0_33 = arith.constant 0 : index
    %c0_34 = arith.constant 0 : index
    %c20 = arith.constant 20 : index
    %23 = vector.load %arg9[%c0_33, %c0_34, %c20] : memref<16x16x36xf32, #tpu.memory_space<vmem>>, vector<16x16x4xf32>
    tpu.vector_store %arg9[%c0_33, %c0_34, %c20], %22 {strides = array<i32>} : memref<16x16x36xf32, #tpu.memory_space<vmem>>, vector<16x16x4xf32>,
    %24 = vector.extract_strided_slice %11 {offsets = [2, 0, 0], sizes = [16, 16, 4], strides = [1, 1, 1]} : vector<18x18x4xf32> to vector<16x16x4xf32>
    %c0_35 = arith.constant 0 : index
    %c0_36 = arith.constant 0 : index
    %c24 = arith.constant 24 : index
    %25 = vector.load %arg9[%c0_35, %c0_36, %c24] : memref<16x16x36xf32, #tpu.memory_space<vmem>>, vector<16x16x4xf32>
    tpu.vector_store %arg9[%c0_35, %c0_36, %c24], %24 {strides = array<i32>} : memref<16x16x36xf32, #tpu.memory_space<vmem>>, vector<16x16x4xf32>,
    %26 = vector.extract_strided_slice %11 {offsets = [2, 1, 0], sizes = [16, 16, 4], strides = [1, 1, 1]} : vector<18x18x4xf32> to vector<16x16x4xf32>
    %c0_37 = arith.constant 0 : index
    %c0_38 = arith.constant 0 : index
    %c28 = arith.constant 28 : index
    %27 = vector.load %arg9[%c0_37, %c0_38, %c28] : memref<16x16x36xf32, #tpu.memory_space<vmem>>, vector<16x16x4xf32>
    tpu.vector_store %arg9[%c0_37, %c0_38, %c28], %26 {strides = array<i32>} : memref<16x16x36xf32, #tpu.memory_space<vmem>>, vector<16x16x4xf32>,
    %28 = vector.extract_strided_slice %11 {offsets = [2, 2, 0], sizes = [16, 16, 4], strides = [1, 1, 1]} : vector<18x18x4xf32> to vector<16x16x4xf32>
    %c0_39 = arith.constant 0 : index
    %c0_40 = arith.constant 0 : index
    %c32 = arith.constant 32 : index
    %29 = vector.load %arg9[%c0_39, %c0_40, %c32] : memref<16x16x36xf32, #tpu.memory_space<vmem>>, vector<16x16x4xf32>
    tpu.vector_store %arg9[%c0_39, %c0_40, %c32], %28 {strides = array<i32>} : memref<16x16x36xf32, #tpu.memory_space<vmem>>, vector<16x16x4xf32>,
    %c0_41 = arith.constant 0 : index
    %c0_42 = arith.constant 0 : index
    %c0_43 = arith.constant 0 : index
    %30 = vector.load %arg9[%c0_41, %c0_42, %c0_43] : memref<16x16x36xf32, #tpu.memory_space<vmem>>, vector<16x16x36xf32>
    %31 = vector.shape_cast %30 : vector<16x16x36xf32> to vector<256x36xf32>
    %32 = arith.truncf %31 : vector<256x36xf32> to vector<256x36xbf16>
    %c0_44 = arith.constant 0 : index
    %c0_45 = arith.constant 0 : index
    %33 = vector.load %arg2[%c0_44, %c0_45] : memref<36x8xbf16, #tpu.memory_space<vmem>>, vector<36x8xbf16>
    %cst_46 = arith.constant dense<0.000000e+00> : vector<256x8xf32>
    %34 = tpu.matmul %32, %33, %cst_46 {dimension_numbers = #tpu.dot_dimension_numbers<[1], [0], [0], [1], [0, 0, 1, 1], [], []>} : vector<256x36xbf16>, vector<36x8xbf16>, vector<256x8xf32> -> vector<256x8xf32>
    %35 = vector.shape_cast %34 : vector<256x8xf32> to vector<1x256x8xf32>
    %c0_47 = arith.constant 0 : index
    %c0_48 = arith.constant 0 : index
    %c0_49 = arith.constant 0 : index
    %36 = vector.load %arg4[%c0_47, %c0_48, %c0_49] : memref<1x256x8xf32, #tpu.memory_space<vmem>>, vector<1x256x8xf32>
    tpu.vector_store %arg4[%c0_47, %c0_48, %c0_49], %35 {strides = array<i32>} : memref<1x256x8xf32, #tpu.memory_space<vmem>>, vector<1x256x8xf32>,
    %cst_50 = arith.constant dense<0.000000e+00> : vector<8xf32>
    %37 = vector.multi_reduction <add>, %34, %cst_50 [0] : vector<256x8xf32> to vector<8xf32>
    %38 = vector.shape_cast %37 : vector<8xf32> to vector<1x1x8xf32>
    %c0_51 = arith.constant 0 : index
    %c0_52 = arith.constant 0 : index
    %c0_53 = arith.constant 0 : index
    %39 = vector.load %arg5[%c0_51, %c0_52, %c0_53] : memref<1x2x8xf32, #tpu.memory_space<vmem>>, vector<1x1x8xf32>
    tpu.vector_store %arg5[%c0_51, %c0_52, %c0_53], %38 {strides = array<i32>} : memref<1x2x8xf32, #tpu.memory_space<vmem>>, vector<1x1x8xf32>,
    %40 = arith.mulf %34, %34 : vector<256x8xf32>
    %cst_54 = arith.constant dense<0.000000e+00> : vector<8xf32>
    %41 = vector.multi_reduction <add>, %40, %cst_54 [0] : vector<256x8xf32> to vector<8xf32>
    %42 = vector.shape_cast %41 : vector<8xf32> to vector<1x1x8xf32>
    %c0_55 = arith.constant 0 : index
    %c1_56 = arith.constant 1 : index
    %c0_57 = arith.constant 0 : index
    %43 = vector.load %arg5[%c0_55, %c1_56, %c0_57] : memref<1x2x8xf32, #tpu.memory_space<vmem>>, vector<1x1x8xf32>
    tpu.vector_store %arg5[%c0_55, %c1_56, %c0_57], %42 {strides = array<i32>} : memref<1x2x8xf32, #tpu.memory_space<vmem>>, vector<1x1x8xf32>,
    %44 = vector.shape_cast %9 : vector<16x16x4xf32> to vector<256x4xf32>
    %45 = arith.truncf %44 : vector<256x4xf32> to vector<256x4xbf16>
    %c0_58 = arith.constant 0 : index
    %c0_59 = arith.constant 0 : index
    %46 = vector.load %arg3[%c0_58, %c0_59] : memref<4x8xbf16, #tpu.memory_space<vmem>>, vector<4x8xbf16>
    %cst_60 = arith.constant dense<0.000000e+00> : vector<256x8xf32>
    %47 = tpu.matmul %45, %46, %cst_60 {dimension_numbers = #tpu.dot_dimension_numbers<[1], [0], [0], [1], [0, 0, 1, 1], [], []>} : vector<256x4xbf16>, vector<4x8xbf16>, vector<256x8xf32> -> vector<256x8xf32>
    %48 = vector.shape_cast %47 : vector<256x8xf32> to vector<1x256x8xf32>
    %c0_61 = arith.constant 0 : index
    %c0_62 = arith.constant 0 : index
    %c0_63 = arith.constant 0 : index
    %49 = vector.load %arg6[%c0_61, %c0_62, %c0_63] : memref<1x256x8xf32, #tpu.memory_space<vmem>>, vector<1x256x8xf32>
    tpu.vector_store %arg6[%c0_61, %c0_62, %c0_63], %48 {strides = array<i32>} : memref<1x256x8xf32, #tpu.memory_space<vmem>>, vector<1x256x8xf32>,
    %cst_64 = arith.constant dense<0.000000e+00> : vector<8xf32>
    %50 = vector.multi_reduction <add>, %47, %cst_64 [0] : vector<256x8xf32> to vector<8xf32>
    %51 = vector.shape_cast %50 : vector<8xf32> to vector<1x1x8xf32>
    %c0_65 = arith.constant 0 : index
    %c0_66 = arith.constant 0 : index
    %c0_67 = arith.constant 0 : index
    %52 = vector.load %arg7[%c0_65, %c0_66, %c0_67] : memref<1x2x8xf32, #tpu.memory_space<vmem>>, vector<1x1x8xf32>
    tpu.vector_store %arg7[%c0_65, %c0_66, %c0_67], %51 {strides = array<i32>} : memref<1x2x8xf32, #tpu.memory_space<vmem>>, vector<1x1x8xf32>,
    %53 = arith.mulf %47, %47 : vector<256x8xf32>
    %cst_68 = arith.constant dense<0.000000e+00> : vector<8xf32>
    %54 = vector.multi_reduction <add>, %53, %cst_68 [0] : vector<256x8xf32> to vector<8xf32>
    %55 = vector.shape_cast %54 : vector<8xf32> to vector<1x1x8xf32>
    %c0_69 = arith.constant 0 : index
    %c1_70 = arith.constant 1 : index
    %c0_71 = arith.constant 0 : index
    %56 = vector.load %arg7[%c0_69, %c1_70, %c0_71] : memref<1x2x8xf32, #tpu.memory_space<vmem>>, vector<1x1x8xf32>
    tpu.vector_store %arg7[%c0_69, %c1_70, %c0_71], %55 {strides = array<i32>} : memref<1x2x8xf32, #tpu.memory_space<vmem>>, vector<1x1x8xf32>,
    return
  }
  func.func @transform_0(%arg0: i32) -> (i32, i32, i32, i32) {
    %c0_i32 = arith.constant 0 : i32
    %c0_i32_0 = arith.constant 0 : i32
    %c0_i32_1 = arith.constant 0 : i32
    %c0_i32_2 = arith.constant 0 : i32
    return %arg0, %c0_i32, %c0_i32_0, %c0_i32_1 : i32, i32, i32, i32
  }
  func.func @transform_1(%arg0: i32) -> (i32, i32) {
    %c0_i32 = arith.constant 0 : i32
    %c0_i32_0 = arith.constant 0 : i32
    %c0_i32_1 = arith.constant 0 : i32
    return %c0_i32, %c0_i32_0 : i32, i32
  }
  func.func @transform_2(%arg0: i32) -> (i32, i32) {
    %c0_i32 = arith.constant 0 : i32
    %c0_i32_0 = arith.constant 0 : i32
    %c0_i32_1 = arith.constant 0 : i32
    return %c0_i32, %c0_i32_0 : i32, i32
  }
  func.func @transform_3(%arg0: i32) -> (i32, i32, i32) {
    %c0_i32 = arith.constant 0 : i32
    %c0_i32_0 = arith.constant 0 : i32
    %c0_i32_1 = arith.constant 0 : i32
    return %arg0, %c0_i32, %c0_i32_0 : i32, i32, i32
  }
  func.func @transform_4(%arg0: i32) -> (i32, i32, i32) {
    %c0_i32 = arith.constant 0 : i32
    %c0_i32_0 = arith.constant 0 : i32
    %c0_i32_1 = arith.constant 0 : i32
    return %arg0, %c0_i32, %c0_i32_0 : i32, i32, i32
  }
  func.func @transform_5(%arg0: i32) -> (i32, i32, i32) {
    %c0_i32 = arith.constant 0 : i32
    %c0_i32_0 = arith.constant 0 : i32
    %c0_i32_1 = arith.constant 0 : i32
    return %arg0, %c0_i32, %c0_i32_0 : i32, i32, i32
  }
  func.func @transform_6(%arg0: i32) -> (i32, i32, i32) {
    %c0_i32 = arith.constant 0 : i32
    %c0_i32_0 = arith.constant 0 : i32
    %c0_i32_1 = arith.constant 0 : i32
    return %arg0, %c0_i32, %c0_i32_0 : i32, i32, i32
  }
}

</mosaic_0001>

<llo_original>
// kernel: tpu_custom_call.1
$region0: #{tpu_custom_call.1}
  #allocation0 [shape = 'u32[]', space=smem, size = 0x4, offset = 0x4, fixed_abs, tag = 'smem constant byte address 0x4 - core index']
  #allocation1 [shape = 'u32[72,128]{1,0:T(1,128)}', space=vmem, size = 0x9000, scoped, tag = 'internal scratch']
  #allocation2 [shape = 'f32[18,18,4]{2,1,0:T(8,128)}', space=vmem, size = 0x36000, scoped, tag = 'scratch operand']
  #allocation3 [shape = 'f32[16,16,36]{2,1,0:T(8,128)}', space=vmem, size = 0x20000, scoped, tag = 'scratch operand']
  %s0 = inlined_call_operand.vmem [shape: f32[2,16,16,4], index: 0, kind: input, shape index: {}]
  %s1 = inlined_call_operand.vmem [shape: bf16[36,8], index: 1, kind: input, shape index: {}]
  %s2 = inlined_call_operand.vmem [shape: bf16[4,8], index: 2, kind: input, shape index: {}]
  %s3 = inlined_call_operand.vmem [shape: f32[2,256,8], index: 3, kind: output, shape index: {0}]
  %s4 = inlined_call_operand.hbm [shape: f32[2,2,8], index: 4, kind: output, shape index: {1}]
  %s5 = inlined_call_operand.vmem [shape: f32[2,256,8], index: 5, kind: output, shape index: {2}]
  %s6 = inlined_call_operand.hbm [shape: f32[2,2,8], index: 6, kind: output, shape index: {3}]
  %7 = xla_tuple %s3, %s4, %s5, %s6
  %s8 = sld [smem:[#allocation0]]
  $region69: #{tpu_custom_call.1} parent=0
    _
  %s10 = ssub.s32 1, %s8
  %s11 = scalar_select 0, %s10, %s8
  $region1: #{tpu_custom_call.1} parent=0
    #allocation4 [shape = 'u8[2048]{0}', space=vmem, size = 0x800, scoped, tag = 'output window, operand 1']
    #allocation5 [shape = 's32[2]{0}', space=sflag, size = 0x8, scoped, tag = 'scoped memory for tpu_custom_call.1']
    #allocation6 [shape = 'u8[2048]{0}', space=vmem, size = 0x800, scoped, tag = 'output window, operand 3']
    #allocation7 [shape = 's32[2]{0}', space=sflag, size = 0x8, scoped, tag = 'scoped memory for tpu_custom_call.1']
    %12 = vsyncpa [#allocation5], 0
    %s13 = scalar_lea.sflag [#allocation5], 1
    %14 = vsyncpa %s13, 0
    %15 = vsyncpa [#allocation7], 0
    %s16 = scalar_lea.sflag [#allocation7], 1
    %17 = vsyncpa %s16, 0
    loop: start=0, step=1, limit=4
    $region2: #{tpu_custom_call.1} parent=1 // loop_pre_header
      _
    $region3: #{tpu_custom_call.1} parent=1 // loop_header
      %s19 = sphi 0, %s23
      %p20 = scmp.ge.s32.totalorder %s19, 4
      %s29 = sphi 0, %s31
      %s32 = sphi 0, %s29
      %s33 = sphi 0, %s32
      %s49 = sphi 0, %s33
      %s53 = sphi 0, %s53
      %s55 = sphi 0, %s53
      %s56 = sphi 0, %s55
      %s70 = sphi 0, %s56
      %s74 = sphi 0, %s74
      %s76 = sphi 0, %s74
      %s77 = sphi 0, %s76
      %s91 = sphi 0, %s77
      %s97 = sphi 0, %s99
      %s100 = sphi 0, %s97
      %s101 = sphi 0, %s100
      %s117 = sphi 0, %s101
      %s123 = sphi 0, %s125
      %s126 = sphi 0, %s123
      %s127 = sphi 0, %s126
      %s143 = sphi 0, %s127
      %s149 = sphi 0, %s151
      %s152 = sphi 0, %s149
      %s153 = sphi 0, %s152
      %s169 = sphi 0, %s153
      %s175 = sphi 0, %s177
      %s178 = sphi 0, %s175
      %s179 = sphi 0, %s178
      %s195 = sphi 0, %s179
    $region4: #{tpu_custom_call.1} parent=1 // loop_header_branch
      %22 = sbr.rel (%p20) target = $region8
    $region5: #{tpu_custom_call.1} parent=1 // loop_body
      %s24 = ssub.s32 %s19, 1
      %s25 = ssub.s32 %s19, 2
      %s26 = sadd.s32 %s19, 1
      %s27 = ssub.s32 %s19, %s26
      %p28 = scmp.eq.s32.totalorder %s27, 0
      %s30 = sadd.s32 %s29, 1
      %s31 = scalar_select %p28, %s29, %s30
      %p34 = pneg %p28
      %p35 = scmp.eq.s32.totalorder %s19, 1
      %p36 = por %p34, %p35
      %p37 = scmp.ne.s32.totalorder %s29, %s32
      %p38 = scmp.eq.s32.totalorder %s19, 0
      %p39 = por %p37, %p38
      %p40 = scmp.ne.s32.totalorder %s29, %s32
      %p41 = scmp.eq.s32.totalorder %s24, 1
      %p42 = por %p40, %p41
      %p43 = scmp.ne.s32.totalorder %s32, %s33
      %p44 = scmp.eq.s32.totalorder %s24, 0
      %p45 = por %p43, %p44
      %p46 = scmp.ne.s32.totalorder %s32, %s33
      %p47 = scmp.eq.s32.totalorder %s25, 1
      %p48 = por %p46, %p47
      %p50 = scmp.ne.s32.totalorder %s33, %s49
      %p51 = scmp.eq.s32.totalorder %s25, 0
      %p52 = por %p50, %p51
      %s54 = sadd.s32 %s53, 1
      %p57 = scmp.eq.s32.totalorder %s19, 1
      %p58 = scmp.ne.s32.totalorder %s53, %s55
      %p59 = scmp.eq.s32.totalorder %s19, 0
      %p60 = por %p58, %p59
      %p61 = scmp.ne.s32.totalorder %s53, %s55
      %p62 = scmp.eq.s32.totalorder %s24, 1
      %p63 = por %p61, %p62
      %p64 = scmp.ne.s32.totalorder %s55, %s56
      %p65 = scmp.eq.s32.totalorder %s24, 0
      %p66 = por %p64, %p65
      %p67 = scmp.ne.s32.totalorder %s55, %s56
      %p68 = scmp.eq.s32.totalorder %s25, 1
      %p69 = por %p67, %p68
      %p71 = scmp.ne.s32.totalorder %s56, %s70
      %p72 = scmp.eq.s32.totalorder %s25, 0
      %p73 = por %p71, %p72
      %s75 = sadd.s32 %s74, 1
      %p78 = scmp.eq.s32.totalorder %s19, 1
      %p79 = scmp.ne.s32.totalorder %s74, %s76
      %p80 = scmp.eq.s32.totalorder %s19, 0
      %p81 = por %p79, %p80
      %p82 = scmp.ne.s32.totalorder %s74, %s76
      %p83 = scmp.eq.s32.totalorder %s24, 1
      %p84 = por %p82, %p83
      %p85 = scmp.ne.s32.totalorder %s76, %s77
      %p86 = scmp.eq.s32.totalorder %s24, 0
      %p87 = por %p85, %p86
      %p88 = scmp.ne.s32.totalorder %s76, %s77
      %p89 = scmp.eq.s32.totalorder %s25, 1
      %p90 = por %p88, %p89
      %p92 = scmp.ne.s32.totalorder %s77, %s91
      %p93 = scmp.eq.s32.totalorder %s25, 0
      %p94 = por %p92, %p93
      %s95 = ssub.s32 %s19, %s26
      %p96 = scmp.eq.s32.totalorder %s95, 0
      %s98 = sadd.s32 %s97, 1
      %s99 = scalar_select %p96, %s97, %s98
      %p102 = pneg %p96
      %p103 = scmp.eq.s32.totalorder %s19, 1
      %p104 = por %p102, %p103
      %p105 = scmp.ne.s32.totalorder %s97, %s100
      %p106 = scmp.eq.s32.totalorder %s19, 0
      %p107 = por %p105, %p106
      %p108 = scmp.ne.s32.totalorder %s97, %s100
      %p109 = scmp.eq.s32.totalorder %s24, 1
      %p110 = por %p108, %p109
      %p111 = scmp.ne.s32.totalorder %s100, %s101
      %p112 = scmp.eq.s32.totalorder %s24, 0
      %p113 = por %p111, %p112
      %p114 = scmp.ne.s32.totalorder %s100, %s101
      %p115 = scmp.eq.s32.totalorder %s25, 1
      %p116 = por %p114, %p115
      %p118 = scmp.ne.s32.totalorder %s101, %s117
      %p119 = scmp.eq.s32.totalorder %s25, 0
      %p120 = por %p118, %p119
      %s121 = ssub.s32 %s19, %s26
      %p122 = scmp.eq.s32.totalorder %s121, 0
      %s124 = sadd.s32 %s123, 1
      %s125 = scalar_select %p122, %s123, %s124
      %p128 = pneg %p122
      %p129 = scmp.eq.s32.totalorder %s19, 1
      %p130 = por %p128, %p129
      %p131 = scmp.ne.s32.totalorder %s123, %s126
      %p132 = scmp.eq.s32.totalorder %s19, 0
      %p133 = por %p131, %p132
      %p134 = scmp.ne.s32.totalorder %s123, %s126
      %p135 = scmp.eq.s32.totalorder %s24, 1
      %p136 = por %p134, %p135
      %p137 = scmp.ne.s32.totalorder %s126, %s127
      %p138 = scmp.eq.s32.totalorder %s24, 0
      %p139 = por %p137, %p138
      %p140 = scmp.ne.s32.totalorder %s126, %s127
      %p141 = scmp.eq.s32.totalorder %s25, 1
      %p142 = por %p140, %p141
      %p144 = scmp.ne.s32.totalorder %s127, %s143
      %p145 = scmp.eq.s32.totalorder %s25, 0
      %p146 = por %p144, %p145
      %s147 = ssub.s32 %s19, %s26
      %p148 = scmp.eq.s32.totalorder %s147, 0
      %s150 = sadd.s32 %s149, 1
      %s151 = scalar_select %p148, %s149, %s150
      %p154 = pneg %p148
      %p155 = scmp.eq.s32.totalorder %s19, 1
      %p156 = por %p154, %p155
      %p157 = scmp.ne.s32.totalorder %s149, %s152
      %p158 = scmp.eq.s32.totalorder %s19, 0
      %p159 = por %p157, %p158
      %p160 = scmp.ne.s32.totalorder %s149, %s152
      %p161 = scmp.eq.s32.totalorder %s24, 1
      %p162 = por %p160, %p161
      %p163 = scmp.ne.s32.totalorder %s152, %s153
      %p164 = scmp.eq.s32.totalorder %s24, 0
      %p165 = por %p163, %p164
      %p166 = scmp.ne.s32.totalorder %s152, %s153
      %p167 = scmp.eq.s32.totalorder %s25, 1
      %p168 = por %p166, %p167
      %p170 = scmp.ne.s32.totalorder %s153, %s169
      %p171 = scmp.eq.s32.totalorder %s25, 0
      %p172 = por %p170, %p171
      %s173 = ssub.s32 %s19, %s26
      %p174 = scmp.eq.s32.totalorder %s173, 0
      %s176 = sadd.s32 %s175, 1
      %s177 = scalar_select %p174, %s175, %s176
      %p180 = pneg %p174
      %p181 = scmp.eq.s32.totalorder %s19, 1
      %p182 = por %p180, %p181
      %p183 = scmp.ne.s32.totalorder %s175, %s178
      %p184 = scmp.eq.s32.totalorder %s19, 0
      %p185 = por %p183, %p184
      %p186 = scmp.ne.s32.totalorder %s175, %s178
      %p187 = scmp.eq.s32.totalorder %s24, 1
      %p188 = por %p186, %p187
      %p189 = scmp.ne.s32.totalorder %s178, %s179
      %p190 = scmp.eq.s32.totalorder %s24, 0
      %p191 = por %p189, %p190
      %p192 = scmp.ne.s32.totalorder %s178, %s179
      %p193 = scmp.eq.s32.totalorder %s25, 1
      %p194 = por %p192, %p193
      %p196 = scmp.ne.s32.totalorder %s179, %s195
      %p197 = scmp.eq.s32.totalorder %s25, 0
      %p198 = por %p196, %p197
      %p199 = scmp.le.s32.totalorder 1, %s19
      %p200 = scmp.lt.s32.totalorder %s19, 3
      %p201 = pnand %p199, %p200
      %p202 = pneg %p201
      // Predicated region
      $region9: #{tpu_custom_call.1} parent=5 // pred_check
        _
      $region10: #{tpu_custom_call.1} parent=5 // pred_check_branch
        %204 = sbr.rel (%p201) target = $region12
      $region11: #{tpu_custom_call.1} parent=5 // pred_region
        %s205 = ssub.s32 %s19, 1
        // Predicated region
        $region13: #{tpu_custom_call.1} parent=11 // pred_check
          %p206 = pneg %p66
        $region14: #{tpu_custom_call.1} parent=11 // pred_check_branch
          %208 = sbr.rel (%p206) target = $region16
        $region15: #{tpu_custom_call.1} parent=11 // pred_region
          _
        $region16: #{tpu_custom_call.1} parent=11 // pred_fallthru
          _
        // Predicated region
        $region17: #{tpu_custom_call.1} parent=11 // pred_check
          %p209 = pneg %p87
        $region18: #{tpu_custom_call.1} parent=11 // pred_check_branch
          %211 = sbr.rel (%p209) target = $region20
        $region19: #{tpu_custom_call.1} parent=11 // pred_region
          _
        $region20: #{tpu_custom_call.1} parent=11 // pred_fallthru
          _
      $region12: #{tpu_custom_call.1} parent=5 // pred_fallthru
        _
      %p212 = scmp.lt.s32.totalorder %s19, 2
      // Predicated region
      $region21: #{tpu_custom_call.1} parent=5 // pred_check
        %p213 = pneg %p212
      $region22: #{tpu_custom_call.1} parent=5 // pred_check_branch
        %215 = sbr.rel (%p213) target = $region24
      $region23: #{tpu_custom_call.1} parent=5 // pred_region
        // Predicated region
        $region25: #{tpu_custom_call.1} parent=23 // pred_check
          %p216 = pneg %p39
        $region26: #{tpu_custom_call.1} parent=23 // pred_check_branch
          %218 = sbr.rel (%p216) target = $region28
        $region27: #{tpu_custom_call.1} parent=23 // pred_region
          %p219 = scmp.lt.s32.totalorder %s19, 1
          %s220 = scalar_select %p219, %s19, 1
          %s221 = smul.addr %s220, 32
          %s222 = smul.addr %s221, 8
          %s223 = scalar_lea.vmem %s0, %s222
        $region28: #{tpu_custom_call.1} parent=23 // pred_fallthru
          _
      $region24: #{tpu_custom_call.1} parent=5 // pred_fallthru
        _
      %p224 = scmp.le.s32.totalorder 1, %s19
      %p225 = scmp.lt.s32.totalorder %s19, 3
      %p226 = pnand %p224, %p225
      %p227 = pneg %p226
      // Predicated region
      $region29: #{tpu_custom_call.1} parent=5 // pred_check
        _
      $region30: #{tpu_custom_call.1} parent=5 // pred_check_branch
        %229 = sbr.rel (%p226) target = $region32
      $region31: #{tpu_custom_call.1} parent=5 // pred_region
        %s230 = ssub.s32 %s19, 1
        %p231 = scmp.lt.s32.totalorder %s24, 1
        %s232 = scalar_select %p231, %s24, 1
        %s233 = smul.addr %s232, 32
        %s234 = smul.addr %s233, 8
        %s235 = scalar_lea.vmem %s0, %s234
        %p236 = pneg %p45
        %p237 = pneg %p42
        %p238 = pneg %p66
        %p239 = pneg %p63
        %p240 = pneg %p87
        %p241 = pneg %p84
        %p242 = pneg %p113
        %p243 = pneg %p110
        %p244 = scmp.lt.s32.totalorder %s24, 1
        %s245 = scalar_select %p244, %s24, 1
        %s246 = smul.addr %s245, 32
        %s247 = smul.addr %s246, 8
        %s248 = scalar_lea.vmem %s3, %s247
        %p249 = pneg %p139
        %p250 = pneg %p136
        %s251 = sand.u32 %s126, 1
        %s252 = scalar_lea.sflag [#allocation5], %s251
        %s253 = sand.u32 %s126, 1
        %s254 = smul.addr %s253, 2
        %s255 = scalar_lea.vmem [#allocation4], %s254
        %p256 = pneg %p165
        %p257 = pneg %p162
        %p258 = scmp.lt.s32.totalorder %s24, 1
        %s259 = scalar_select %p258, %s24, 1
        %s260 = smul.addr %s259, 32
        %s261 = smul.addr %s260, 8
        %s262 = scalar_lea.vmem %s5, %s261
        %p263 = pneg %p191
        %p264 = pneg %p188
        %s265 = sand.u32 %s178, 1
        %s266 = scalar_lea.sflag [#allocation7], %s265
        %s267 = sand.u32 %s178, 1
        %s268 = smul.addr %s267, 2
        %s269 = scalar_lea.vmem [#allocation6], %s268
        %p270 = scmp.lt.s32.totalorder %s24, 1
        %s271 = scalar_select %p270, %s24, 1
        %s272 = smul.addr %s271, 32
        %s273 = smul.addr %s272, 8
        %s274 = scalar_lea.vmem %s0, %s273
        %p275 = scmp.lt.s32.totalorder %s24, 1
        %s276 = scalar_select %p275, %s24, 1
        %s277 = smul.addr %s276, 32
        %s278 = smul.addr %s277, 8
        %s279 = scalar_lea.vmem %s3, %s278
        %p280 = scmp.lt.s32.totalorder %s24, 1
        %s281 = scalar_select %p280, %s24, 1
        %s282 = smul.addr %s281, 32
        %s283 = smul.addr %s282, 8
        %s284 = scalar_lea.vmem %s5, %s283
        %vm286 = vcmask 31744
        %287 = vst.msk [vmem:[#allocation2] sm:$0xff] %vm286, 0.0
        %288 = vst.msk [vmem:[#allocation2 + $0x8] sm:$0xff] %vm286, 0.0
        %vm289 = vcmask 25600
        %290 = vst.msk [vmem:[#allocation2 + $0x10] sm:$0x3] %vm289, 0.0
        %s291 = scalar_lea.vmem [#allocation2], 408
        %292 = vst.msk [vmem:[%s291] sm:$0xff] %vm286, 0.0
        %293 = vst.msk [vmem:[%s291 + $0x8] sm:$0xff] %vm286, 0.0
        %294 = vst.msk [vmem:[%s291 + $0x10] sm:$0x3] %vm289, 0.0
        %vm295 = vcmask 24576
        %296 = vst.msk [vmem:[#allocation2] sm:$0x1] %vm295, 0.0
        %297 = vst.msk [vmem:[#allocation2 + $0x18] sm:$0x1] %vm295, 0.0
        %298 = vst.msk [vmem:[#allocation2 + $0x30] sm:$0x1] %vm295, 0.0
        %299 = vst.msk [vmem:[#allocation2 + $0x48] sm:$0x1] %vm295, 0.0
        %300 = vst.msk [vmem:[#allocation2 + $0x60] sm:$0x1] %vm295, 0.0
        %301 = vst.msk [vmem:[#allocation2 + $0x78] sm:$0x1] %vm295, 0.0
        %302 = vst.msk [vmem:[#allocation2 + $0x90] sm:$0x1] %vm295, 0.0
        %303 = vst.msk [vmem:[#allocation2 + $0xa8] sm:$0x1] %vm295, 0.0
        %304 = vst.msk [vmem:[#allocation2 + $0xc0] sm:$0x1] %vm295, 0.0
        %305 = vst.msk [vmem:[#allocation2 + $0xd8] sm:$0x1] %vm295, 0.0
        %306 = vst.msk [vmem:[#allocation2 + $0xf0] sm:$0x1] %vm295, 0.0
        %307 = vst.msk [vmem:[#allocation2 + $0x108] sm:$0x1] %vm295, 0.0
        %308 = vst.msk [vmem:[#allocation2 + $0x120] sm:$0x1] %vm295, 0.0
        %309 = vst.msk [vmem:[#allocation2 + $0x138] sm:$0x1] %vm295, 0.0
        %310 = vst.msk [vmem:[#allocation2 + $0x150] sm:$0x1] %vm295, 0.0
        %311 = vst.msk [vmem:[#allocation2 + $0x168] sm:$0x1] %vm295, 0.0
        %312 = vst.msk [vmem:[#allocation2 + $0x180] sm:$0x1] %vm295, 0.0
        %313 = vst.msk [vmem:[#allocation2 + $0x198] sm:$0x1] %vm295, 0.0
        %314 = vst.msk [vmem:[#allocation2 + $0x11] sm:$0x1] %vm295, 0.0
        %315 = vst.msk [vmem:[#allocation2 + $0x29] sm:$0x1] %vm295, 0.0
        %316 = vst.msk [vmem:[#allocation2 + $0x41] sm:$0x1] %vm295, 0.0
        %317 = vst.msk [vmem:[#allocation2 + $0x59] sm:$0x1] %vm295, 0.0
        %318 = vst.msk [vmem:[#allocation2 + $0x71] sm:$0x1] %vm295, 0.0
        %319 = vst.msk [vmem:[#allocation2 + $0x89] sm:$0x1] %vm295, 0.0
        %320 = vst.msk [vmem:[#allocation2 + $0xa1] sm:$0x1] %vm295, 0.0
        %321 = vst.msk [vmem:[#allocation2 + $0xb9] sm:$0x1] %vm295, 0.0
        %322 = vst.msk [vmem:[#allocation2 + $0xd1] sm:$0x1] %vm295, 0.0
        %323 = vst.msk [vmem:[#allocation2 + $0xe9] sm:$0x1] %vm295, 0.0
        %324 = vst.msk [vmem:[#allocation2 + $0x101] sm:$0x1] %vm295, 0.0
        %325 = vst.msk [vmem:[#allocation2 + $0x119] sm:$0x1] %vm295, 0.0
        %326 = vst.msk [vmem:[#allocation2 + $0x131] sm:$0x1] %vm295, 0.0
        %327 = vst.msk [vmem:[#allocation2 + $0x149] sm:$0x1] %vm295, 0.0
        %328 = vst.msk [vmem:[#allocation2 + $0x161] sm:$0x1] %vm295, 0.0
        %329 = vst.msk [vmem:[#allocation2 + $0x179] sm:$0x1] %vm295, 0.0
        %330 = vst.msk [vmem:[#allocation2 + $0x191] sm:$0x1] %vm295, 0.0
        %331 = vst.msk [vmem:[#allocation2 + $0x1a9] sm:$0x1] %vm295, 0.0
        %v332 = vld [vmem:[%s274] sm:$0xff]
        %v333 = vld [vmem:[%s274 + $0x8] sm:$0xff]
        %v334 = vld [vmem:[%s274 + $0x10] sm:$0xff]
        %v335 = vld [vmem:[%s274 + $0x18] sm:$0xff]
        %v336 = vld [vmem:[%s274 + $0x20] sm:$0xff]
        %v337 = vld [vmem:[%s274 + $0x28] sm:$0xff]
        %v338 = vld [vmem:[%s274 + $0x30] sm:$0xff]
        %v339 = vld [vmem:[%s274 + $0x38] sm:$0xff]
        %v340 = vld [vmem:[%s274 + $0x40] sm:$0xff]
        %v341 = vld [vmem:[%s274 + $0x48] sm:$0xff]
        %v342 = vld [vmem:[%s274 + $0x50] sm:$0xff]
        %v343 = vld [vmem:[%s274 + $0x58] sm:$0xff]
        %v344 = vld [vmem:[%s274 + $0x60] sm:$0xff]
        %v345 = vld [vmem:[%s274 + $0x68] sm:$0xff]
        %v346 = vld [vmem:[%s274 + $0x70] sm:$0xff]
        %v347 = vld [vmem:[%s274 + $0x78] sm:$0xff]
        %v348 = vld [vmem:[%s274 + $0x80] sm:$0xff]
        %v349 = vld [vmem:[%s274 + $0x88] sm:$0xff]
        %v350 = vld [vmem:[%s274 + $0x90] sm:$0xff]
        %v351 = vld [vmem:[%s274 + $0x98] sm:$0xff]
        %v352 = vld [vmem:[%s274 + $0xa0] sm:$0xff]
        %v353 = vld [vmem:[%s274 + $0xa8] sm:$0xff]
        %v354 = vld [vmem:[%s274 + $0xb0] sm:$0xff]
        %v355 = vld [vmem:[%s274 + $0xb8] sm:$0xff]
        %v356 = vld [vmem:[%s274 + $0xc0] sm:$0xff]
        %v357 = vld [vmem:[%s274 + $0xc8] sm:$0xff]
        %v358 = vld [vmem:[%s274 + $0xd0] sm:$0xff]
        %v359 = vld [vmem:[%s274 + $0xd8] sm:$0xff]
        %v360 = vld [vmem:[%s274 + $0xe0] sm:$0xff]
        %v361 = vld [vmem:[%s274 + $0xe8] sm:$0xff]
        %v362 = vld [vmem:[%s274 + $0xf0] sm:$0xff]
        %v363 = vld [vmem:[%s274 + $0xf8] sm:$0xff]
        %s364 = scalar_lea.vmem [#allocation2], 24
        %365 = vst.msk [vmem:[%s364 + $0x1] sm:$0xff] %vm286, %v332
        %366 = vst.msk [vmem:[%s364 + $0x9] sm:$0xff] %vm286, %v333
        %367 = vst.msk [vmem:[%s364 + $0x19] sm:$0xff] %vm286, %v334
        %368 = vst.msk [vmem:[%s364 + $0x21] sm:$0xff] %vm286, %v335
        %369 = vst.msk [vmem:[%s364 + $0x31] sm:$0xff] %vm286, %v336
        %370 = vst.msk [vmem:[%s364 + $0x39] sm:$0xff] %vm286, %v337
        %371 = vst.msk [vmem:[%s364 + $0x49] sm:$0xff] %vm286, %v338
        %372 = vst.msk [vmem:[%s364 + $0x51] sm:$0xff] %vm286, %v339
        %373 = vst.msk [vmem:[%s364 + $0x61] sm:$0xff] %vm286, %v340
        %374 = vst.msk [vmem:[%s364 + $0x69] sm:$0xff] %vm286, %v341
        %375 = vst.msk [vmem:[%s364 + $0x79] sm:$0xff] %vm286, %v342
        %376 = vst.msk [vmem:[%s364 + $0x81] sm:$0xff] %vm286, %v343
        %377 = vst.msk [vmem:[%s364 + $0x91] sm:$0xff] %vm286, %v344
        %378 = vst.msk [vmem:[%s364 + $0x99] sm:$0xff] %vm286, %v345
        %379 = vst.msk [vmem:[%s364 + $0xa9] sm:$0xff] %vm286, %v346
        %380 = vst.msk [vmem:[%s364 + $0xb1] sm:$0xff] %vm286, %v347
        %381 = vst.msk [vmem:[%s364 + $0xc1] sm:$0xff] %vm286, %v348
        %382 = vst.msk [vmem:[%s364 + $0xc9] sm:$0xff] %vm286, %v349
        %383 = vst.msk [vmem:[%s364 + $0xd9] sm:$0xff] %vm286, %v350
        %384 = vst.msk [vmem:[%s364 + $0xe1] sm:$0xff] %vm286, %v351
        %385 = vst.msk [vmem:[%s364 + $0xf1] sm:$0xff] %vm286, %v352
        %386 = vst.msk [vmem:[%s364 + $0xf9] sm:$0xff] %vm286, %v353
        %387 = vst.msk [vmem:[%s364 + $0x109] sm:$0xff] %vm286, %v354
        %388 = vst.msk [vmem:[%s364 + $0x111] sm:$0xff] %vm286, %v355
        %389 = vst.msk [vmem:[%s364 + $0x121] sm:$0xff] %vm286, %v356
        %390 = vst.msk [vmem:[%s364 + $0x129] sm:$0xff] %vm286, %v357
        %391 = vst.msk [vmem:[%s364 + $0x139] sm:$0xff] %vm286, %v358
        %392 = vst.msk [vmem:[%s364 + $0x141] sm:$0xff] %vm286, %v359
        %393 = vst.msk [vmem:[%s364 + $0x151] sm:$0xff] %vm286, %v360
        %394 = vst.msk [vmem:[%s364 + $0x159] sm:$0xff] %vm286, %v361
        %395 = vst.msk [vmem:[%s364 + $0x169] sm:$0xff] %vm286, %v362
        %396 = vst.msk [vmem:[%s364 + $0x171] sm:$0xff] %vm286, %v363
        %v397 = vld [vmem:[#allocation2] sm:$0xff]
        %v398 = vld [vmem:[#allocation2 + $0x8] sm:$0xff]
        %v399 = vld [vmem:[#allocation2 + $0x10] sm:$0x3]
        %v400 = vld [vmem:[#allocation2 + $0x18] sm:$0xff]
        %v401 = vld [vmem:[#allocation2 + $0x20] sm:$0xff]
        %v402 = vld [vmem:[#allocation2 + $0x28] sm:$0x3]
        %v403 = vld [vmem:[#allocation2 + $0x30] sm:$0xff]
        %v404 = vld [vmem:[#allocation2 + $0x38] sm:$0xff]
        %v405 = vld [vmem:[#allocation2 + $0x40] sm:$0x3]
        %v406 = vld [vmem:[#allocation2 + $0x48] sm:$0xff]
        %v407 = vld [vmem:[#allocation2 + $0x50] sm:$0xff]
        %v408 = vld [vmem:[#allocation2 + $0x58] sm:$0x3]
        %v409 = vld [vmem:[#allocation2 + $0x60] sm:$0xff]
        %v410 = vld [vmem:[#allocation2 + $0x68] sm:$0xff]
        %v411 = vld [vmem:[#allocation2 + $0x70] sm:$0x3]
        %v412 = vld [vmem:[#allocation2 + $0x78] sm:$0xff]
        %v413 = vld [vmem:[#allocation2 + $0x80] sm:$0xff]
        %v414 = vld [vmem:[#allocation2 + $0x88] sm:$0x3]
        %v415 = vld [vmem:[#allocation2 + $0x90] sm:$0xff]
        %v416 = vld [vmem:[#allocation2 + $0x98] sm:$0xff]
        %v417 = vld [vmem:[#allocation2 + $0xa0] sm:$0x3]
        %v418 = vld [vmem:[#allocation2 + $0xa8] sm:$0xff]
        %v419 = vld [vmem:[#allocation2 + $0xb0] sm:$0xff]
        %v420 = vld [vmem:[#allocation2 + $0xb8] sm:$0x3]
        %v421 = vld [vmem:[#allocation2 + $0xc0] sm:$0xff]
        %v422 = vld [vmem:[#allocation2 + $0xc8] sm:$0xff]
        %v423 = vld [vmem:[#allocation2 + $0xd0] sm:$0x3]
        %v424 = vld [vmem:[#allocation2 + $0xd8] sm:$0xff]
        %v425 = vld [vmem:[#allocation2 + $0xe0] sm:$0xff]
        %v426 = vld [vmem:[#allocation2 + $0xe8] sm:$0x3]
        %v427 = vld [vmem:[#allocation2 + $0xf0] sm:$0xff]
        %v428 = vld [vmem:[#allocation2 + $0xf8] sm:$0xff]
        %v429 = vld [vmem:[#allocation2 + $0x100] sm:$0x3]
        %v430 = vld [vmem:[#allocation2 + $0x108] sm:$0xff]
        %v431 = vld [vmem:[#allocation2 + $0x110] sm:$0xff]
        %v432 = vld [vmem:[#allocation2 + $0x118] sm:$0x3]
        %v433 = vld [vmem:[#allocation2 + $0x120] sm:$0xff]
        %v434 = vld [vmem:[#allocation2 + $0x128] sm:$0xff]
        %v435 = vld [vmem:[#allocation2 + $0x130] sm:$0x3]
        %v436 = vld [vmem:[#allocation2 + $0x138] sm:$0xff]
        %v437 = vld [vmem:[#allocation2 + $0x140] sm:$0xff]
        %v438 = vld [vmem:[#allocation2 + $0x148] sm:$0x3]
        %v439 = vld [vmem:[#allocation2 + $0x150] sm:$0xff]
        %v440 = vld [vmem:[#allocation2 + $0x158] sm:$0xff]
        %v441 = vld [vmem:[#allocation2 + $0x160] sm:$0x3]
        %v442 = vld [vmem:[#allocation2 + $0x168] sm:$0xff]
        %v443 = vld [vmem:[#allocation2 + $0x170] sm:$0xff]
        %v444 = vld [vmem:[#allocation2 + $0x178] sm:$0x3]
        %v445 = vld [vmem:[#allocation2 + $0x180] sm:$0xff]
        %v446 = vld [vmem:[#allocation2 + $0x188] sm:$0xff]
        %v447 = vld [vmem:[#allocation2 + $0x190] sm:$0x3]
        %v448 = vld [vmem:[#allocation2 + $0x198] sm:$0xff]
        %v449 = vld [vmem:[#allocation2 + $0x1a0] sm:$0xff]
        %v450 = vld [vmem:[#allocation2 + $0x1a8] sm:$0x3]
        %451 = vst.msk [vmem:[#allocation3] sm:$0xff] %vm286, %v397
        %452 = vst.msk [vmem:[#allocation3 + $0x8] sm:$0xff] %vm286, %v398
        %453 = vst.msk [vmem:[#allocation3 + $0x10] sm:$0xff] %vm286, %v400
        %454 = vst.msk [vmem:[#allocation3 + $0x18] sm:$0xff] %vm286, %v401
        %455 = vst.msk [vmem:[#allocation3 + $0x20] sm:$0xff] %vm286, %v403
        %456 = vst.msk [vmem:[#allocation3 + $0x28] sm:$0xff] %vm286, %v404
        %457 = vst.msk [vmem:[#allocation3 + $0x30] sm:$0xff] %vm286, %v406
        %458 = vst.msk [vmem:[#allocation3 + $0x38] sm:$0xff] %vm286, %v407
        %459 = vst.msk [vmem:[#allocation3 + $0x40] sm:$0xff] %vm286, %v409
        %460 = vst.msk [vmem:[#allocation3 + $0x48] sm:$0xff] %vm286, %v410
        %461 = vst.msk [vmem:[#allocation3 + $0x50] sm:$0xff] %vm286, %v412
        %462 = vst.msk [vmem:[#allocation3 + $0x58] sm:$0xff] %vm286, %v413
        %463 = vst.msk [vmem:[#allocation3 + $0x60] sm:$0xff] %vm286, %v415
        %464 = vst.msk [vmem:[#allocation3 + $0x68] sm:$0xff] %vm286, %v416
        %465 = vst.msk [vmem:[#allocation3 + $0x70] sm:$0xff] %vm286, %v418
        %466 = vst.msk [vmem:[#allocation3 + $0x78] sm:$0xff] %vm286, %v419
        %467 = vst.msk [vmem:[#allocation3 + $0x80] sm:$0xff] %vm286, %v421
        %468 = vst.msk [vmem:[#allocation3 + $0x88] sm:$0xff] %vm286, %v422
        %469 = vst.msk [vmem:[#allocation3 + $0x90] sm:$0xff] %vm286, %v424
        %470 = vst.msk [vmem:[#allocation3 + $0x98] sm:$0xff] %vm286, %v425
        %471 = vst.msk [vmem:[#allocation3 + $0xa0] sm:$0xff] %vm286, %v427
        %472 = vst.msk [vmem:[#allocation3 + $0xa8] sm:$0xff] %vm286, %v428
        %473 = vst.msk [vmem:[#allocation3 + $0xb0] sm:$0xff] %vm286, %v430
        %474 = vst.msk [vmem:[#allocation3 + $0xb8] sm:$0xff] %vm286, %v431
        %475 = vst.msk [vmem:[#allocation3 + $0xc0] sm:$0xff] %vm286, %v433
        %476 = vst.msk [vmem:[#allocation3 + $0xc8] sm:$0xff] %vm286, %v434
        %477 = vst.msk [vmem:[#allocation3 + $0xd0] sm:$0xff] %vm286, %v436
        %478 = vst.msk [vmem:[#allocation3 + $0xd8] sm:$0xff] %vm286, %v437
        %479 = vst.msk [vmem:[#allocation3 + $0xe0] sm:$0xff] %vm286, %v439
        %480 = vst.msk [vmem:[#allocation3 + $0xe8] sm:$0xff] %vm286, %v440
        %481 = vst.msk [vmem:[#allocation3 + $0xf0] sm:$0xff] %vm286, %v442
        %482 = vst.msk [vmem:[#allocation3 + $0xf8] sm:$0xff] %vm286, %v443
        %531 = vrot.lane.b32.xlu0 %v397, 4
        %v532 = vpop.permute.xlu0 %531
        %533 = vrot.lane.b32.xlu0 %v398, 4
        %v534 = vpop.permute.xlu0 %533
        %535 = vrot.lane.b32.xlu0 %v399, 4
        %v536 = vpop.permute.xlu0 %535
        %537 = vrot.lane.b32.xlu0 %v400, 4
        %v538 = vpop.permute.xlu0 %537
        %539 = vrot.lane.b32.xlu0 %v401, 4
        %v540 = vpop.permute.xlu0 %539
        %541 = vrot.lane.b32.xlu0 %v402, 4
        %v542 = vpop.permute.xlu0 %541
        %543 = vrot.lane.b32.xlu0 %v403, 4
        %v544 = vpop.permute.xlu0 %543
        %545 = vrot.lane.b32.xlu0 %v404, 4
        %v546 = vpop.permute.xlu0 %545
        %547 = vrot.lane.b32.xlu0 %v405, 4
        %v548 = vpop.permute.xlu0 %547
        %549 = vrot.lane.b32.xlu0 %v406, 4
        %v550 = vpop.permute.xlu0 %549
        %551 = vrot.lane.b32.xlu0 %v407, 4
        %v552 = vpop.permute.xlu0 %551
        %553 = vrot.lane.b32.xlu0 %v408, 4
        %v554 = vpop.permute.xlu0 %553
        %555 = vrot.lane.b32.xlu0 %v409, 4
        %v556 = vpop.permute.xlu0 %555
        %557 = vrot.lane.b32.xlu0 %v410, 4
        %v558 = vpop.permute.xlu0 %557
        %559 = vrot.lane.b32.xlu0 %v411, 4
        %v560 = vpop.permute.xlu0 %559
        %561 = vrot.lane.b32.xlu0 %v412, 4
        %v562 = vpop.permute.xlu0 %561
        %563 = vrot.lane.b32.xlu0 %v413, 4
        %v564 = vpop.permute.xlu0 %563
        %565 = vrot.lane.b32.xlu0 %v414, 4
        %v566 = vpop.permute.xlu0 %565
        %567 = vrot.lane.b32.xlu0 %v415, 4
        %v568 = vpop.permute.xlu0 %567
        %569 = vrot.lane.b32.xlu0 %v416, 4
        %v570 = vpop.permute.xlu0 %569
        %571 = vrot.lane.b32.xlu0 %v417, 4
        %v572 = vpop.permute.xlu0 %571
        %573 = vrot.lane.b32.xlu0 %v418, 4
        %v574 = vpop.permute.xlu0 %573
        %575 = vrot.lane.b32.xlu0 %v419, 4
        %v576 = vpop.permute.xlu0 %575
        %577 = vrot.lane.b32.xlu0 %v420, 4
        %v578 = vpop.permute.xlu0 %577
        %579 = vrot.lane.b32.xlu0 %v421, 4
        %v580 = vpop.permute.xlu0 %579
        %581 = vrot.lane.b32.xlu0 %v422, 4
        %v582 = vpop.permute.xlu0 %581
        %583 = vrot.lane.b32.xlu0 %v423, 4
        %v584 = vpop.permute.xlu0 %583
        %585 = vrot.lane.b32.xlu0 %v424, 4
        %v586 = vpop.permute.xlu0 %585
        %587 = vrot.lane.b32.xlu0 %v425, 4
        %v588 = vpop.permute.xlu0 %587
        %589 = vrot.lane.b32.xlu0 %v426, 4
        %v590 = vpop.permute.xlu0 %589
        %591 = vrot.lane.b32.xlu0 %v427, 4
        %v592 = vpop.permute.xlu0 %591
        %593 = vrot.lane.b32.xlu0 %v428, 4
        %v594 = vpop.permute.xlu0 %593
        %595 = vrot.lane.b32.xlu0 %v429, 4
        %v596 = vpop.permute.xlu0 %595
        %597 = vrot.lane.b32.xlu0 %v430, 4
        %v598 = vpop.permute.xlu0 %597
        %599 = vrot.lane.b32.xlu0 %v431, 4
        %v600 = vpop.permute.xlu0 %599
        %601 = vrot.lane.b32.xlu0 %v432, 4
        %v602 = vpop.permute.xlu0 %601
        %603 = vrot.lane.b32.xlu0 %v433, 4
        %v604 = vpop.permute.xlu0 %603
        %605 = vrot.lane.b32.xlu0 %v434, 4
        %v606 = vpop.permute.xlu0 %605
        %607 = vrot.lane.b32.xlu0 %v435, 4
        %v608 = vpop.permute.xlu0 %607
        %609 = vrot.lane.b32.xlu0 %v436, 4
        %v610 = vpop.permute.xlu0 %609
        %611 = vrot.lane.b32.xlu0 %v437, 4
        %v612 = vpop.permute.xlu0 %611
        %613 = vrot.lane.b32.xlu0 %v438, 4
        %v614 = vpop.permute.xlu0 %613
        %615 = vrot.lane.b32.xlu0 %v439, 4
        %v616 = vpop.permute.xlu0 %615
        %617 = vrot.lane.b32.xlu0 %v440, 4
        %v618 = vpop.permute.xlu0 %617
        %619 = vrot.lane.b32.xlu0 %v441, 4
        %v620 = vpop.permute.xlu0 %619
        %621 = vrot.lane.b32.xlu0 %v442, 4
        %v622 = vpop.permute.xlu0 %621
        %623 = vrot.lane.b32.xlu0 %v443, 4
        %v624 = vpop.permute.xlu0 %623
        %625 = vrot.lane.b32.xlu0 %v444, 4
        %v626 = vpop.permute.xlu0 %625
        %vm675 = vcmask 64545
        %676 = vst.msk [vmem:[#allocation3 - $0x1] sm:$0xfe] %vm675, %v532
        %vm677 = vcmask 64544
        %678 = vst.msk [vmem:[#allocation3 + $0x7] sm:$0xff] %vm677, %v534
        %vm679 = vcmask 57376
        %680 = vst.msk [vmem:[#allocation3 + $0xf] sm:$0x1] %vm679, %v536
        %681 = vst.msk [vmem:[#allocation3 + $0xf] sm:$0xfe] %vm675, %v538
        %682 = vst.msk [vmem:[#allocation3 + $0x17] sm:$0xff] %vm677, %v540
        %683 = vst.msk [vmem:[#allocation3 + $0x1f] sm:$0x1] %vm679, %v542
        %684 = vst.msk [vmem:[#allocation3 + $0x1f] sm:$0xfe] %vm675, %v544
        %685 = vst.msk [vmem:[#allocation3 + $0x27] sm:$0xff] %vm677, %v546
        %686 = vst.msk [vmem:[#allocation3 + $0x2f] sm:$0x1] %vm679, %v548
        %687 = vst.msk [vmem:[#allocation3 + $0x2f] sm:$0xfe] %vm675, %v550
        %688 = vst.msk [vmem:[#allocation3 + $0x37] sm:$0xff] %vm677, %v552
        %689 = vst.msk [vmem:[#allocation3 + $0x3f] sm:$0x1] %vm679, %v554
        %690 = vst.msk [vmem:[#allocation3 + $0x3f] sm:$0xfe] %vm675, %v556
        %691 = vst.msk [vmem:[#allocation3 + $0x47] sm:$0xff] %vm677, %v558
        %692 = vst.msk [vmem:[#allocation3 + $0x4f] sm:$0x1] %vm679, %v560
        %693 = vst.msk [vmem:[#allocation3 + $0x4f] sm:$0xfe] %vm675, %v562
        %694 = vst.msk [vmem:[#allocation3 + $0x57] sm:$0xff] %vm677, %v564
        %695 = vst.msk [vmem:[#allocation3 + $0x5f] sm:$0x1] %vm679, %v566
        %696 = vst.msk [vmem:[#allocation3 + $0x5f] sm:$0xfe] %vm675, %v568
        %697 = vst.msk [vmem:[#allocation3 + $0x67] sm:$0xff] %vm677, %v570
        %698 = vst.msk [vmem:[#allocation3 + $0x6f] sm:$0x1] %vm679, %v572
        %699 = vst.msk [vmem:[#allocation3 + $0x6f] sm:$0xfe] %vm675, %v574
        %700 = vst.msk [vmem:[#allocation3 + $0x77] sm:$0xff] %vm677, %v576
        %701 = vst.msk [vmem:[#allocation3 + $0x7f] sm:$0x1] %vm679, %v578
        %702 = vst.msk [vmem:[#allocation3 + $0x7f] sm:$0xfe] %vm675, %v580
        %703 = vst.msk [vmem:[#allocation3 + $0x87] sm:$0xff] %vm677, %v582
        %704 = vst.msk [vmem:[#allocation3 + $0x8f] sm:$0x1] %vm679, %v584
        %705 = vst.msk [vmem:[#allocation3 + $0x8f] sm:$0xfe] %vm675, %v586
        %706 = vst.msk [vmem:[#allocation3 + $0x97] sm:$0xff] %vm677, %v588
        %707 = vst.msk [vmem:[#allocation3 + $0x9f] sm:$0x1] %vm679, %v590
        %708 = vst.msk [vmem:[#allocation3 + $0x9f] sm:$0xfe] %vm675, %v592
        %709 = vst.msk [vmem:[#allocation3 + $0xa7] sm:$0xff] %vm677, %v594
        %710 = vst.msk [vmem:[#allocation3 + $0xaf] sm:$0x1] %vm679, %v596
        %711 = vst.msk [vmem:[#allocation3 + $0xaf] sm:$0xfe] %vm675, %v598
        %712 = vst.msk [vmem:[#allocation3 + $0xb7] sm:$0xff] %vm677, %v600
        %713 = vst.msk [vmem:[#allocation3 + $0xbf] sm:$0x1] %vm679, %v602
        %714 = vst.msk [vmem:[#allocation3 + $0xbf] sm:$0xfe] %vm675, %v604
        %715 = vst.msk [vmem:[#allocation3 + $0xc7] sm:$0xff] %vm677, %v606
        %716 = vst.msk [vmem:[#allocation3 + $0xcf] sm:$0x1] %vm679, %v608
        %717 = vst.msk [vmem:[#allocation3 + $0xcf] sm:$0xfe] %vm675, %v610
        %718 = vst.msk [vmem:[#allocation3 + $0xd7] sm:$0xff] %vm677, %v612
        %719 = vst.msk [vmem:[#allocation3 + $0xdf] sm:$0x1] %vm679, %v614
        %720 = vst.msk [vmem:[#allocation3 + $0xdf] sm:$0xfe] %vm675, %v616
        %721 = vst.msk [vmem:[#allocation3 + $0xe7] sm:$0xff] %vm677, %v618
        %722 = vst.msk [vmem:[#allocation3 + $0xef] sm:$0x1] %vm679, %v620
        %723 = vst.msk [vmem:[#allocation3 + $0xef] sm:$0xfe] %vm675, %v622
        %724 = vst.msk [vmem:[#allocation3 + $0xf7] sm:$0xff] %vm677, %v624
        %725 = vst.msk [vmem:[#allocation3 + $0xff] sm:$0x1] %vm679, %v626
        %726 = vrot.lane.b32.xlu0 %v397, 8
        %v727 = vpop.permute.xlu0 %726
        %728 = vrot.lane.b32.xlu0 %v398, 8
        %v729 = vpop.permute.xlu0 %728
        %730 = vrot.lane.b32.xlu0 %v399, 8
        %v731 = vpop.permute.xlu0 %730
        %732 = vrot.lane.b32.xlu0 %v400, 8
        %v733 = vpop.permute.xlu0 %732
        %734 = vrot.lane.b32.xlu0 %v401, 8
        %v735 = vpop.permute.xlu0 %734
        %736 = vrot.lane.b32.xlu0 %v402, 8
        %v737 = vpop.permute.xlu0 %736
        %738 = vrot.lane.b32.xlu0 %v403, 8
        %v739 = vpop.permute.xlu0 %738
        %740 = vrot.lane.b32.xlu0 %v404, 8
        %v741 = vpop.permute.xlu0 %740
        %742 = vrot.lane.b32.xlu0 %v405, 8
        %v743 = vpop.permute.xlu0 %742
        %744 = vrot.lane.b32.xlu0 %v406, 8
        %v745 = vpop.permute.xlu0 %744
        %746 = vrot.lane.b32.xlu0 %v407, 8
        %v747 = vpop.permute.xlu0 %746
        %748 = vrot.lane.b32.xlu0 %v408, 8
        %v749 = vpop.permute.xlu0 %748
        %750 = vrot.lane.b32.xlu0 %v409, 8
        %v751 = vpop.permute.xlu0 %750
        %752 = vrot.lane.b32.xlu0 %v410, 8
        %v753 = vpop.permute.xlu0 %752
        %754 = vrot.lane.b32.xlu0 %v411, 8
        %v755 = vpop.permute.xlu0 %754
        %756 = vrot.lane.b32.xlu0 %v412, 8
        %v757 = vpop.permute.xlu0 %756
        %758 = vrot.lane.b32.xlu0 %v413, 8
        %v759 = vpop.permute.xlu0 %758
        %760 = vrot.lane.b32.xlu0 %v414, 8
        %v761 = vpop.permute.xlu0 %760
        %762 = vrot.lane.b32.xlu0 %v415, 8
        %v763 = vpop.permute.xlu0 %762
        %764 = vrot.lane.b32.xlu0 %v416, 8
        %v765 = vpop.permute.xlu0 %764
        %766 = vrot.lane.b32.xlu0 %v417, 8
        %v767 = vpop.permute.xlu0 %766
        %768 = vrot.lane.b32.xlu0 %v418, 8
        %v769 = vpop.permute.xlu0 %768
        %770 = vrot.lane.b32.xlu0 %v419, 8
        %v771 = vpop.permute.xlu0 %770
        %772 = vrot.lane.b32.xlu0 %v420, 8
        %v773 = vpop.permute.xlu0 %772
        %774 = vrot.lane.b32.xlu0 %v421, 8
        %v775 = vpop.permute.xlu0 %774
        %776 = vrot.lane.b32.xlu0 %v422, 8
        %v777 = vpop.permute.xlu0 %776
        %778 = vrot.lane.b32.xlu0 %v423, 8
        %v779 = vpop.permute.xlu0 %778
        %780 = vrot.lane.b32.xlu0 %v424, 8
        %v781 = vpop.permute.xlu0 %780
        %782 = vrot.lane.b32.xlu0 %v425, 8
        %v783 = vpop.permute.xlu0 %782
        %784 = vrot.lane.b32.xlu0 %v426, 8
        %v785 = vpop.permute.xlu0 %784
        %786 = vrot.lane.b32.xlu0 %v427, 8
        %v787 = vpop.permute.xlu0 %786
        %788 = vrot.lane.b32.xlu0 %v428, 8
        %v789 = vpop.permute.xlu0 %788
        %790 = vrot.lane.b32.xlu0 %v429, 8
        %v791 = vpop.permute.xlu0 %790
        %792 = vrot.lane.b32.xlu0 %v430, 8
        %v793 = vpop.permute.xlu0 %792
        %794 = vrot.lane.b32.xlu0 %v431, 8
        %v795 = vpop.permute.xlu0 %794
        %796 = vrot.lane.b32.xlu0 %v432, 8
        %v797 = vpop.permute.xlu0 %796
        %798 = vrot.lane.b32.xlu0 %v433, 8
        %v799 = vpop.permute.xlu0 %798
        %800 = vrot.lane.b32.xlu0 %v434, 8
        %v801 = vpop.permute.xlu0 %800
        %802 = vrot.lane.b32.xlu0 %v435, 8
        %v803 = vpop.permute.xlu0 %802
        %804 = vrot.lane.b32.xlu0 %v436, 8
        %v805 = vpop.permute.xlu0 %804
        %806 = vrot.lane.b32.xlu0 %v437, 8
        %v807 = vpop.permute.xlu0 %806
        %808 = vrot.lane.b32.xlu0 %v438, 8
        %v809 = vpop.permute.xlu0 %808
        %810 = vrot.lane.b32.xlu0 %v439, 8
        %v811 = vpop.permute.xlu0 %810
        %812 = vrot.lane.b32.xlu0 %v440, 8
        %v813 = vpop.permute.xlu0 %812
        %814 = vrot.lane.b32.xlu0 %v441, 8
        %v815 = vpop.permute.xlu0 %814
        %816 = vrot.lane.b32.xlu0 %v442, 8
        %v817 = vpop.permute.xlu0 %816
        %818 = vrot.lane.b32.xlu0 %v443, 8
        %v819 = vpop.permute.xlu0 %818
        %820 = vrot.lane.b32.xlu0 %v444, 8
        %v821 = vpop.permute.xlu0 %820
        %vm870 = vcmask 97346
        %871 = vst.msk [vmem:[#allocation3 - $0x2] sm:$0xfc] %vm870, %v727
        %vm872 = vcmask 97344
        %873 = vst.msk [vmem:[#allocation3 + $0x6] sm:$0xff] %vm872, %v729
        %vm874 = vcmask 91200
        %875 = vst.msk [vmem:[#allocation3 + $0xe] sm:$0x3] %vm874, %v731
        %876 = vst.msk [vmem:[#allocation3 + $0xe] sm:$0xfc] %vm870, %v733
        %877 = vst.msk [vmem:[#allocation3 + $0x16] sm:$0xff] %vm872, %v735
        %878 = vst.msk [vmem:[#allocation3 + $0x1e] sm:$0x3] %vm874, %v737
        %879 = vst.msk [vmem:[#allocation3 + $0x1e] sm:$0xfc] %vm870, %v739
        %880 = vst.msk [vmem:[#allocation3 + $0x26] sm:$0xff] %vm872, %v741
        %881 = vst.msk [vmem:[#allocation3 + $0x2e] sm:$0x3] %vm874, %v743
        %882 = vst.msk [vmem:[#allocation3 + $0x2e] sm:$0xfc] %vm870, %v745
        %883 = vst.msk [vmem:[#allocation3 + $0x36] sm:$0xff] %vm872, %v747
        %884 = vst.msk [vmem:[#allocation3 + $0x3e] sm:$0x3] %vm874, %v749
        %885 = vst.msk [vmem:[#allocation3 + $0x3e] sm:$0xfc] %vm870, %v751
        %886 = vst.msk [vmem:[#allocation3 + $0x46] sm:$0xff] %vm872, %v753
        %887 = vst.msk [vmem:[#allocation3 + $0x4e] sm:$0x3] %vm874, %v755
        %888 = vst.msk [vmem:[#allocation3 + $0x4e] sm:$0xfc] %vm870, %v757
        %889 = vst.msk [vmem:[#allocation3 + $0x56] sm:$0xff] %vm872, %v759
        %890 = vst.msk [vmem:[#allocation3 + $0x5e] sm:$0x3] %vm874, %v761
        %891 = vst.msk [vmem:[#allocation3 + $0x5e] sm:$0xfc] %vm870, %v763
        %892 = vst.msk [vmem:[#allocation3 + $0x66] sm:$0xff] %vm872, %v765
        %893 = vst.msk [vmem:[#allocation3 + $0x6e] sm:$0x3] %vm874, %v767
        %894 = vst.msk [vmem:[#allocation3 + $0x6e] sm:$0xfc] %vm870, %v769
        %895 = vst.msk [vmem:[#allocation3 + $0x76] sm:$0xff] %vm872, %v771
        %896 = vst.msk [vmem:[#allocation3 + $0x7e] sm:$0x3] %vm874, %v773
        %897 = vst.msk [vmem:[#allocation3 + $0x7e] sm:$0xfc] %vm870, %v775
        %898 = vst.msk [vmem:[#allocation3 + $0x86] sm:$0xff] %vm872, %v777
        %899 = vst.msk [vmem:[#allocation3 + $0x8e] sm:$0x3] %vm874, %v779
        %900 = vst.msk [vmem:[#allocation3 + $0x8e] sm:$0xfc] %vm870, %v781
        %901 = vst.msk [vmem:[#allocation3 + $0x96] sm:$0xff] %vm872, %v783
        %902 = vst.msk [vmem:[#allocation3 + $0x9e] sm:$0x3] %vm874, %v785
        %903 = vst.msk [vmem:[#allocation3 + $0x9e] sm:$0xfc] %vm870, %v787
        %904 = vst.msk [vmem:[#allocation3 + $0xa6] sm:$0xff] %vm872, %v789
        %905 = vst.msk [vmem:[#allocation3 + $0xae] sm:$0x3] %vm874, %v791
        %906 = vst.msk [vmem:[#allocation3 + $0xae] sm:$0xfc] %vm870, %v793
        %907 = vst.msk [vmem:[#allocation3 + $0xb6] sm:$0xff] %vm872, %v795
        %908 = vst.msk [vmem:[#allocation3 + $0xbe] sm:$0x3] %vm874, %v797
        %909 = vst.msk [vmem:[#allocation3 + $0xbe] sm:$0xfc] %vm870, %v799
        %910 = vst.msk [vmem:[#allocation3 + $0xc6] sm:$0xff] %vm872, %v801
        %911 = vst.msk [vmem:[#allocation3 + $0xce] sm:$0x3] %vm874, %v803
        %912 = vst.msk [vmem:[#allocation3 + $0xce] sm:$0xfc] %vm870, %v805
        %913 = vst.msk [vmem:[#allocation3 + $0xd6] sm:$0xff] %vm872, %v807
        %914 = vst.msk [vmem:[#allocation3 + $0xde] sm:$0x3] %vm874, %v809
        %915 = vst.msk [vmem:[#allocation3 + $0xde] sm:$0xfc] %vm870, %v811
        %916 = vst.msk [vmem:[#allocation3 + $0xe6] sm:$0xff] %vm872, %v813
        %917 = vst.msk [vmem:[#allocation3 + $0xee] sm:$0x3] %vm874, %v815
        %918 = vst.msk [vmem:[#allocation3 + $0xee] sm:$0xfc] %vm870, %v817
        %919 = vst.msk [vmem:[#allocation3 + $0xf6] sm:$0xff] %vm872, %v819
        %920 = vst.msk [vmem:[#allocation3 + $0xfe] sm:$0x3] %vm874, %v821
        %923 = vrot.lane.b32.xlu0 %v400, 12
        %v924 = vpop.permute.xlu0 %923
        %925 = vrot.lane.b32.xlu0 %v401, 12
        %v926 = vpop.permute.xlu0 %925
        %927 = vrot.lane.b32.xlu0 %v403, 12
        %v928 = vpop.permute.xlu0 %927
        %929 = vrot.lane.b32.xlu0 %v404, 12
        %v930 = vpop.permute.xlu0 %929
        %931 = vrot.lane.b32.xlu0 %v406, 12
        %v932 = vpop.permute.xlu0 %931
        %933 = vrot.lane.b32.xlu0 %v407, 12
        %v934 = vpop.permute.xlu0 %933
        %935 = vrot.lane.b32.xlu0 %v409, 12
        %v936 = vpop.permute.xlu0 %935
        %937 = vrot.lane.b32.xlu0 %v410, 12
        %v938 = vpop.permute.xlu0 %937
        %939 = vrot.lane.b32.xlu0 %v412, 12
        %v940 = vpop.permute.xlu0 %939
        %941 = vrot.lane.b32.xlu0 %v413, 12
        %v942 = vpop.permute.xlu0 %941
        %943 = vrot.lane.b32.xlu0 %v415, 12
        %v944 = vpop.permute.xlu0 %943
        %945 = vrot.lane.b32.xlu0 %v416, 12
        %v946 = vpop.permute.xlu0 %945
        %947 = vrot.lane.b32.xlu0 %v418, 12
        %v948 = vpop.permute.xlu0 %947
        %949 = vrot.lane.b32.xlu0 %v419, 12
        %v950 = vpop.permute.xlu0 %949
        %951 = vrot.lane.b32.xlu0 %v421, 12
        %v952 = vpop.permute.xlu0 %951
        %953 = vrot.lane.b32.xlu0 %v422, 12
        %v954 = vpop.permute.xlu0 %953
        %955 = vrot.lane.b32.xlu0 %v424, 12
        %v956 = vpop.permute.xlu0 %955
        %957 = vrot.lane.b32.xlu0 %v425, 12
        %v958 = vpop.permute.xlu0 %957
        %959 = vrot.lane.b32.xlu0 %v427, 12
        %v960 = vpop.permute.xlu0 %959
        %961 = vrot.lane.b32.xlu0 %v428, 12
        %v962 = vpop.permute.xlu0 %961
        %963 = vrot.lane.b32.xlu0 %v430, 12
        %v964 = vpop.permute.xlu0 %963
        %965 = vrot.lane.b32.xlu0 %v431, 12
        %v966 = vpop.permute.xlu0 %965
        %967 = vrot.lane.b32.xlu0 %v433, 12
        %v968 = vpop.permute.xlu0 %967
        %969 = vrot.lane.b32.xlu0 %v434, 12
        %v970 = vpop.permute.xlu0 %969
        %971 = vrot.lane.b32.xlu0 %v436, 12
        %v972 = vpop.permute.xlu0 %971
        %973 = vrot.lane.b32.xlu0 %v437, 12
        %v974 = vpop.permute.xlu0 %973
        %975 = vrot.lane.b32.xlu0 %v439, 12
        %v976 = vpop.permute.xlu0 %975
        %977 = vrot.lane.b32.xlu0 %v440, 12
        %v978 = vpop.permute.xlu0 %977
        %979 = vrot.lane.b32.xlu0 %v442, 12
        %v980 = vpop.permute.xlu0 %979
        %981 = vrot.lane.b32.xlu0 %v443, 12
        %v982 = vpop.permute.xlu0 %981
        %983 = vrot.lane.b32.xlu0 %v445, 12
        %v984 = vpop.permute.xlu0 %983
        %985 = vrot.lane.b32.xlu0 %v446, 12
        %v986 = vpop.permute.xlu0 %985
        %vm1019 = vcmask 130144
        %1020 = vst.msk [vmem:[#allocation3] sm:$0xff] %vm1019, %v924
        %1021 = vst.msk [vmem:[#allocation3 + $0x8] sm:$0xff] %vm1019, %v926
        %1022 = vst.msk [vmem:[#allocation3 + $0x10] sm:$0xff] %vm1019, %v928
        %1023 = vst.msk [vmem:[#allocation3 + $0x18] sm:$0xff] %vm1019, %v930
        %1024 = vst.msk [vmem:[#allocation3 + $0x20] sm:$0xff] %vm1019, %v932
        %1025 = vst.msk [vmem:[#allocation3 + $0x28] sm:$0xff] %vm1019, %v934
        %1026 = vst.msk [vmem:[#allocation3 + $0x30] sm:$0xff] %vm1019, %v936
        %1027 = vst.msk [vmem:[#allocation3 + $0x38] sm:$0xff] %vm1019, %v938
        %1028 = vst.msk [vmem:[#allocation3 + $0x40] sm:$0xff] %vm1019, %v940
        %1029 = vst.msk [vmem:[#allocation3 + $0x48] sm:$0xff] %vm1019, %v942
        %1030 = vst.msk [vmem:[#allocation3 + $0x50] sm:$0xff] %vm1019, %v944
        %1031 = vst.msk [vmem:[#allocation3 + $0x58] sm:$0xff] %vm1019, %v946
        %1032 = vst.msk [vmem:[#allocation3 + $0x60] sm:$0xff] %vm1019, %v948
        %1033 = vst.msk [vmem:[#allocation3 + $0x68] sm:$0xff] %vm1019, %v950
        %1034 = vst.msk [vmem:[#allocation3 + $0x70] sm:$0xff] %vm1019, %v952
        %1035 = vst.msk [vmem:[#allocation3 + $0x78] sm:$0xff] %vm1019, %v954
        %1036 = vst.msk [vmem:[#allocation3 + $0x80] sm:$0xff] %vm1019, %v956
        %1037 = vst.msk [vmem:[#allocation3 + $0x88] sm:$0xff] %vm1019, %v958
        %1038 = vst.msk [vmem:[#allocation3 + $0x90] sm:$0xff] %vm1019, %v960
        %1039 = vst.msk [vmem:[#allocation3 + $0x98] sm:$0xff] %vm1019, %v962
        %1040 = vst.msk [vmem:[#allocation3 + $0xa0] sm:$0xff] %vm1019, %v964
        %1041 = vst.msk [vmem:[#allocation3 + $0xa8] sm:$0xff] %vm1019, %v966
        %1042 = vst.msk [vmem:[#allocation3 + $0xb0] sm:$0xff] %vm1019, %v968
        %1043 = vst.msk [vmem:[#allocation3 + $0xb8] sm:$0xff] %vm1019, %v970
        %1044 = vst.msk [vmem:[#allocation3 + $0xc0] sm:$0xff] %vm1019, %v972
        %1045 = vst.msk [vmem:[#allocation3 + $0xc8] sm:$0xff] %vm1019, %v974
        %1046 = vst.msk [vmem:[#allocation3 + $0xd0] sm:$0xff] %vm1019, %v976
        %1047 = vst.msk [vmem:[#allocation3 + $0xd8] sm:$0xff] %vm1019, %v978
        %1048 = vst.msk [vmem:[#allocation3 + $0xe0] sm:$0xff] %vm1019, %v980
        %1049 = vst.msk [vmem:[#allocation3 + $0xe8] sm:$0xff] %vm1019, %v982
        %1050 = vst.msk [vmem:[#allocation3 + $0xf0] sm:$0xff] %vm1019, %v984
        %1051 = vst.msk [vmem:[#allocation3 + $0xf8] sm:$0xff] %vm1019, %v986
        %1053 = vrot.lane.b32.xlu0 %v400, 16
        %v1054 = vpop.permute.xlu0 %1053
        %1055 = vrot.lane.b32.xlu0 %v401, 16
        %v1056 = vpop.permute.xlu0 %1055
        %1057 = vrot.lane.b32.xlu0 %v402, 16
        %v1058 = vpop.permute.xlu0 %1057
        %1059 = vrot.lane.b32.xlu0 %v403, 16
        %v1060 = vpop.permute.xlu0 %1059
        %1061 = vrot.lane.b32.xlu0 %v404, 16
        %v1062 = vpop.permute.xlu0 %1061
        %1063 = vrot.lane.b32.xlu0 %v405, 16
        %v1064 = vpop.permute.xlu0 %1063
        %1065 = vrot.lane.b32.xlu0 %v406, 16
        %v1066 = vpop.permute.xlu0 %1065
        %1067 = vrot.lane.b32.xlu0 %v407, 16
        %v1068 = vpop.permute.xlu0 %1067
        %1069 = vrot.lane.b32.xlu0 %v408, 16
        %v1070 = vpop.permute.xlu0 %1069
        %1071 = vrot.lane.b32.xlu0 %v409, 16
        %v1072 = vpop.permute.xlu0 %1071
        %1073 = vrot.lane.b32.xlu0 %v410, 16
        %v1074 = vpop.permute.xlu0 %1073
        %1075 = vrot.lane.b32.xlu0 %v411, 16
        %v1076 = vpop.permute.xlu0 %1075
        %1077 = vrot.lane.b32.xlu0 %v412, 16
        %v1078 = vpop.permute.xlu0 %1077
        %1079 = vrot.lane.b32.xlu0 %v413, 16
        %v1080 = vpop.permute.xlu0 %1079
        %1081 = vrot.lane.b32.xlu0 %v414, 16
        %v1082 = vpop.permute.xlu0 %1081
        %1083 = vrot.lane.b32.xlu0 %v415, 16
        %v1084 = vpop.permute.xlu0 %1083
        %1085 = vrot.lane.b32.xlu0 %v416, 16
        %v1086 = vpop.permute.xlu0 %1085
        %1087 = vrot.lane.b32.xlu0 %v417, 16
        %v1088 = vpop.permute.xlu0 %1087
        %1089 = vrot.lane.b32.xlu0 %v418, 16
        %v1090 = vpop.permute.xlu0 %1089
        %1091 = vrot.lane.b32.xlu0 %v419, 16
        %v1092 = vpop.permute.xlu0 %1091
        %1093 = vrot.lane.b32.xlu0 %v420, 16
        %v1094 = vpop.permute.xlu0 %1093
        %1095 = vrot.lane.b32.xlu0 %v421, 16
        %v1096 = vpop.permute.xlu0 %1095
        %1097 = vrot.lane.b32.xlu0 %v422, 16
        %v1098 = vpop.permute.xlu0 %1097
        %1099 = vrot.lane.b32.xlu0 %v423, 16
        %v1100 = vpop.permute.xlu0 %1099
        %1101 = vrot.lane.b32.xlu0 %v424, 16
        %v1102 = vpop.permute.xlu0 %1101
        %1103 = vrot.lane.b32.xlu0 %v425, 16
        %v1104 = vpop.permute.xlu0 %1103
        %1105 = vrot.lane.b32.xlu0 %v426, 16
        %v1106 = vpop.permute.xlu0 %1105
        %1107 = vrot.lane.b32.xlu0 %v427, 16
        %v1108 = vpop.permute.xlu0 %1107
        %1109 = vrot.lane.b32.xlu0 %v428, 16
        %v1110 = vpop.permute.xlu0 %1109
        %1111 = vrot.lane.b32.xlu0 %v429, 16
        %v1112 = vpop.permute.xlu0 %1111
        %1113 = vrot.lane.b32.xlu0 %v430, 16
        %v1114 = vpop.permute.xlu0 %1113
        %1115 = vrot.lane.b32.xlu0 %v431, 16
        %v1116 = vpop.permute.xlu0 %1115
        %1117 = vrot.lane.b32.xlu0 %v432, 16
        %v1118 = vpop.permute.xlu0 %1117
        %1119 = vrot.lane.b32.xlu0 %v433, 16
        %v1120 = vpop.permute.xlu0 %1119
        %1121 = vrot.lane.b32.xlu0 %v434, 16
        %v1122 = vpop.permute.xlu0 %1121
        %1123 = vrot.lane.b32.xlu0 %v435, 16
        %v1124 = vpop.permute.xlu0 %1123
        %1125 = vrot.lane.b32.xlu0 %v436, 16
        %v1126 = vpop.permute.xlu0 %1125
        %1127 = vrot.lane.b32.xlu0 %v437, 16
        %v1128 = vpop.permute.xlu0 %1127
        %1129 = vrot.lane.b32.xlu0 %v438, 16
        %v1130 = vpop.permute.xlu0 %1129
        %1131 = vrot.lane.b32.xlu0 %v439, 16
        %v1132 = vpop.permute.xlu0 %1131
        %1133 = vrot.lane.b32.xlu0 %v440, 16
        %v1134 = vpop.permute.xlu0 %1133
        %1135 = vrot.lane.b32.xlu0 %v441, 16
        %v1136 = vpop.permute.xlu0 %1135
        %1137 = vrot.lane.b32.xlu0 %v442, 16
        %v1138 = vpop.permute.xlu0 %1137
        %1139 = vrot.lane.b32.xlu0 %v443, 16
        %v1140 = vpop.permute.xlu0 %1139
        %1141 = vrot.lane.b32.xlu0 %v444, 16
        %v1142 = vpop.permute.xlu0 %1141
        %1143 = vrot.lane.b32.xlu0 %v445, 16
        %v1144 = vpop.permute.xlu0 %1143
        %1145 = vrot.lane.b32.xlu0 %v446, 16
        %v1146 = vpop.permute.xlu0 %1145
        %1147 = vrot.lane.b32.xlu0 %v447, 16
        %v1148 = vpop.permute.xlu0 %1147
        %vm1197 = vcmask 162945
        %1198 = vst.msk [vmem:[#allocation3 - $0x1] sm:$0xfe] %vm1197, %v1054
        %vm1199 = vcmask 162944
        %1200 = vst.msk [vmem:[#allocation3 + $0x7] sm:$0xff] %vm1199, %v1056
        %vm1201 = vcmask 155776
        %1202 = vst.msk [vmem:[#allocation3 + $0xf] sm:$0x1] %vm1201, %v1058
        %1203 = vst.msk [vmem:[#allocation3 + $0xf] sm:$0xfe] %vm1197, %v1060
        %1204 = vst.msk [vmem:[#allocation3 + $0x17] sm:$0xff] %vm1199, %v1062
        %1205 = vst.msk [vmem:[#allocation3 + $0x1f] sm:$0x1] %vm1201, %v1064
        %1206 = vst.msk [vmem:[#allocation3 + $0x1f] sm:$0xfe] %vm1197, %v1066
        %1207 = vst.msk [vmem:[#allocation3 + $0x27] sm:$0xff] %vm1199, %v1068
        %1208 = vst.msk [vmem:[#allocation3 + $0x2f] sm:$0x1] %vm1201, %v1070
        %1209 = vst.msk [vmem:[#allocation3 + $0x2f] sm:$0xfe] %vm1197, %v1072
        %1210 = vst.msk [vmem:[#allocation3 + $0x37] sm:$0xff] %vm1199, %v1074
        %1211 = vst.msk [vmem:[#allocation3 + $0x3f] sm:$0x1] %vm1201, %v1076
        %1212 = vst.msk [vmem:[#allocation3 + $0x3f] sm:$0xfe] %vm1197, %v1078
        %1213 = vst.msk [vmem:[#allocation3 + $0x47] sm:$0xff] %vm1199, %v1080
        %1214 = vst.msk [vmem:[#allocation3 + $0x4f] sm:$0x1] %vm1201, %v1082
        %1215 = vst.msk [vmem:[#allocation3 + $0x4f] sm:$0xfe] %vm1197, %v1084
        %1216 = vst.msk [vmem:[#allocation3 + $0x57] sm:$0xff] %vm1199, %v1086
        %1217 = vst.msk [vmem:[#allocation3 + $0x5f] sm:$0x1] %vm1201, %v1088
        %1218 = vst.msk [vmem:[#allocation3 + $0x5f] sm:$0xfe] %vm1197, %v1090
        %1219 = vst.msk [vmem:[#allocation3 + $0x67] sm:$0xff] %vm1199, %v1092
        %1220 = vst.msk [vmem:[#allocation3 + $0x6f] sm:$0x1] %vm1201, %v1094
        %1221 = vst.msk [vmem:[#allocation3 + $0x6f] sm:$0xfe] %vm1197, %v1096
        %1222 = vst.msk [vmem:[#allocation3 + $0x77] sm:$0xff] %vm1199, %v1098
        %1223 = vst.msk [vmem:[#allocation3 + $0x7f] sm:$0x1] %vm1201, %v1100
        %1224 = vst.msk [vmem:[#allocation3 + $0x7f] sm:$0xfe] %vm1197, %v1102
        %1225 = vst.msk [vmem:[#allocation3 + $0x87] sm:$0xff] %vm1199, %v1104
        %1226 = vst.msk [vmem:[#allocation3 + $0x8f] sm:$0x1] %vm1201, %v1106
        %1227 = vst.msk [vmem:[#allocation3 + $0x8f] sm:$0xfe] %vm1197, %v1108
        %1228 = vst.msk [vmem:[#allocation3 + $0x97] sm:$0xff] %vm1199, %v1110
        %1229 = vst.msk [vmem:[#allocation3 + $0x9f] sm:$0x1] %vm1201, %v1112
        %1230 = vst.msk [vmem:[#allocation3 + $0x9f] sm:$0xfe] %vm1197, %v1114
        %1231 = vst.msk [vmem:[#allocation3 + $0xa7] sm:$0xff] %vm1199, %v1116
        %1232 = vst.msk [vmem:[#allocation3 + $0xaf] sm:$0x1] %vm1201, %v1118
        %1233 = vst.msk [vmem:[#allocation3 + $0xaf] sm:$0xfe] %vm1197, %v1120
        %1234 = vst.msk [vmem:[#allocation3 + $0xb7] sm:$0xff] %vm1199, %v1122
        %1235 = vst.msk [vmem:[#allocation3 + $0xbf] sm:$0x1] %vm1201, %v1124
        %1236 = vst.msk [vmem:[#allocation3 + $0xbf] sm:$0xfe] %vm1197, %v1126
        %1237 = vst.msk [vmem:[#allocation3 + $0xc7] sm:$0xff] %vm1199, %v1128
        %1238 = vst.msk [vmem:[#allocation3 + $0xcf] sm:$0x1] %vm1201, %v1130
        %1239 = vst.msk [vmem:[#allocation3 + $0xcf] sm:$0xfe] %vm1197, %v1132
        %1240 = vst.msk [vmem:[#allocation3 + $0xd7] sm:$0xff] %vm1199, %v1134
        %1241 = vst.msk [vmem:[#allocation3 + $0xdf] sm:$0x1] %vm1201, %v1136
        %1242 = vst.msk [vmem:[#allocation3 + $0xdf] sm:$0xfe] %vm1197, %v1138
        %1243 = vst.msk [vmem:[#allocation3 + $0xe7] sm:$0xff] %vm1199, %v1140
        %1244 = vst.msk [vmem:[#allocation3 + $0xef] sm:$0x1] %vm1201, %v1142
        %1245 = vst.msk [vmem:[#allocation3 + $0xef] sm:$0xfe] %vm1197, %v1144
        %1246 = vst.msk [vmem:[#allocation3 + $0xf7] sm:$0xff] %vm1199, %v1146
        %1247 = vst.msk [vmem:[#allocation3 + $0xff] sm:$0x1] %vm1201, %v1148
        %1248 = vrot.lane.b32.xlu0 %v400, 20
        %v1249 = vpop.permute.xlu0 %1248
        %1250 = vrot.lane.b32.xlu0 %v401, 20
        %v1251 = vpop.permute.xlu0 %1250
        %1252 = vrot.lane.b32.xlu0 %v402, 20
        %v1253 = vpop.permute.xlu0 %1252
        %1254 = vrot.lane.b32.xlu0 %v403, 20
        %v1255 = vpop.permute.xlu0 %1254
        %1256 = vrot.lane.b32.xlu0 %v404, 20
        %v1257 = vpop.permute.xlu0 %1256
        %1258 = vrot.lane.b32.xlu0 %v405, 20
        %v1259 = vpop.permute.xlu0 %1258
        %1260 = vrot.lane.b32.xlu0 %v406, 20
        %v1261 = vpop.permute.xlu0 %1260
        %1262 = vrot.lane.b32.xlu0 %v407, 20
        %v1263 = vpop.permute.xlu0 %1262
        %1264 = vrot.lane.b32.xlu0 %v408, 20
        %v1265 = vpop.permute.xlu0 %1264
        %1266 = vrot.lane.b32.xlu0 %v409, 20
        %v1267 = vpop.permute.xlu0 %1266
        %1268 = vrot.lane.b32.xlu0 %v410, 20
        %v1269 = vpop.permute.xlu0 %1268
        %1270 = vrot.lane.b32.xlu0 %v411, 20
        %v1271 = vpop.permute.xlu0 %1270
        %1272 = vrot.lane.b32.xlu0 %v412, 20
        %v1273 = vpop.permute.xlu0 %1272
        %1274 = vrot.lane.b32.xlu0 %v413, 20
        %v1275 = vpop.permute.xlu0 %1274
        %1276 = vrot.lane.b32.xlu0 %v414, 20
        %v1277 = vpop.permute.xlu0 %1276
        %1278 = vrot.lane.b32.xlu0 %v415, 20
        %v1279 = vpop.permute.xlu0 %1278
        %1280 = vrot.lane.b32.xlu0 %v416, 20
        %v1281 = vpop.permute.xlu0 %1280
        %1282 = vrot.lane.b32.xlu0 %v417, 20
        %v1283 = vpop.permute.xlu0 %1282
        %1284 = vrot.lane.b32.xlu0 %v418, 20
        %v1285 = vpop.permute.xlu0 %1284
        %1286 = vrot.lane.b32.xlu0 %v419, 20
        %v1287 = vpop.permute.xlu0 %1286
        %1288 = vrot.lane.b32.xlu0 %v420, 20
        %v1289 = vpop.permute.xlu0 %1288
        %1290 = vrot.lane.b32.xlu0 %v421, 20
        %v1291 = vpop.permute.xlu0 %1290
        %1292 = vrot.lane.b32.xlu0 %v422, 20
        %v1293 = vpop.permute.xlu0 %1292
        %1294 = vrot.lane.b32.xlu0 %v423, 20
        %v1295 = vpop.permute.xlu0 %1294
        %1296 = vrot.lane.b32.xlu0 %v424, 20
        %v1297 = vpop.permute.xlu0 %1296
        %1298 = vrot.lane.b32.xlu0 %v425, 20
        %v1299 = vpop.permute.xlu0 %1298
        %1300 = vrot.lane.b32.xlu0 %v426, 20
        %v1301 = vpop.permute.xlu0 %1300
        %1302 = vrot.lane.b32.xlu0 %v427, 20
        %v1303 = vpop.permute.xlu0 %1302
        %1304 = vrot.lane.b32.xlu0 %v428, 20
        %v1305 = vpop.permute.xlu0 %1304
        %1306 = vrot.lane.b32.xlu0 %v429, 20
        %v1307 = vpop.permute.xlu0 %1306
        %1308 = vrot.lane.b32.xlu0 %v430, 20
        %v1309 = vpop.permute.xlu0 %1308
        %1310 = vrot.lane.b32.xlu0 %v431, 20
        %v1311 = vpop.permute.xlu0 %1310
        %1312 = vrot.lane.b32.xlu0 %v432, 20
        %v1313 = vpop.permute.xlu0 %1312
        %1314 = vrot.lane.b32.xlu0 %v433, 20
        %v1315 = vpop.permute.xlu0 %1314
        %1316 = vrot.lane.b32.xlu0 %v434, 20
        %v1317 = vpop.permute.xlu0 %1316
        %1318 = vrot.lane.b32.xlu0 %v435, 20
        %v1319 = vpop.permute.xlu0 %1318
        %1320 = vrot.lane.b32.xlu0 %v436, 20
        %v1321 = vpop.permute.xlu0 %1320
        %1322 = vrot.lane.b32.xlu0 %v437, 20
        %v1323 = vpop.permute.xlu0 %1322
        %1324 = vrot.lane.b32.xlu0 %v438, 20
        %v1325 = vpop.permute.xlu0 %1324
        %1326 = vrot.lane.b32.xlu0 %v439, 20
        %v1327 = vpop.permute.xlu0 %1326
        %1328 = vrot.lane.b32.xlu0 %v440, 20
        %v1329 = vpop.permute.xlu0 %1328
        %1330 = vrot.lane.b32.xlu0 %v441, 20
        %v1331 = vpop.permute.xlu0 %1330
        %1332 = vrot.lane.b32.xlu0 %v442, 20
        %v1333 = vpop.permute.xlu0 %1332
        %1334 = vrot.lane.b32.xlu0 %v443, 20
        %v1335 = vpop.permute.xlu0 %1334
        %1336 = vrot.lane.b32.xlu0 %v444, 20
        %v1337 = vpop.permute.xlu0 %1336
        %1338 = vrot.lane.b32.xlu0 %v445, 20
        %v1339 = vpop.permute.xlu0 %1338
        %1340 = vrot.lane.b32.xlu0 %v446, 20
        %v1341 = vpop.permute.xlu0 %1340
        %1342 = vrot.lane.b32.xlu0 %v447, 20
        %v1343 = vpop.permute.xlu0 %1342
        %vm1392 = vcmask 195746
        %1393 = vst.msk [vmem:[#allocation3 - $0x2] sm:$0xfc] %vm1392, %v1249
        %vm1394 = vcmask 195744
        %1395 = vst.msk [vmem:[#allocation3 + $0x6] sm:$0xff] %vm1394, %v1251
        %vm1396 = vcmask 189600
        %1397 = vst.msk [vmem:[#allocation3 + $0xe] sm:$0x3] %vm1396, %v1253
        %1398 = vst.msk [vmem:[#allocation3 + $0xe] sm:$0xfc] %vm1392, %v1255
        %1399 = vst.msk [vmem:[#allocation3 + $0x16] sm:$0xff] %vm1394, %v1257
        %1400 = vst.msk [vmem:[#allocation3 + $0x1e] sm:$0x3] %vm1396, %v1259
        %1401 = vst.msk [vmem:[#allocation3 + $0x1e] sm:$0xfc] %vm1392, %v1261
        %1402 = vst.msk [vmem:[#allocation3 + $0x26] sm:$0xff] %vm1394, %v1263
        %1403 = vst.msk [vmem:[#allocation3 + $0x2e] sm:$0x3] %vm1396, %v1265
        %1404 = vst.msk [vmem:[#allocation3 + $0x2e] sm:$0xfc] %vm1392, %v1267
        %1405 = vst.msk [vmem:[#allocation3 + $0x36] sm:$0xff] %vm1394, %v1269
        %1406 = vst.msk [vmem:[#allocation3 + $0x3e] sm:$0x3] %vm1396, %v1271
        %1407 = vst.msk [vmem:[#allocation3 + $0x3e] sm:$0xfc] %vm1392, %v1273
        %1408 = vst.msk [vmem:[#allocation3 + $0x46] sm:$0xff] %vm1394, %v1275
        %1409 = vst.msk [vmem:[#allocation3 + $0x4e] sm:$0x3] %vm1396, %v1277
        %1410 = vst.msk [vmem:[#allocation3 + $0x4e] sm:$0xfc] %vm1392, %v1279
        %1411 = vst.msk [vmem:[#allocation3 + $0x56] sm:$0xff] %vm1394, %v1281
        %1412 = vst.msk [vmem:[#allocation3 + $0x5e] sm:$0x3] %vm1396, %v1283
        %1413 = vst.msk [vmem:[#allocation3 + $0x5e] sm:$0xfc] %vm1392, %v1285
        %1414 = vst.msk [vmem:[#allocation3 + $0x66] sm:$0xff] %vm1394, %v1287
        %1415 = vst.msk [vmem:[#allocation3 + $0x6e] sm:$0x3] %vm1396, %v1289
        %1416 = vst.msk [vmem:[#allocation3 + $0x6e] sm:$0xfc] %vm1392, %v1291
        %1417 = vst.msk [vmem:[#allocation3 + $0x76] sm:$0xff] %vm1394, %v1293
        %1418 = vst.msk [vmem:[#allocation3 + $0x7e] sm:$0x3] %vm1396, %v1295
        %1419 = vst.msk [vmem:[#allocation3 + $0x7e] sm:$0xfc] %vm1392, %v1297
        %1420 = vst.msk [vmem:[#allocation3 + $0x86] sm:$0xff] %vm1394, %v1299
        %1421 = vst.msk [vmem:[#allocation3 + $0x8e] sm:$0x3] %vm1396, %v1301
        %1422 = vst.msk [vmem:[#allocation3 + $0x8e] sm:$0xfc] %vm1392, %v1303
        %1423 = vst.msk [vmem:[#allocation3 + $0x96] sm:$0xff] %vm1394, %v1305
        %1424 = vst.msk [vmem:[#allocation3 + $0x9e] sm:$0x3] %vm1396, %v1307
        %1425 = vst.msk [vmem:[#allocation3 + $0x9e] sm:$0xfc] %vm1392, %v1309
        %1426 = vst.msk [vmem:[#allocation3 + $0xa6] sm:$0xff] %vm1394, %v1311
        %1427 = vst.msk [vmem:[#allocation3 + $0xae] sm:$0x3] %vm1396, %v1313
        %1428 = vst.msk [vmem:[#allocation3 + $0xae] sm:$0xfc] %vm1392, %v1315
        %1429 = vst.msk [vmem:[#allocation3 + $0xb6] sm:$0xff] %vm1394, %v1317
        %1430 = vst.msk [vmem:[#allocation3 + $0xbe] sm:$0x3] %vm1396, %v1319
        %1431 = vst.msk [vmem:[#allocation3 + $0xbe] sm:$0xfc] %vm1392, %v1321
        %1432 = vst.msk [vmem:[#allocation3 + $0xc6] sm:$0xff] %vm1394, %v1323
        %1433 = vst.msk [vmem:[#allocation3 + $0xce] sm:$0x3] %vm1396, %v1325
        %1434 = vst.msk [vmem:[#allocation3 + $0xce] sm:$0xfc] %vm1392, %v1327
        %1435 = vst.msk [vmem:[#allocation3 + $0xd6] sm:$0xff] %vm1394, %v1329
        %1436 = vst.msk [vmem:[#allocation3 + $0xde] sm:$0x3] %vm1396, %v1331
        %1437 = vst.msk [vmem:[#allocation3 + $0xde] sm:$0xfc] %vm1392, %v1333
        %1438 = vst.msk [vmem:[#allocation3 + $0xe6] sm:$0xff] %vm1394, %v1335
        %1439 = vst.msk [vmem:[#allocation3 + $0xee] sm:$0x3] %vm1396, %v1337
        %1440 = vst.msk [vmem:[#allocation3 + $0xee] sm:$0xfc] %vm1392, %v1339
        %1441 = vst.msk [vmem:[#allocation3 + $0xf6] sm:$0xff] %vm1394, %v1341
        %1442 = vst.msk [vmem:[#allocation3 + $0xfe] sm:$0x3] %vm1396, %v1343
        %1445 = vrot.lane.b32.xlu0 %v403, 24
        %v1446 = vpop.permute.xlu0 %1445
        %1447 = vrot.lane.b32.xlu0 %v404, 24
        %v1448 = vpop.permute.xlu0 %1447
        %1449 = vrot.lane.b32.xlu0 %v406, 24
        %v1450 = vpop.permute.xlu0 %1449
        %1451 = vrot.lane.b32.xlu0 %v407, 24
        %v1452 = vpop.permute.xlu0 %1451
        %1453 = vrot.lane.b32.xlu0 %v409, 24
        %v1454 = vpop.permute.xlu0 %1453
        %1455 = vrot.lane.b32.xlu0 %v410, 24
        %v1456 = vpop.permute.xlu0 %1455
        %1457 = vrot.lane.b32.xlu0 %v412, 24
        %v1458 = vpop.permute.xlu0 %1457
        %1459 = vrot.lane.b32.xlu0 %v413, 24
        %v1460 = vpop.permute.xlu0 %1459
        %1461 = vrot.lane.b32.xlu0 %v415, 24
        %v1462 = vpop.permute.xlu0 %1461
        %1463 = vrot.lane.b32.xlu0 %v416, 24
        %v1464 = vpop.permute.xlu0 %1463
        %1465 = vrot.lane.b32.xlu0 %v418, 24
        %v1466 = vpop.permute.xlu0 %1465
        %1467 = vrot.lane.b32.xlu0 %v419, 24
        %v1468 = vpop.permute.xlu0 %1467
        %1469 = vrot.lane.b32.xlu0 %v421, 24
        %v1470 = vpop.permute.xlu0 %1469
        %1471 = vrot.lane.b32.xlu0 %v422, 24
        %v1472 = vpop.permute.xlu0 %1471
        %1473 = vrot.lane.b32.xlu0 %v424, 24
        %v1474 = vpop.permute.xlu0 %1473
        %1475 = vrot.lane.b32.xlu0 %v425, 24
        %v1476 = vpop.permute.xlu0 %1475
        %1477 = vrot.lane.b32.xlu0 %v427, 24
        %v1478 = vpop.permute.xlu0 %1477
        %1479 = vrot.lane.b32.xlu0 %v428, 24
        %v1480 = vpop.permute.xlu0 %1479
        %1481 = vrot.lane.b32.xlu0 %v430, 24
        %v1482 = vpop.permute.xlu0 %1481
        %1483 = vrot.lane.b32.xlu0 %v431, 24
        %v1484 = vpop.permute.xlu0 %1483
        %1485 = vrot.lane.b32.xlu0 %v433, 24
        %v1486 = vpop.permute.xlu0 %1485
        %1487 = vrot.lane.b32.xlu0 %v434, 24
        %v1488 = vpop.permute.xlu0 %1487
        %1489 = vrot.lane.b32.xlu0 %v436, 24
        %v1490 = vpop.permute.xlu0 %1489
        %1491 = vrot.lane.b32.xlu0 %v437, 24
        %v1492 = vpop.permute.xlu0 %1491
        %1493 = vrot.lane.b32.xlu0 %v439, 24
        %v1494 = vpop.permute.xlu0 %1493
        %1495 = vrot.lane.b32.xlu0 %v440, 24
        %v1496 = vpop.permute.xlu0 %1495
        %1497 = vrot.lane.b32.xlu0 %v442, 24
        %v1498 = vpop.permute.xlu0 %1497
        %1499 = vrot.lane.b32.xlu0 %v443, 24
        %v1500 = vpop.permute.xlu0 %1499
        %1501 = vrot.lane.b32.xlu0 %v445, 24
        %v1502 = vpop.permute.xlu0 %1501
        %1503 = vrot.lane.b32.xlu0 %v446, 24
        %v1504 = vpop.permute.xlu0 %1503
        %1505 = vrot.lane.b32.xlu0 %v448, 24
        %v1506 = vpop.permute.xlu0 %1505
        %1507 = vrot.lane.b32.xlu0 %v449, 24
        %v1508 = vpop.permute.xlu0 %1507
        %vm1541 = vcmask 228544
        %1542 = vst.msk [vmem:[#allocation3] sm:$0xff] %vm1541, %v1446
        %1543 = vst.msk [vmem:[#allocation3 + $0x8] sm:$0xff] %vm1541, %v1448
        %1544 = vst.msk [vmem:[#allocation3 + $0x10] sm:$0xff] %vm1541, %v1450
        %1545 = vst.msk [vmem:[#allocation3 + $0x18] sm:$0xff] %vm1541, %v1452
        %1546 = vst.msk [vmem:[#allocation3 + $0x20] sm:$0xff] %vm1541, %v1454
        %1547 = vst.msk [vmem:[#allocation3 + $0x28] sm:$0xff] %vm1541, %v1456
        %1548 = vst.msk [vmem:[#allocation3 + $0x30] sm:$0xff] %vm1541, %v1458
        %1549 = vst.msk [vmem:[#allocation3 + $0x38] sm:$0xff] %vm1541, %v1460
        %1550 = vst.msk [vmem:[#allocation3 + $0x40] sm:$0xff] %vm1541, %v1462
        %1551 = vst.msk [vmem:[#allocation3 + $0x48] sm:$0xff] %vm1541, %v1464
        %1552 = vst.msk [vmem:[#allocation3 + $0x50] sm:$0xff] %vm1541, %v1466
        %1553 = vst.msk [vmem:[#allocation3 + $0x58] sm:$0xff] %vm1541, %v1468
        %1554 = vst.msk [vmem:[#allocation3 + $0x60] sm:$0xff] %vm1541, %v1470
        %1555 = vst.msk [vmem:[#allocation3 + $0x68] sm:$0xff] %vm1541, %v1472
        %1556 = vst.msk [vmem:[#allocation3 + $0x70] sm:$0xff] %vm1541, %v1474
        %1557 = vst.msk [vmem:[#allocation3 + $0x78] sm:$0xff] %vm1541, %v1476
        %1558 = vst.msk [vmem:[#allocation3 + $0x80] sm:$0xff] %vm1541, %v1478
        %1559 = vst.msk [vmem:[#allocation3 + $0x88] sm:$0xff] %vm1541, %v1480
        %1560 = vst.msk [vmem:[#allocation3 + $0x90] sm:$0xff] %vm1541, %v1482
        %1561 = vst.msk [vmem:[#allocation3 + $0x98] sm:$0xff] %vm1541, %v1484
        %1562 = vst.msk [vmem:[#allocation3 + $0xa0] sm:$0xff] %vm1541, %v1486
        %1563 = vst.msk [vmem:[#allocation3 + $0xa8] sm:$0xff] %vm1541, %v1488
        %1564 = vst.msk [vmem:[#allocation3 + $0xb0] sm:$0xff] %vm1541, %v1490
        %1565 = vst.msk [vmem:[#allocation3 + $0xb8] sm:$0xff] %vm1541, %v1492
        %1566 = vst.msk [vmem:[#allocation3 + $0xc0] sm:$0xff] %vm1541, %v1494
        %1567 = vst.msk [vmem:[#allocation3 + $0xc8] sm:$0xff] %vm1541, %v1496
        %1568 = vst.msk [vmem:[#allocation3 + $0xd0] sm:$0xff] %vm1541, %v1498
        %1569 = vst.msk [vmem:[#allocation3 + $0xd8] sm:$0xff] %vm1541, %v1500
        %1570 = vst.msk [vmem:[#allocation3 + $0xe0] sm:$0xff] %vm1541, %v1502
        %1571 = vst.msk [vmem:[#allocation3 + $0xe8] sm:$0xff] %vm1541, %v1504
        %1572 = vst.msk [vmem:[#allocation3 + $0xf0] sm:$0xff] %vm1541, %v1506
        %1573 = vst.msk [vmem:[#allocation3 + $0xf8] sm:$0xff] %vm1541, %v1508
        %1575 = vrot.lane.b32.xlu0 %v403, 28
        %v1576 = vpop.permute.xlu0 %1575
        %1577 = vrot.lane.b32.xlu0 %v404, 28
        %v1578 = vpop.permute.xlu0 %1577
        %1579 = vrot.lane.b32.xlu0 %v405, 28
        %v1580 = vpop.permute.xlu0 %1579
        %1581 = vrot.lane.b32.xlu0 %v406, 28
        %v1582 = vpop.permute.xlu0 %1581
        %1583 = vrot.lane.b32.xlu0 %v407, 28
        %v1584 = vpop.permute.xlu0 %1583
        %1585 = vrot.lane.b32.xlu0 %v408, 28
        %v1586 = vpop.permute.xlu0 %1585
        %1587 = vrot.lane.b32.xlu0 %v409, 28
        %v1588 = vpop.permute.xlu0 %1587
        %1589 = vrot.lane.b32.xlu0 %v410, 28
        %v1590 = vpop.permute.xlu0 %1589
        %1591 = vrot.lane.b32.xlu0 %v411, 28
        %v1592 = vpop.permute.xlu0 %1591
        %1593 = vrot.lane.b32.xlu0 %v412, 28
        %v1594 = vpop.permute.xlu0 %1593
        %1595 = vrot.lane.b32.xlu0 %v413, 28
        %v1596 = vpop.permute.xlu0 %1595
        %1597 = vrot.lane.b32.xlu0 %v414, 28
        %v1598 = vpop.permute.xlu0 %1597
        %1599 = vrot.lane.b32.xlu0 %v415, 28
        %v1600 = vpop.permute.xlu0 %1599
        %1601 = vrot.lane.b32.xlu0 %v416, 28
        %v1602 = vpop.permute.xlu0 %1601
        %1603 = vrot.lane.b32.xlu0 %v417, 28
        %v1604 = vpop.permute.xlu0 %1603
        %1605 = vrot.lane.b32.xlu0 %v418, 28
        %v1606 = vpop.permute.xlu0 %1605
        %1607 = vrot.lane.b32.xlu0 %v419, 28
        %v1608 = vpop.permute.xlu0 %1607
        %1609 = vrot.lane.b32.xlu0 %v420, 28
        %v1610 = vpop.permute.xlu0 %1609
        %1611 = vrot.lane.b32.xlu0 %v421, 28
        %v1612 = vpop.permute.xlu0 %1611
        %1613 = vrot.lane.b32.xlu0 %v422, 28
        %v1614 = vpop.permute.xlu0 %1613
        %1615 = vrot.lane.b32.xlu0 %v423, 28
        %v1616 = vpop.permute.xlu0 %1615
        %1617 = vrot.lane.b32.xlu0 %v424, 28
        %v1618 = vpop.permute.xlu0 %1617
        %1619 = vrot.lane.b32.xlu0 %v425, 28
        %v1620 = vpop.permute.xlu0 %1619
        %1621 = vrot.lane.b32.xlu0 %v426, 28
        %v1622 = vpop.permute.xlu0 %1621
        %1623 = vrot.lane.b32.xlu0 %v427, 28
        %v1624 = vpop.permute.xlu0 %1623
        %1625 = vrot.lane.b32.xlu0 %v428, 28
        %v1626 = vpop.permute.xlu0 %1625
        %1627 = vrot.lane.b32.xlu0 %v429, 28
        %v1628 = vpop.permute.xlu0 %1627
        %1629 = vrot.lane.b32.xlu0 %v430, 28
        %v1630 = vpop.permute.xlu0 %1629
        %1631 = vrot.lane.b32.xlu0 %v431, 28
        %v1632 = vpop.permute.xlu0 %1631
        %1633 = vrot.lane.b32.xlu0 %v432, 28
        %v1634 = vpop.permute.xlu0 %1633
        %1635 = vrot.lane.b32.xlu0 %v433, 28
        %v1636 = vpop.permute.xlu0 %1635
        %1637 = vrot.lane.b32.xlu0 %v434, 28
        %v1638 = vpop.permute.xlu0 %1637
        %1639 = vrot.lane.b32.xlu0 %v435, 28
        %v1640 = vpop.permute.xlu0 %1639
        %1641 = vrot.lane.b32.xlu0 %v436, 28
        %v1642 = vpop.permute.xlu0 %1641
        %1643 = vrot.lane.b32.xlu0 %v437, 28
        %v1644 = vpop.permute.xlu0 %1643
        %1645 = vrot.lane.b32.xlu0 %v438, 28
        %v1646 = vpop.permute.xlu0 %1645
        %1647 = vrot.lane.b32.xlu0 %v439, 28
        %v1648 = vpop.permute.xlu0 %1647
        %1649 = vrot.lane.b32.xlu0 %v440, 28
        %v1650 = vpop.permute.xlu0 %1649
        %1651 = vrot.lane.b32.xlu0 %v441, 28
        %v1652 = vpop.permute.xlu0 %1651
        %1653 = vrot.lane.b32.xlu0 %v442, 28
        %v1654 = vpop.permute.xlu0 %1653
        %1655 = vrot.lane.b32.xlu0 %v443, 28
        %v1656 = vpop.permute.xlu0 %1655
        %1657 = vrot.lane.b32.xlu0 %v444, 28
        %v1658 = vpop.permute.xlu0 %1657
        %1659 = vrot.lane.b32.xlu0 %v445, 28
        %v1660 = vpop.permute.xlu0 %1659
        %1661 = vrot.lane.b32.xlu0 %v446, 28
        %v1662 = vpop.permute.xlu0 %1661
        %1663 = vrot.lane.b32.xlu0 %v447, 28
        %v1664 = vpop.permute.xlu0 %1663
        %1665 = vrot.lane.b32.xlu0 %v448, 28
        %v1666 = vpop.permute.xlu0 %1665
        %1667 = vrot.lane.b32.xlu0 %v449, 28
        %v1668 = vpop.permute.xlu0 %1667
        %1669 = vrot.lane.b32.xlu0 %v450, 28
        %v1670 = vpop.permute.xlu0 %1669
        %vm1719 = vcmask 261345
        %1720 = vst.msk [vmem:[#allocation3 - $0x1] sm:$0xfe] %vm1719, %v1576
        %vm1721 = vcmask 261344
        %1722 = vst.msk [vmem:[#allocation3 + $0x7] sm:$0xff] %vm1721, %v1578
        %vm1723 = vcmask 254176
        %1724 = vst.msk [vmem:[#allocation3 + $0xf] sm:$0x1] %vm1723, %v1580
        %1725 = vst.msk [vmem:[#allocation3 + $0xf] sm:$0xfe] %vm1719, %v1582
        %1726 = vst.msk [vmem:[#allocation3 + $0x17] sm:$0xff] %vm1721, %v1584
        %1727 = vst.msk [vmem:[#allocation3 + $0x1f] sm:$0x1] %vm1723, %v1586
        %1728 = vst.msk [vmem:[#allocation3 + $0x1f] sm:$0xfe] %vm1719, %v1588
        %1729 = vst.msk [vmem:[#allocation3 + $0x27] sm:$0xff] %vm1721, %v1590
        %1730 = vst.msk [vmem:[#allocation3 + $0x2f] sm:$0x1] %vm1723, %v1592
        %1731 = vst.msk [vmem:[#allocation3 + $0x2f] sm:$0xfe] %vm1719, %v1594
        %1732 = vst.msk [vmem:[#allocation3 + $0x37] sm:$0xff] %vm1721, %v1596
        %1733 = vst.msk [vmem:[#allocation3 + $0x3f] sm:$0x1] %vm1723, %v1598
        %1734 = vst.msk [vmem:[#allocation3 + $0x3f] sm:$0xfe] %vm1719, %v1600
        %1735 = vst.msk [vmem:[#allocation3 + $0x47] sm:$0xff] %vm1721, %v1602
        %1736 = vst.msk [vmem:[#allocation3 + $0x4f] sm:$0x1] %vm1723, %v1604
        %1737 = vst.msk [vmem:[#allocation3 + $0x4f] sm:$0xfe] %vm1719, %v1606
        %1738 = vst.msk [vmem:[#allocation3 + $0x57] sm:$0xff] %vm1721, %v1608
        %1739 = vst.msk [vmem:[#allocation3 + $0x5f] sm:$0x1] %vm1723, %v1610
        %1740 = vst.msk [vmem:[#allocation3 + $0x5f] sm:$0xfe] %vm1719, %v1612
        %1741 = vst.msk [vmem:[#allocation3 + $0x67] sm:$0xff] %vm1721, %v1614
        %1742 = vst.msk [vmem:[#allocation3 + $0x6f] sm:$0x1] %vm1723, %v1616
        %1743 = vst.msk [vmem:[#allocation3 + $0x6f] sm:$0xfe] %vm1719, %v1618
        %1744 = vst.msk [vmem:[#allocation3 + $0x77] sm:$0xff] %vm1721, %v1620
        %1745 = vst.msk [vmem:[#allocation3 + $0x7f] sm:$0x1] %vm1723, %v1622
        %1746 = vst.msk [vmem:[#allocation3 + $0x7f] sm:$0xfe] %vm1719, %v1624
        %1747 = vst.msk [vmem:[#allocation3 + $0x87] sm:$0xff] %vm1721, %v1626
        %1748 = vst.msk [vmem:[#allocation3 + $0x8f] sm:$0x1] %vm1723, %v1628
        %1749 = vst.msk [vmem:[#allocation3 + $0x8f] sm:$0xfe] %vm1719, %v1630
        %1750 = vst.msk [vmem:[#allocation3 + $0x97] sm:$0xff] %vm1721, %v1632
        %1751 = vst.msk [vmem:[#allocation3 + $0x9f] sm:$0x1] %vm1723, %v1634
        %1752 = vst.msk [vmem:[#allocation3 + $0x9f] sm:$0xfe] %vm1719, %v1636
        %1753 = vst.msk [vmem:[#allocation3 + $0xa7] sm:$0xff] %vm1721, %v1638
        %1754 = vst.msk [vmem:[#allocation3 + $0xaf] sm:$0x1] %vm1723, %v1640
        %1755 = vst.msk [vmem:[#allocation3 + $0xaf] sm:$0xfe] %vm1719, %v1642
        %1756 = vst.msk [vmem:[#allocation3 + $0xb7] sm:$0xff] %vm1721, %v1644
        %1757 = vst.msk [vmem:[#allocation3 + $0xbf] sm:$0x1] %vm1723, %v1646
        %1758 = vst.msk [vmem:[#allocation3 + $0xbf] sm:$0xfe] %vm1719, %v1648
        %1759 = vst.msk [vmem:[#allocation3 + $0xc7] sm:$0xff] %vm1721, %v1650
        %1760 = vst.msk [vmem:[#allocation3 + $0xcf] sm:$0x1] %vm1723, %v1652
        %1761 = vst.msk [vmem:[#allocation3 + $0xcf] sm:$0xfe] %vm1719, %v1654
        %1762 = vst.msk [vmem:[#allocation3 + $0xd7] sm:$0xff] %vm1721, %v1656
        %1763 = vst.msk [vmem:[#allocation3 + $0xdf] sm:$0x1] %vm1723, %v1658
        %1764 = vst.msk [vmem:[#allocation3 + $0xdf] sm:$0xfe] %vm1719, %v1660
        %1765 = vst.msk [vmem:[#allocation3 + $0xe7] sm:$0xff] %vm1721, %v1662
        %1766 = vst.msk [vmem:[#allocation3 + $0xef] sm:$0x1] %vm1723, %v1664
        %1767 = vst.msk [vmem:[#allocation3 + $0xef] sm:$0xfe] %vm1719, %v1666
        %1768 = vst.msk [vmem:[#allocation3 + $0xf7] sm:$0xff] %vm1721, %v1668
        %1769 = vst.msk [vmem:[#allocation3 + $0xff] sm:$0x1] %vm1723, %v1670
        %1770 = vrot.lane.b32.xlu0 %v403, 32
        %v1771 = vpop.permute.xlu0 %1770
        %1772 = vrot.lane.b32.xlu0 %v404, 32
        %v1773 = vpop.permute.xlu0 %1772
        %1774 = vrot.lane.b32.xlu0 %v405, 32
        %v1775 = vpop.permute.xlu0 %1774
        %1776 = vrot.lane.b32.xlu0 %v406, 32
        %v1777 = vpop.permute.xlu0 %1776
        %1778 = vrot.lane.b32.xlu0 %v407, 32
        %v1779 = vpop.permute.xlu0 %1778
        %1780 = vrot.lane.b32.xlu0 %v408, 32
        %v1781 = vpop.permute.xlu0 %1780
        %1782 = vrot.lane.b32.xlu0 %v409, 32
        %v1783 = vpop.permute.xlu0 %1782
        %1784 = vrot.lane.b32.xlu0 %v410, 32
        %v1785 = vpop.permute.xlu0 %1784
        %1786 = vrot.lane.b32.xlu0 %v411, 32
        %v1787 = vpop.permute.xlu0 %1786
        %1788 = vrot.lane.b32.xlu0 %v412, 32
        %v1789 = vpop.permute.xlu0 %1788
        %1790 = vrot.lane.b32.xlu0 %v413, 32
        %v1791 = vpop.permute.xlu0 %1790
        %1792 = vrot.lane.b32.xlu0 %v414, 32
        %v1793 = vpop.permute.xlu0 %1792
        %1794 = vrot.lane.b32.xlu0 %v415, 32
        %v1795 = vpop.permute.xlu0 %1794
        %1796 = vrot.lane.b32.xlu0 %v416, 32
        %v1797 = vpop.permute.xlu0 %1796
        %1798 = vrot.lane.b32.xlu0 %v417, 32
        %v1799 = vpop.permute.xlu0 %1798
        %1800 = vrot.lane.b32.xlu0 %v418, 32
        %v1801 = vpop.permute.xlu0 %1800
        %1802 = vrot.lane.b32.xlu0 %v419, 32
        %v1803 = vpop.permute.xlu0 %1802
        %1804 = vrot.lane.b32.xlu0 %v420, 32
        %v1805 = vpop.permute.xlu0 %1804
        %1806 = vrot.lane.b32.xlu0 %v421, 32
        %v1807 = vpop.permute.xlu0 %1806
        %1808 = vrot.lane.b32.xlu0 %v422, 32
        %v1809 = vpop.permute.xlu0 %1808
        %1810 = vrot.lane.b32.xlu0 %v423, 32
        %v1811 = vpop.permute.xlu0 %1810
        %1812 = vrot.lane.b32.xlu0 %v424, 32
        %v1813 = vpop.permute.xlu0 %1812
        %1814 = vrot.lane.b32.xlu0 %v425, 32
        %v1815 = vpop.permute.xlu0 %1814
        %1816 = vrot.lane.b32.xlu0 %v426, 32
        %v1817 = vpop.permute.xlu0 %1816
        %1818 = vrot.lane.b32.xlu0 %v427, 32
        %v1819 = vpop.permute.xlu0 %1818
        %1820 = vrot.lane.b32.xlu0 %v428, 32
        %v1821 = vpop.permute.xlu0 %1820
        %1822 = vrot.lane.b32.xlu0 %v429, 32
        %v1823 = vpop.permute.xlu0 %1822
        %1824 = vrot.lane.b32.xlu0 %v430, 32
        %v1825 = vpop.permute.xlu0 %1824
        %1826 = vrot.lane.b32.xlu0 %v431, 32
        %v1827 = vpop.permute.xlu0 %1826
        %1828 = vrot.lane.b32.xlu0 %v432, 32
        %v1829 = vpop.permute.xlu0 %1828
        %1830 = vrot.lane.b32.xlu0 %v433, 32
        %v1831 = vpop.permute.xlu0 %1830
        %1832 = vrot.lane.b32.xlu0 %v434, 32
        %v1833 = vpop.permute.xlu0 %1832
        %1834 = vrot.lane.b32.xlu0 %v435, 32
        %v1835 = vpop.permute.xlu0 %1834
        %1836 = vrot.lane.b32.xlu0 %v436, 32
        %v1837 = vpop.permute.xlu0 %1836
        %1838 = vrot.lane.b32.xlu0 %v437, 32
        %v1839 = vpop.permute.xlu0 %1838
        %1840 = vrot.lane.b32.xlu0 %v438, 32
        %v1841 = vpop.permute.xlu0 %1840
        %1842 = vrot.lane.b32.xlu0 %v439, 32
        %v1843 = vpop.permute.xlu0 %1842
        %1844 = vrot.lane.b32.xlu0 %v440, 32
        %v1845 = vpop.permute.xlu0 %1844
        %1846 = vrot.lane.b32.xlu0 %v441, 32
        %v1847 = vpop.permute.xlu0 %1846
        %1848 = vrot.lane.b32.xlu0 %v442, 32
        %v1849 = vpop.permute.xlu0 %1848
        %1850 = vrot.lane.b32.xlu0 %v443, 32
        %v1851 = vpop.permute.xlu0 %1850
        %1852 = vrot.lane.b32.xlu0 %v444, 32
        %v1853 = vpop.permute.xlu0 %1852
        %1854 = vrot.lane.b32.xlu0 %v445, 32
        %v1855 = vpop.permute.xlu0 %1854
        %1856 = vrot.lane.b32.xlu0 %v446, 32
        %v1857 = vpop.permute.xlu0 %1856
        %1858 = vrot.lane.b32.xlu0 %v447, 32
        %v1859 = vpop.permute.xlu0 %1858
        %1860 = vrot.lane.b32.xlu0 %v448, 32
        %v1861 = vpop.permute.xlu0 %1860
        %1862 = vrot.lane.b32.xlu0 %v449, 32
        %v1863 = vpop.permute.xlu0 %1862
        %1864 = vrot.lane.b32.xlu0 %v450, 32
        %v1865 = vpop.permute.xlu0 %1864
        %vm1914 = vcmask 294146
        %1915 = vst.msk [vmem:[#allocation3 - $0x2] sm:$0xfc] %vm1914, %v1771
        %vm1916 = vcmask 294144
        %1917 = vst.msk [vmem:[#allocation3 + $0x6] sm:$0xff] %vm1916, %v1773
        %vm1918 = vcmask 288000
        %1919 = vst.msk [vmem:[#allocation3 + $0xe] sm:$0x3] %vm1918, %v1775
        %1920 = vst.msk [vmem:[#allocation3 + $0xe] sm:$0xfc] %vm1914, %v1777
        %1921 = vst.msk [vmem:[#allocation3 + $0x16] sm:$0xff] %vm1916, %v1779
        %1922 = vst.msk [vmem:[#allocation3 + $0x1e] sm:$0x3] %vm1918, %v1781
        %1923 = vst.msk [vmem:[#allocation3 + $0x1e] sm:$0xfc] %vm1914, %v1783
        %1924 = vst.msk [vmem:[#allocation3 + $0x26] sm:$0xff] %vm1916, %v1785
        %1925 = vst.msk [vmem:[#allocation3 + $0x2e] sm:$0x3] %vm1918, %v1787
        %1926 = vst.msk [vmem:[#allocation3 + $0x2e] sm:$0xfc] %vm1914, %v1789
        %1927 = vst.msk [vmem:[#allocation3 + $0x36] sm:$0xff] %vm1916, %v1791
        %1928 = vst.msk [vmem:[#allocation3 + $0x3e] sm:$0x3] %vm1918, %v1793
        %1929 = vst.msk [vmem:[#allocation3 + $0x3e] sm:$0xfc] %vm1914, %v1795
        %1930 = vst.msk [vmem:[#allocation3 + $0x46] sm:$0xff] %vm1916, %v1797
        %1931 = vst.msk [vmem:[#allocation3 + $0x4e] sm:$0x3] %vm1918, %v1799
        %1932 = vst.msk [vmem:[#allocation3 + $0x4e] sm:$0xfc] %vm1914, %v1801
        %1933 = vst.msk [vmem:[#allocation3 + $0x56] sm:$0xff] %vm1916, %v1803
        %1934 = vst.msk [vmem:[#allocation3 + $0x5e] sm:$0x3] %vm1918, %v1805
        %1935 = vst.msk [vmem:[#allocation3 + $0x5e] sm:$0xfc] %vm1914, %v1807
        %1936 = vst.msk [vmem:[#allocation3 + $0x66] sm:$0xff] %vm1916, %v1809
        %1937 = vst.msk [vmem:[#allocation3 + $0x6e] sm:$0x3] %vm1918, %v1811
        %1938 = vst.msk [vmem:[#allocation3 + $0x6e] sm:$0xfc] %vm1914, %v1813
        %1939 = vst.msk [vmem:[#allocation3 + $0x76] sm:$0xff] %vm1916, %v1815
        %1940 = vst.msk [vmem:[#allocation3 + $0x7e] sm:$0x3] %vm1918, %v1817
        %1941 = vst.msk [vmem:[#allocation3 + $0x7e] sm:$0xfc] %vm1914, %v1819
        %1942 = vst.msk [vmem:[#allocation3 + $0x86] sm:$0xff] %vm1916, %v1821
        %1943 = vst.msk [vmem:[#allocation3 + $0x8e] sm:$0x3] %vm1918, %v1823
        %1944 = vst.msk [vmem:[#allocation3 + $0x8e] sm:$0xfc] %vm1914, %v1825
        %1945 = vst.msk [vmem:[#allocation3 + $0x96] sm:$0xff] %vm1916, %v1827
        %1946 = vst.msk [vmem:[#allocation3 + $0x9e] sm:$0x3] %vm1918, %v1829
        %1947 = vst.msk [vmem:[#allocation3 + $0x9e] sm:$0xfc] %vm1914, %v1831
        %1948 = vst.msk [vmem:[#allocation3 + $0xa6] sm:$0xff] %vm1916, %v1833
        %1949 = vst.msk [vmem:[#allocation3 + $0xae] sm:$0x3] %vm1918, %v1835
        %1950 = vst.msk [vmem:[#allocation3 + $0xae] sm:$0xfc] %vm1914, %v1837
        %1951 = vst.msk [vmem:[#allocation3 + $0xb6] sm:$0xff] %vm1916, %v1839
        %1952 = vst.msk [vmem:[#allocation3 + $0xbe] sm:$0x3] %vm1918, %v1841
        %1953 = vst.msk [vmem:[#allocation3 + $0xbe] sm:$0xfc] %vm1914, %v1843
        %1954 = vst.msk [vmem:[#allocation3 + $0xc6] sm:$0xff] %vm1916, %v1845
        %1955 = vst.msk [vmem:[#allocation3 + $0xce] sm:$0x3] %vm1918, %v1847
        %1956 = vst.msk [vmem:[#allocation3 + $0xce] sm:$0xfc] %vm1914, %v1849
        %1957 = vst.msk [vmem:[#allocation3 + $0xd6] sm:$0xff] %vm1916, %v1851
        %1958 = vst.msk [vmem:[#allocation3 + $0xde] sm:$0x3] %vm1918, %v1853
        %1959 = vst.msk [vmem:[#allocation3 + $0xde] sm:$0xfc] %vm1914, %v1855
        %1960 = vst.msk [vmem:[#allocation3 + $0xe6] sm:$0xff] %vm1916, %v1857
        %1961 = vst.msk [vmem:[#allocation3 + $0xee] sm:$0x3] %vm1918, %v1859
        %1962 = vst.msk [vmem:[#allocation3 + $0xee] sm:$0xfc] %vm1914, %v1861
        %1963 = vst.msk [vmem:[#allocation3 + $0xf6] sm:$0xff] %vm1916, %v1863
        %1964 = vst.msk [vmem:[#allocation3 + $0xfe] sm:$0x3] %vm1918, %v1865
        %v1965 = vld [vmem:[#allocation3] sm:$0xff]
        %v1966 = vld [vmem:[#allocation3 + $0x8] sm:$0xff]
        %v1967 = vld [vmem:[#allocation3 + $0x10] sm:$0xff]
        %v1968 = vld [vmem:[#allocation3 + $0x18] sm:$0xff]
        %v1969 = vld [vmem:[#allocation3 + $0x20] sm:$0xff]
        %v1970 = vld [vmem:[#allocation3 + $0x28] sm:$0xff]
        %v1971 = vld [vmem:[#allocation3 + $0x30] sm:$0xff]
        %v1972 = vld [vmem:[#allocation3 + $0x38] sm:$0xff]
        %v1973 = vld [vmem:[#allocation3 + $0x40] sm:$0xff]
        %v1974 = vld [vmem:[#allocation3 + $0x48] sm:$0xff]
        %v1975 = vld [vmem:[#allocation3 + $0x50] sm:$0xff]
        %v1976 = vld [vmem:[#allocation3 + $0x58] sm:$0xff]
        %v1977 = vld [vmem:[#allocation3 + $0x60] sm:$0xff]
        %v1978 = vld [vmem:[#allocation3 + $0x68] sm:$0xff]
        %v1979 = vld [vmem:[#allocation3 + $0x70] sm:$0xff]
        %v1980 = vld [vmem:[#allocation3 + $0x78] sm:$0xff]
        %v1981 = vld [vmem:[#allocation3 + $0x80] sm:$0xff]
        %v1982 = vld [vmem:[#allocation3 + $0x88] sm:$0xff]
        %v1983 = vld [vmem:[#allocation3 + $0x90] sm:$0xff]
        %v1984 = vld [vmem:[#allocation3 + $0x98] sm:$0xff]
        %v1985 = vld [vmem:[#allocation3 + $0xa0] sm:$0xff]
        %v1986 = vld [vmem:[#allocation3 + $0xa8] sm:$0xff]
        %v1987 = vld [vmem:[#allocation3 + $0xb0] sm:$0xff]
        %v1988 = vld [vmem:[#allocation3 + $0xb8] sm:$0xff]
        %v1989 = vld [vmem:[#allocation3 + $0xc0] sm:$0xff]
        %v1990 = vld [vmem:[#allocation3 + $0xc8] sm:$0xff]
        %v1991 = vld [vmem:[#allocation3 + $0xd0] sm:$0xff]
        %v1992 = vld [vmem:[#allocation3 + $0xd8] sm:$0xff]
        %v1993 = vld [vmem:[#allocation3 + $0xe0] sm:$0xff]
        %v1994 = vld [vmem:[#allocation3 + $0xe8] sm:$0xff]
        %v1995 = vld [vmem:[#allocation3 + $0xf0] sm:$0xff]
        %v1996 = vld [vmem:[#allocation3 + $0xf8] sm:$0xff]
        %v1997 = vpack.c.bf16 %v1966, %v1965
        %v1998 = vpack.c.bf16 %v1968, %v1967
        %v1999 = vpack.c.bf16 %v1970, %v1969
        %v2000 = vpack.c.bf16 %v1972, %v1971
        %v2001 = vpack.c.bf16 %v1974, %v1973
        %v2002 = vpack.c.bf16 %v1976, %v1975
        %v2003 = vpack.c.bf16 %v1978, %v1977
        %v2004 = vpack.c.bf16 %v1980, %v1979
        %v2005 = vpack.c.bf16 %v1982, %v1981
        %v2006 = vpack.c.bf16 %v1984, %v1983
        %v2007 = vpack.c.bf16 %v1986, %v1985
        %v2008 = vpack.c.bf16 %v1988, %v1987
        %v2009 = vpack.c.bf16 %v1990, %v1989
        %v2010 = vpack.c.bf16 %v1992, %v1991
        %v2011 = vpack.c.bf16 %v1994, %v1993
        %v2012 = vpack.c.bf16 %v1996, %v1995
        %v2013 = vld [vmem:[%s1] sm:$0xf]
        %v2014 = vld [vmem:[%s1 + $0x4] sm:$0xf]
        %v2015 = vld [vmem:[%s1 + $0x8] sm:$0xf]
        %v2016 = vld [vmem:[%s1 + $0xc] sm:$0xf]
        %v2017 = vld [vmem:[%s1 + $0x10] sm:$0x3]
        %v2023 = vunpack.c.l.b16 %v2013
        %v2024 = vunpack.c.l.b16 %v2014
        %v2025 = vunpack.c.l.b16 %v2015
        %v2026 = vunpack.c.l.b16 %v2016
        %v2027 = vunpack.c.l.b16 %v2017
        %v2028 = vpack.c.b16 %v2024, %v2023
        %v2029 = vpack.c.b16 %v2026, %v2025
        %v2030 = vpack.c.b16 %v2027, %v2027
        %vm2033 = vcmask 293888
        %v2035 = vsel %vm2033, %v1997, 0
        %v2038 = vsel %vm2033, %v1998, 0
        %v2041 = vsel %vm2033, %v1999, 0
        %v2044 = vsel %vm2033, %v2000, 0
        %v2047 = vsel %vm2033, %v2001, 0
        %v2050 = vsel %vm2033, %v2002, 0
        %v2053 = vsel %vm2033, %v2003, 0
        %v2056 = vsel %vm2033, %v2004, 0
        %v2059 = vsel %vm2033, %v2005, 0
        %v2062 = vsel %vm2033, %v2006, 0
        %v2065 = vsel %vm2033, %v2007, 0
        %v2068 = vsel %vm2033, %v2008, 0
        %v2071 = vsel %vm2033, %v2009, 0
        %v2074 = vsel %vm2033, %v2010, 0
        %v2077 = vsel %vm2033, %v2011, 0
        %v2080 = vsel %vm2033, %v2012, 0
        %vm2082 = vcmask 1041408
        %v2084 = vsel %vm2082, %v2030, 0
        %2086 = vmatpush.bf16.msra.mxu0 0
        %2087 = vmatpush.bf16.msra.mxu0 0
        %2088 = vmatpush.bf16.msra.mxu0 0
        %2089 = vmatpush.bf16.msra.mxu0 0
        %2090 = vmatpush.bf16.msra.mxu0 0
        %2091 = vmatpush.bf16.msra.mxu0 %v2084
        %2092 = vmatpush.bf16.msra.mxu0 %v2029
        %2093 = vmatpush.bf16.msra.mxu0 %v2028
        %2094 = vmatmul.bf16.gmra.mxu0 %v2035
        %v2095 = vpop.f32.mrf.mxu0
        %v2096 = vadd.f32 0.0, %v2095
        %v2097 = vpop.f32.mrf.mxu0
        %v2098 = vadd.f32 0.0, %v2097
        %2099 = vmatmul.bf16.gmra.mxu0 %v2038
        %v2100 = vpop.f32.mrf.mxu0
        %v2101 = vadd.f32 0.0, %v2100
        %v2102 = vpop.f32.mrf.mxu0
        %v2103 = vadd.f32 0.0, %v2102
        %2104 = vmatmul.bf16.gmra.mxu0 %v2041
        %v2105 = vpop.f32.mrf.mxu0
        %v2106 = vadd.f32 0.0, %v2105
        %v2107 = vpop.f32.mrf.mxu0
        %v2108 = vadd.f32 0.0, %v2107
        %2109 = vmatmul.bf16.gmra.mxu0 %v2044
        %v2110 = vpop.f32.mrf.mxu0
        %v2111 = vadd.f32 0.0, %v2110
        %v2112 = vpop.f32.mrf.mxu0
        %v2113 = vadd.f32 0.0, %v2112
        %2114 = vmatmul.bf16.gmra.mxu0 %v2047
        %v2115 = vpop.f32.mrf.mxu0
        %v2116 = vadd.f32 0.0, %v2115
        %v2117 = vpop.f32.mrf.mxu0
        %v2118 = vadd.f32 0.0, %v2117
        %2119 = vmatmul.bf16.gmra.mxu0 %v2050
        %v2120 = vpop.f32.mrf.mxu0
        %v2121 = vadd.f32 0.0, %v2120
        %v2122 = vpop.f32.mrf.mxu0
        %v2123 = vadd.f32 0.0, %v2122
        %2124 = vmatmul.bf16.gmra.mxu0 %v2053
        %v2125 = vpop.f32.mrf.mxu0
        %v2126 = vadd.f32 0.0, %v2125
        %v2127 = vpop.f32.mrf.mxu0
        %v2128 = vadd.f32 0.0, %v2127
        %2129 = vmatmul.bf16.gmra.mxu0 %v2056
        %v2130 = vpop.f32.mrf.mxu0
        %v2131 = vadd.f32 0.0, %v2130
        %v2132 = vpop.f32.mrf.mxu0
        %v2133 = vadd.f32 0.0, %v2132
        %2134 = vmatmul.bf16.gmra.mxu0 %v2059
        %v2135 = vpop.f32.mrf.mxu0
        %v2136 = vadd.f32 0.0, %v2135
        %v2137 = vpop.f32.mrf.mxu0
        %v2138 = vadd.f32 0.0, %v2137
        %2139 = vmatmul.bf16.gmra.mxu0 %v2062
        %v2140 = vpop.f32.mrf.mxu0
        %v2141 = vadd.f32 0.0, %v2140
        %v2142 = vpop.f32.mrf.mxu0
        %v2143 = vadd.f32 0.0, %v2142
        %2144 = vmatmul.bf16.gmra.mxu0 %v2065
        %v2145 = vpop.f32.mrf.mxu0
        %v2146 = vadd.f32 0.0, %v2145
        %v2147 = vpop.f32.mrf.mxu0
        %v2148 = vadd.f32 0.0, %v2147
        %2149 = vmatmul.bf16.gmra.mxu0 %v2068
        %v2150 = vpop.f32.mrf.mxu0
        %v2151 = vadd.f32 0.0, %v2150
        %v2152 = vpop.f32.mrf.mxu0
        %v2153 = vadd.f32 0.0, %v2152
        %2154 = vmatmul.bf16.gmra.mxu0 %v2071
        %v2155 = vpop.f32.mrf.mxu0
        %v2156 = vadd.f32 0.0, %v2155
        %v2157 = vpop.f32.mrf.mxu0
        %v2158 = vadd.f32 0.0, %v2157
        %2159 = vmatmul.bf16.gmra.mxu0 %v2074
        %v2160 = vpop.f32.mrf.mxu0
        %v2161 = vadd.f32 0.0, %v2160
        %v2162 = vpop.f32.mrf.mxu0
        %v2163 = vadd.f32 0.0, %v2162
        %2164 = vmatmul.bf16.gmra.mxu0 %v2077
        %v2165 = vpop.f32.mrf.mxu0
        %v2166 = vadd.f32 0.0, %v2165
        %v2167 = vpop.f32.mrf.mxu0
        %v2168 = vadd.f32 0.0, %v2167
        %2169 = vmatmul.bf16.gmra.mxu0 %v2080
        %v2170 = vpop.f32.mrf.mxu0
        %v2171 = vadd.f32 0.0, %v2170
        %v2172 = vpop.f32.mrf.mxu0
        %v2173 = vadd.f32 0.0, %v2172
        %2174 = vdwg.mxu0
        %vm2175 = vcmask 64512
        %2176 = vst.msk [vmem:[%s279] sm:$0xff] %vm2175, %v2096
        %2177 = vst.msk [vmem:[%s279 + $0x8] sm:$0xff] %vm2175, %v2098
        %2178 = vst.msk [vmem:[%s279 + $0x10] sm:$0xff] %vm2175, %v2101
        %2179 = vst.msk [vmem:[%s279 + $0x18] sm:$0xff] %vm2175, %v2103
        %2180 = vst.msk [vmem:[%s279 + $0x20] sm:$0xff] %vm2175, %v2106
        %2181 = vst.msk [vmem:[%s279 + $0x28] sm:$0xff] %vm2175, %v2108
        %2182 = vst.msk [vmem:[%s279 + $0x30] sm:$0xff] %vm2175, %v2111
        %2183 = vst.msk [vmem:[%s279 + $0x38] sm:$0xff] %vm2175, %v2113
        %2184 = vst.msk [vmem:[%s279 + $0x40] sm:$0xff] %vm2175, %v2116
        %2185 = vst.msk [vmem:[%s279 + $0x48] sm:$0xff] %vm2175, %v2118
        %2186 = vst.msk [vmem:[%s279 + $0x50] sm:$0xff] %vm2175, %v2121
        %2187 = vst.msk [vmem:[%s279 + $0x58] sm:$0xff] %vm2175, %v2123
        %2188 = vst.msk [vmem:[%s279 + $0x60] sm:$0xff] %vm2175, %v2126
        %2189 = vst.msk [vmem:[%s279 + $0x68] sm:$0xff] %vm2175, %v2128
        %2190 = vst.msk [vmem:[%s279 + $0x70] sm:$0xff] %vm2175, %v2131
        %2191 = vst.msk [vmem:[%s279 + $0x78] sm:$0xff] %vm2175, %v2133
        %2192 = vst.msk [vmem:[%s279 + $0x80] sm:$0xff] %vm2175, %v2136
        %2193 = vst.msk [vmem:[%s279 + $0x88] sm:$0xff] %vm2175, %v2138
        %2194 = vst.msk [vmem:[%s279 + $0x90] sm:$0xff] %vm2175, %v2141
        %2195 = vst.msk [vmem:[%s279 + $0x98] sm:$0xff] %vm2175, %v2143
        %2196 = vst.msk [vmem:[%s279 + $0xa0] sm:$0xff] %vm2175, %v2146
        %2197 = vst.msk [vmem:[%s279 + $0xa8] sm:$0xff] %vm2175, %v2148
        %2198 = vst.msk [vmem:[%s279 + $0xb0] sm:$0xff] %vm2175, %v2151
        %2199 = vst.msk [vmem:[%s279 + $0xb8] sm:$0xff] %vm2175, %v2153
        %2200 = vst.msk [vmem:[%s279 + $0xc0] sm:$0xff] %vm2175, %v2156
        %2201 = vst.msk [vmem:[%s279 + $0xc8] sm:$0xff] %vm2175, %v2158
        %2202 = vst.msk [vmem:[%s279 + $0xd0] sm:$0xff] %vm2175, %v2161
        %2203 = vst.msk [vmem:[%s279 + $0xd8] sm:$0xff] %vm2175, %v2163
        %2204 = vst.msk [vmem:[%s279 + $0xe0] sm:$0xff] %vm2175, %v2166
        %2205 = vst.msk [vmem:[%s279 + $0xe8] sm:$0xff] %vm2175, %v2168
        %2206 = vst.msk [vmem:[%s279 + $0xf0] sm:$0xff] %vm2175, %v2171
        %2207 = vst.msk [vmem:[%s279 + $0xf8] sm:$0xff] %vm2175, %v2173
        %v2208 = vsel %vm2175, %v2096, 0.0
        %v2209 = vsel %vm2175, %v2098, 0.0
        %v2210 = vadd.f32 %v2208, %v2209
        %v2211 = vsel %vm2175, %v2101, 0.0
        %v2212 = vadd.f32 %v2210, %v2211
        %v2213 = vsel %vm2175, %v2103, 0.0
        %v2214 = vadd.f32 %v2212, %v2213
        %v2215 = vsel %vm2175, %v2106, 0.0
        %v2216 = vadd.f32 %v2214, %v2215
        %v2217 = vsel %vm2175, %v2108, 0.0
        %v2218 = vadd.f32 %v2216, %v2217
        %v2219 = vsel %vm2175, %v2111, 0.0
        %v2220 = vadd.f32 %v2218, %v2219
        %v2221 = vsel %vm2175, %v2113, 0.0
        %v2222 = vadd.f32 %v2220, %v2221
        %v2223 = vsel %vm2175, %v2116, 0.0
        %v2224 = vadd.f32 %v2222, %v2223
        %v2225 = vsel %vm2175, %v2118, 0.0
        %v2226 = vadd.f32 %v2224, %v2225
        %v2227 = vsel %vm2175, %v2121, 0.0
        %v2228 = vadd.f32 %v2226, %v2227
        %v2229 = vsel %vm2175, %v2123, 0.0
        %v2230 = vadd.f32 %v2228, %v2229
        %v2231 = vsel %vm2175, %v2126, 0.0
        %v2232 = vadd.f32 %v2230, %v2231
        %v2233 = vsel %vm2175, %v2128, 0.0
        %v2234 = vadd.f32 %v2232, %v2233
        %v2235 = vsel %vm2175, %v2131, 0.0
        %v2236 = vadd.f32 %v2234, %v2235
        %v2237 = vsel %vm2175, %v2133, 0.0
        %v2238 = vadd.f32 %v2236, %v2237
        %v2239 = vsel %vm2175, %v2136, 0.0
        %v2240 = vadd.f32 %v2238, %v2239
        %v2241 = vsel %vm2175, %v2138, 0.0
        %v2242 = vadd.f32 %v2240, %v2241
        %v2243 = vsel %vm2175, %v2141, 0.0
        %v2244 = vadd.f32 %v2242, %v2243
        %v2245 = vsel %vm2175, %v2143, 0.0
        %v2246 = vadd.f32 %v2244, %v2245
        %v2247 = vsel %vm2175, %v2146, 0.0
        %v2248 = vadd.f32 %v2246, %v2247
        %v2249 = vsel %vm2175, %v2148, 0.0
        %v2250 = vadd.f32 %v2248, %v2249
        %v2251 = vsel %vm2175, %v2151, 0.0
        %v2252 = vadd.f32 %v2250, %v2251
        %v2253 = vsel %vm2175, %v2153, 0.0
        %v2254 = vadd.f32 %v2252, %v2253
        %v2255 = vsel %vm2175, %v2156, 0.0
        %v2256 = vadd.f32 %v2254, %v2255
        %v2257 = vsel %vm2175, %v2158, 0.0
        %v2258 = vadd.f32 %v2256, %v2257
        %v2259 = vsel %vm2175, %v2161, 0.0
        %v2260 = vadd.f32 %v2258, %v2259
        %v2261 = vsel %vm2175, %v2163, 0.0
        %v2262 = vadd.f32 %v2260, %v2261
        %v2263 = vsel %vm2175, %v2166, 0.0
        %v2264 = vadd.f32 %v2262, %v2263
        %v2265 = vsel %vm2175, %v2168, 0.0
        %v2266 = vadd.f32 %v2264, %v2265
        %v2267 = vsel %vm2175, %v2171, 0.0
        %v2268 = vadd.f32 %v2266, %v2267
        %v2269 = vsel %vm2175, %v2173, 0.0
        %v2270 = vadd.f32 %v2268, %v2269
        %v2271 = vrot.slane %v2270, 4
        %v2272 = vadd.f32 %v2270, %v2271
        %v2273 = vrot.slane %v2272, 2
        %v2274 = vadd.f32 %v2272, %v2273
        %v2275 = vrot.slane %v2274, 1
        %v2276 = vadd.f32 %v2274, %v2275
        %vm2277 = vcmask 57344
        %2278 = vst.msk [vmem:[%s255] sm:$0x1] %vm2277, %v2276
        %v2279 = vmul.f32 %v2096, %v2096
        %v2280 = vmul.f32 %v2098, %v2098
        %v2281 = vmul.f32 %v2101, %v2101
        %v2282 = vmul.f32 %v2103, %v2103
        %v2283 = vmul.f32 %v2106, %v2106
        %v2284 = vmul.f32 %v2108, %v2108
        %v2285 = vmul.f32 %v2111, %v2111
        %v2286 = vmul.f32 %v2113, %v2113
        %v2287 = vmul.f32 %v2116, %v2116
        %v2288 = vmul.f32 %v2118, %v2118
        %v2289 = vmul.f32 %v2121, %v2121
        %v2290 = vmul.f32 %v2123, %v2123
        %v2291 = vmul.f32 %v2126, %v2126
        %v2292 = vmul.f32 %v2128, %v2128
        %v2293 = vmul.f32 %v2131, %v2131
        %v2294 = vmul.f32 %v2133, %v2133
        %v2295 = vmul.f32 %v2136, %v2136
        %v2296 = vmul.f32 %v2138, %v2138
        %v2297 = vmul.f32 %v2141, %v2141
        %v2298 = vmul.f32 %v2143, %v2143
        %v2299 = vmul.f32 %v2146, %v2146
        %v2300 = vmul.f32 %v2148, %v2148
        %v2301 = vmul.f32 %v2151, %v2151
        %v2302 = vmul.f32 %v2153, %v2153
        %v2303 = vmul.f32 %v2156, %v2156
        %v2304 = vmul.f32 %v2158, %v2158
        %v2305 = vmul.f32 %v2161, %v2161
        %v2306 = vmul.f32 %v2163, %v2163
        %v2307 = vmul.f32 %v2166, %v2166
        %v2308 = vmul.f32 %v2168, %v2168
        %v2309 = vmul.f32 %v2171, %v2171
        %v2310 = vmul.f32 %v2173, %v2173
        %v2311 = vsel %vm2175, %v2279, 0.0
        %v2312 = vsel %vm2175, %v2280, 0.0
        %v2313 = vadd.f32 %v2311, %v2312
        %v2314 = vsel %vm2175, %v2281, 0.0
        %v2315 = vadd.f32 %v2313, %v2314
        %v2316 = vsel %vm2175, %v2282, 0.0
        %v2317 = vadd.f32 %v2315, %v2316
        %v2318 = vsel %vm2175, %v2283, 0.0
        %v2319 = vadd.f32 %v2317, %v2318
        %v2320 = vsel %vm2175, %v2284, 0.0
        %v2321 = vadd.f32 %v2319, %v2320
        %v2322 = vsel %vm2175, %v2285, 0.0
        %v2323 = vadd.f32 %v2321, %v2322
        %v2324 = vsel %vm2175, %v2286, 0.0
        %v2325 = vadd.f32 %v2323, %v2324
        %v2326 = vsel %vm2175, %v2287, 0.0
        %v2327 = vadd.f32 %v2325, %v2326
        %v2328 = vsel %vm2175, %v2288, 0.0
        %v2329 = vadd.f32 %v2327, %v2328
        %v2330 = vsel %vm2175, %v2289, 0.0
        %v2331 = vadd.f32 %v2329, %v2330
        %v2332 = vsel %vm2175, %v2290, 0.0
        %v2333 = vadd.f32 %v2331, %v2332
        %v2334 = vsel %vm2175, %v2291, 0.0
        %v2335 = vadd.f32 %v2333, %v2334
        %v2336 = vsel %vm2175, %v2292, 0.0
        %v2337 = vadd.f32 %v2335, %v2336
        %v2338 = vsel %vm2175, %v2293, 0.0
        %v2339 = vadd.f32 %v2337, %v2338
        %v2340 = vsel %vm2175, %v2294, 0.0
        %v2341 = vadd.f32 %v2339, %v2340
        %v2342 = vsel %vm2175, %v2295, 0.0
        %v2343 = vadd.f32 %v2341, %v2342
        %v2344 = vsel %vm2175, %v2296, 0.0
        %v2345 = vadd.f32 %v2343, %v2344
        %v2346 = vsel %vm2175, %v2297, 0.0
        %v2347 = vadd.f32 %v2345, %v2346
        %v2348 = vsel %vm2175, %v2298, 0.0
        %v2349 = vadd.f32 %v2347, %v2348
        %v2350 = vsel %vm2175, %v2299, 0.0
        %v2351 = vadd.f32 %v2349, %v2350
        %v2352 = vsel %vm2175, %v2300, 0.0
        %v2353 = vadd.f32 %v2351, %v2352
        %v2354 = vsel %vm2175, %v2301, 0.0
        %v2355 = vadd.f32 %v2353, %v2354
        %v2356 = vsel %vm2175, %v2302, 0.0
        %v2357 = vadd.f32 %v2355, %v2356
        %v2358 = vsel %vm2175, %v2303, 0.0
        %v2359 = vadd.f32 %v2357, %v2358
        %v2360 = vsel %vm2175, %v2304, 0.0
        %v2361 = vadd.f32 %v2359, %v2360
        %v2362 = vsel %vm2175, %v2305, 0.0
        %v2363 = vadd.f32 %v2361, %v2362
        %v2364 = vsel %vm2175, %v2306, 0.0
        %v2365 = vadd.f32 %v2363, %v2364
        %v2366 = vsel %vm2175, %v2307, 0.0
        %v2367 = vadd.f32 %v2365, %v2366
        %v2368 = vsel %vm2175, %v2308, 0.0
        %v2369 = vadd.f32 %v2367, %v2368
        %v2370 = vsel %vm2175, %v2309, 0.0
        %v2371 = vadd.f32 %v2369, %v2370
        %v2372 = vsel %vm2175, %v2310, 0.0
        %v2373 = vadd.f32 %v2371, %v2372
        %v2374 = vrot.slane %v2373, 4
        %v2375 = vadd.f32 %v2373, %v2374
        %v2376 = vrot.slane %v2375, 2
        %v2377 = vadd.f32 %v2375, %v2376
        %v2378 = vrot.slane %v2377, 1
        %v2379 = vadd.f32 %v2377, %v2378
        %2380 = vst.msk [vmem:[%s255 + $0x1] sm:$0x1] %vm2277, %v2379
        %v2381 = vpack.c.bf16 %v333, %v332
        %v2382 = vpack.c.bf16 %v335, %v334
        %v2383 = vpack.c.bf16 %v337, %v336
        %v2384 = vpack.c.bf16 %v339, %v338
        %v2385 = vpack.c.bf16 %v341, %v340
        %v2386 = vpack.c.bf16 %v343, %v342
        %v2387 = vpack.c.bf16 %v345, %v344
        %v2388 = vpack.c.bf16 %v347, %v346
        %v2389 = vpack.c.bf16 %v349, %v348
        %v2390 = vpack.c.bf16 %v351, %v350
        %v2391 = vpack.c.bf16 %v353, %v352
        %v2392 = vpack.c.bf16 %v355, %v354
        %v2393 = vpack.c.bf16 %v357, %v356
        %v2394 = vpack.c.bf16 %v359, %v358
        %v2395 = vpack.c.bf16 %v361, %v360
        %v2396 = vpack.c.bf16 %v363, %v362
        %v2397 = vld [vmem:[%s2] sm:$0x3]
        %v2399 = vsel %vm286, %v2381, 0
        %v2402 = vsel %vm286, %v2382, 0
        %v2405 = vsel %vm286, %v2383, 0
        %v2408 = vsel %vm286, %v2384, 0
        %v2411 = vsel %vm286, %v2385, 0
        %v2414 = vsel %vm286, %v2386, 0
        %v2417 = vsel %vm286, %v2387, 0
        %v2420 = vsel %vm286, %v2388, 0
        %v2423 = vsel %vm286, %v2389, 0
        %v2426 = vsel %vm286, %v2390, 0
        %v2429 = vsel %vm286, %v2391, 0
        %v2432 = vsel %vm286, %v2392, 0
        %v2435 = vsel %vm286, %v2393, 0
        %v2438 = vsel %vm286, %v2394, 0
        %v2441 = vsel %vm286, %v2395, 0
        %v2444 = vsel %vm286, %v2396, 0
        %v2447 = vsel %vm2082, %v2397, 0
        %2449 = vmatpush.bf16.msra.mxu0 0
        %2450 = vmatpush.bf16.msra.mxu0 0
        %2451 = vmatpush.bf16.msra.mxu0 0
        %2452 = vmatpush.bf16.msra.mxu0 0
        %2453 = vmatpush.bf16.msra.mxu0 0
        %2454 = vmatpush.bf16.msra.mxu0 0
        %2455 = vmatpush.bf16.msra.mxu0 0
        %2456 = vmatpush.bf16.msra.mxu0 %v2447
        %2457 = vmatmul.bf16.gmra.mxu0 %v2399
        %v2458 = vpop.f32.mrf.mxu0
        %v2459 = vadd.f32 0.0, %v2458
        %v2460 = vpop.f32.mrf.mxu0
        %v2461 = vadd.f32 0.0, %v2460
        %2462 = vmatmul.bf16.gmra.mxu0 %v2402
        %v2463 = vpop.f32.mrf.mxu0
        %v2464 = vadd.f32 0.0, %v2463
        %v2465 = vpop.f32.mrf.mxu0
        %v2466 = vadd.f32 0.0, %v2465
        %2467 = vmatmul.bf16.gmra.mxu0 %v2405
        %v2468 = vpop.f32.mrf.mxu0
        %v2469 = vadd.f32 0.0, %v2468
        %v2470 = vpop.f32.mrf.mxu0
        %v2471 = vadd.f32 0.0, %v2470
        %2472 = vmatmul.bf16.gmra.mxu0 %v2408
        %v2473 = vpop.f32.mrf.mxu0
        %v2474 = vadd.f32 0.0, %v2473
        %v2475 = vpop.f32.mrf.mxu0
        %v2476 = vadd.f32 0.0, %v2475
        %2477 = vmatmul.bf16.gmra.mxu0 %v2411
        %v2478 = vpop.f32.mrf.mxu0
        %v2479 = vadd.f32 0.0, %v2478
        %v2480 = vpop.f32.mrf.mxu0
        %v2481 = vadd.f32 0.0, %v2480
        %2482 = vmatmul.bf16.gmra.mxu0 %v2414
        %v2483 = vpop.f32.mrf.mxu0
        %v2484 = vadd.f32 0.0, %v2483
        %v2485 = vpop.f32.mrf.mxu0
        %v2486 = vadd.f32 0.0, %v2485
        %2487 = vmatmul.bf16.gmra.mxu0 %v2417
        %v2488 = vpop.f32.mrf.mxu0
        %v2489 = vadd.f32 0.0, %v2488
        %v2490 = vpop.f32.mrf.mxu0
        %v2491 = vadd.f32 0.0, %v2490
        %2492 = vmatmul.bf16.gmra.mxu0 %v2420
        %v2493 = vpop.f32.mrf.mxu0
        %v2494 = vadd.f32 0.0, %v2493
        %v2495 = vpop.f32.mrf.mxu0
        %v2496 = vadd.f32 0.0, %v2495
        %2497 = vmatmul.bf16.gmra.mxu0 %v2423
        %v2498 = vpop.f32.mrf.mxu0
        %v2499 = vadd.f32 0.0, %v2498
        %v2500 = vpop.f32.mrf.mxu0
        %v2501 = vadd.f32 0.0, %v2500
        %2502 = vmatmul.bf16.gmra.mxu0 %v2426
        %v2503 = vpop.f32.mrf.mxu0
        %v2504 = vadd.f32 0.0, %v2503
        %v2505 = vpop.f32.mrf.mxu0
        %v2506 = vadd.f32 0.0, %v2505
        %2507 = vmatmul.bf16.gmra.mxu0 %v2429
        %v2508 = vpop.f32.mrf.mxu0
        %v2509 = vadd.f32 0.0, %v2508
        %v2510 = vpop.f32.mrf.mxu0
        %v2511 = vadd.f32 0.0, %v2510
        %2512 = vmatmul.bf16.gmra.mxu0 %v2432
        %v2513 = vpop.f32.mrf.mxu0
        %v2514 = vadd.f32 0.0, %v2513
        %v2515 = vpop.f32.mrf.mxu0
        %v2516 = vadd.f32 0.0, %v2515
        %2517 = vmatmul.bf16.gmra.mxu0 %v2435
        %v2518 = vpop.f32.mrf.mxu0
        %v2519 = vadd.f32 0.0, %v2518
        %v2520 = vpop.f32.mrf.mxu0
        %v2521 = vadd.f32 0.0, %v2520
        %2522 = vmatmul.bf16.gmra.mxu0 %v2438
        %v2523 = vpop.f32.mrf.mxu0
        %v2524 = vadd.f32 0.0, %v2523
        %v2525 = vpop.f32.mrf.mxu0
        %v2526 = vadd.f32 0.0, %v2525
        %2527 = vmatmul.bf16.gmra.mxu0 %v2441
        %v2528 = vpop.f32.mrf.mxu0
        %v2529 = vadd.f32 0.0, %v2528
        %v2530 = vpop.f32.mrf.mxu0
        %v2531 = vadd.f32 0.0, %v2530
        %2532 = vmatmul.bf16.gmra.mxu0 %v2444
        %v2533 = vpop.f32.mrf.mxu0
        %v2534 = vadd.f32 0.0, %v2533
        %v2535 = vpop.f32.mrf.mxu0
        %v2536 = vadd.f32 0.0, %v2535
        %2537 = vdwg.mxu0
        %2538 = vst.msk [vmem:[%s284] sm:$0xff] %vm2175, %v2459
        %2539 = vst.msk [vmem:[%s284 + $0x8] sm:$0xff] %vm2175, %v2461
        %2540 = vst.msk [vmem:[%s284 + $0x10] sm:$0xff] %vm2175, %v2464
        %2541 = vst.msk [vmem:[%s284 + $0x18] sm:$0xff] %vm2175, %v2466
        %2542 = vst.msk [vmem:[%s284 + $0x20] sm:$0xff] %vm2175, %v2469
        %2543 = vst.msk [vmem:[%s284 + $0x28] sm:$0xff] %vm2175, %v2471
        %2544 = vst.msk [vmem:[%s284 + $0x30] sm:$0xff] %vm2175, %v2474
        %2545 = vst.msk [vmem:[%s284 + $0x38] sm:$0xff] %vm2175, %v2476
        %2546 = vst.msk [vmem:[%s284 + $0x40] sm:$0xff] %vm2175, %v2479
        %2547 = vst.msk [vmem:[%s284 + $0x48] sm:$0xff] %vm2175, %v2481
        %2548 = vst.msk [vmem:[%s284 + $0x50] sm:$0xff] %vm2175, %v2484
        %2549 = vst.msk [vmem:[%s284 + $0x58] sm:$0xff] %vm2175, %v2486
        %2550 = vst.msk [vmem:[%s284 + $0x60] sm:$0xff] %vm2175, %v2489
        %2551 = vst.msk [vmem:[%s284 + $0x68] sm:$0xff] %vm2175, %v2491
        %2552 = vst.msk [vmem:[%s284 + $0x70] sm:$0xff] %vm2175, %v2494
        %2553 = vst.msk [vmem:[%s284 + $0x78] sm:$0xff] %vm2175, %v2496
        %2554 = vst.msk [vmem:[%s284 + $0x80] sm:$0xff] %vm2175, %v2499
        %2555 = vst.msk [vmem:[%s284 + $0x88] sm:$0xff] %vm2175, %v2501
        %2556 = vst.msk [vmem:[%s284 + $0x90] sm:$0xff] %vm2175, %v2504
        %2557 = vst.msk [vmem:[%s284 + $0x98] sm:$0xff] %vm2175, %v2506
        %2558 = vst.msk [vmem:[%s284 + $0xa0] sm:$0xff] %vm2175, %v2509
        %2559 = vst.msk [vmem:[%s284 + $0xa8] sm:$0xff] %vm2175, %v2511
        %2560 = vst.msk [vmem:[%s284 + $0xb0] sm:$0xff] %vm2175, %v2514
        %2561 = vst.msk [vmem:[%s284 + $0xb8] sm:$0xff] %vm2175, %v2516
        %2562 = vst.msk [vmem:[%s284 + $0xc0] sm:$0xff] %vm2175, %v2519
        %2563 = vst.msk [vmem:[%s284 + $0xc8] sm:$0xff] %vm2175, %v2521
        %2564 = vst.msk [vmem:[%s284 + $0xd0] sm:$0xff] %vm2175, %v2524
        %2565 = vst.msk [vmem:[%s284 + $0xd8] sm:$0xff] %vm2175, %v2526
        %2566 = vst.msk [vmem:[%s284 + $0xe0] sm:$0xff] %vm2175, %v2529
        %2567 = vst.msk [vmem:[%s284 + $0xe8] sm:$0xff] %vm2175, %v2531
        %2568 = vst.msk [vmem:[%s284 + $0xf0] sm:$0xff] %vm2175, %v2534
        %2569 = vst.msk [vmem:[%s284 + $0xf8] sm:$0xff] %vm2175, %v2536
        %v2570 = vsel %vm2175, %v2459, 0.0
        %v2571 = vsel %vm2175, %v2461, 0.0
        %v2572 = vadd.f32 %v2570, %v2571
        %v2573 = vsel %vm2175, %v2464, 0.0
        %v2574 = vadd.f32 %v2572, %v2573
        %v2575 = vsel %vm2175, %v2466, 0.0
        %v2576 = vadd.f32 %v2574, %v2575
        %v2577 = vsel %vm2175, %v2469, 0.0
        %v2578 = vadd.f32 %v2576, %v2577
        %v2579 = vsel %vm2175, %v2471, 0.0
        %v2580 = vadd.f32 %v2578, %v2579
        %v2581 = vsel %vm2175, %v2474, 0.0
        %v2582 = vadd.f32 %v2580, %v2581
        %v2583 = vsel %vm2175, %v2476, 0.0
        %v2584 = vadd.f32 %v2582, %v2583
        %v2585 = vsel %vm2175, %v2479, 0.0
        %v2586 = vadd.f32 %v2584, %v2585
        %v2587 = vsel %vm2175, %v2481, 0.0
        %v2588 = vadd.f32 %v2586, %v2587
        %v2589 = vsel %vm2175, %v2484, 0.0
        %v2590 = vadd.f32 %v2588, %v2589
        %v2591 = vsel %vm2175, %v2486, 0.0
        %v2592 = vadd.f32 %v2590, %v2591
        %v2593 = vsel %vm2175, %v2489, 0.0
        %v2594 = vadd.f32 %v2592, %v2593
        %v2595 = vsel %vm2175, %v2491, 0.0
        %v2596 = vadd.f32 %v2594, %v2595
        %v2597 = vsel %vm2175, %v2494, 0.0
        %v2598 = vadd.f32 %v2596, %v2597
        %v2599 = vsel %vm2175, %v2496, 0.0
        %v2600 = vadd.f32 %v2598, %v2599
        %v2601 = vsel %vm2175, %v2499, 0.0
        %v2602 = vadd.f32 %v2600, %v2601
        %v2603 = vsel %vm2175, %v2501, 0.0
        %v2604 = vadd.f32 %v2602, %v2603
        %v2605 = vsel %vm2175, %v2504, 0.0
        %v2606 = vadd.f32 %v2604, %v2605
        %v2607 = vsel %vm2175, %v2506, 0.0
        %v2608 = vadd.f32 %v2606, %v2607
        %v2609 = vsel %vm2175, %v2509, 0.0
        %v2610 = vadd.f32 %v2608, %v2609
        %v2611 = vsel %vm2175, %v2511, 0.0
        %v2612 = vadd.f32 %v2610, %v2611
        %v2613 = vsel %vm2175, %v2514, 0.0
        %v2614 = vadd.f32 %v2612, %v2613
        %v2615 = vsel %vm2175, %v2516, 0.0
        %v2616 = vadd.f32 %v2614, %v2615
        %v2617 = vsel %vm2175, %v2519, 0.0
        %v2618 = vadd.f32 %v2616, %v2617
        %v2619 = vsel %vm2175, %v2521, 0.0
        %v2620 = vadd.f32 %v2618, %v2619
        %v2621 = vsel %vm2175, %v2524, 0.0
        %v2622 = vadd.f32 %v2620, %v2621
        %v2623 = vsel %vm2175, %v2526, 0.0
        %v2624 = vadd.f32 %v2622, %v2623
        %v2625 = vsel %vm2175, %v2529, 0.0
        %v2626 = vadd.f32 %v2624, %v2625
        %v2627 = vsel %vm2175, %v2531, 0.0
        %v2628 = vadd.f32 %v2626, %v2627
        %v2629 = vsel %vm2175, %v2534, 0.0
        %v2630 = vadd.f32 %v2628, %v2629
        %v2631 = vsel %vm2175, %v2536, 0.0
        %v2632 = vadd.f32 %v2630, %v2631
        %v2633 = vrot.slane %v2632, 4
        %v2634 = vadd.f32 %v2632, %v2633
        %v2635 = vrot.slane %v2634, 2
        %v2636 = vadd.f32 %v2634, %v2635
        %v2637 = vrot.slane %v2636, 1
        %v2638 = vadd.f32 %v2636, %v2637
        %2639 = vst.msk [vmem:[%s269] sm:$0x1] %vm2277, %v2638
        %v2640 = vmul.f32 %v2459, %v2459
        %v2641 = vmul.f32 %v2461, %v2461
        %v2642 = vmul.f32 %v2464, %v2464
        %v2643 = vmul.f32 %v2466, %v2466
        %v2644 = vmul.f32 %v2469, %v2469
        %v2645 = vmul.f32 %v2471, %v2471
        %v2646 = vmul.f32 %v2474, %v2474
        %v2647 = vmul.f32 %v2476, %v2476
        %v2648 = vmul.f32 %v2479, %v2479
        %v2649 = vmul.f32 %v2481, %v2481
        %v2650 = vmul.f32 %v2484, %v2484
        %v2651 = vmul.f32 %v2486, %v2486
        %v2652 = vmul.f32 %v2489, %v2489
        %v2653 = vmul.f32 %v2491, %v2491
        %v2654 = vmul.f32 %v2494, %v2494
        %v2655 = vmul.f32 %v2496, %v2496
        %v2656 = vmul.f32 %v2499, %v2499
        %v2657 = vmul.f32 %v2501, %v2501
        %v2658 = vmul.f32 %v2504, %v2504
        %v2659 = vmul.f32 %v2506, %v2506
        %v2660 = vmul.f32 %v2509, %v2509
        %v2661 = vmul.f32 %v2511, %v2511
        %v2662 = vmul.f32 %v2514, %v2514
        %v2663 = vmul.f32 %v2516, %v2516
        %v2664 = vmul.f32 %v2519, %v2519
        %v2665 = vmul.f32 %v2521, %v2521
        %v2666 = vmul.f32 %v2524, %v2524
        %v2667 = vmul.f32 %v2526, %v2526
        %v2668 = vmul.f32 %v2529, %v2529
        %v2669 = vmul.f32 %v2531, %v2531
        %v2670 = vmul.f32 %v2534, %v2534
        %v2671 = vmul.f32 %v2536, %v2536
        %v2672 = vsel %vm2175, %v2640, 0.0
        %v2673 = vsel %vm2175, %v2641, 0.0
        %v2674 = vadd.f32 %v2672, %v2673
        %v2675 = vsel %vm2175, %v2642, 0.0
        %v2676 = vadd.f32 %v2674, %v2675
        %v2677 = vsel %vm2175, %v2643, 0.0
        %v2678 = vadd.f32 %v2676, %v2677
        %v2679 = vsel %vm2175, %v2644, 0.0
        %v2680 = vadd.f32 %v2678, %v2679
        %v2681 = vsel %vm2175, %v2645, 0.0
        %v2682 = vadd.f32 %v2680, %v2681
        %v2683 = vsel %vm2175, %v2646, 0.0
        %v2684 = vadd.f32 %v2682, %v2683
        %v2685 = vsel %vm2175, %v2647, 0.0
        %v2686 = vadd.f32 %v2684, %v2685
        %v2687 = vsel %vm2175, %v2648, 0.0
        %v2688 = vadd.f32 %v2686, %v2687
        %v2689 = vsel %vm2175, %v2649, 0.0
        %v2690 = vadd.f32 %v2688, %v2689
        %v2691 = vsel %vm2175, %v2650, 0.0
        %v2692 = vadd.f32 %v2690, %v2691
        %v2693 = vsel %vm2175, %v2651, 0.0
        %v2694 = vadd.f32 %v2692, %v2693
        %v2695 = vsel %vm2175, %v2652, 0.0
        %v2696 = vadd.f32 %v2694, %v2695
        %v2697 = vsel %vm2175, %v2653, 0.0
        %v2698 = vadd.f32 %v2696, %v2697
        %v2699 = vsel %vm2175, %v2654, 0.0
        %v2700 = vadd.f32 %v2698, %v2699
        %v2701 = vsel %vm2175, %v2655, 0.0
        %v2702 = vadd.f32 %v2700, %v2701
        %v2703 = vsel %vm2175, %v2656, 0.0
        %v2704 = vadd.f32 %v2702, %v2703
        %v2705 = vsel %vm2175, %v2657, 0.0
        %v2706 = vadd.f32 %v2704, %v2705
        %v2707 = vsel %vm2175, %v2658, 0.0
        %v2708 = vadd.f32 %v2706, %v2707
        %v2709 = vsel %vm2175, %v2659, 0.0
        %v2710 = vadd.f32 %v2708, %v2709
        %v2711 = vsel %vm2175, %v2660, 0.0
        %v2712 = vadd.f32 %v2710, %v2711
        %v2713 = vsel %vm2175, %v2661, 0.0
        %v2714 = vadd.f32 %v2712, %v2713
        %v2715 = vsel %vm2175, %v2662, 0.0
        %v2716 = vadd.f32 %v2714, %v2715
        %v2717 = vsel %vm2175, %v2663, 0.0
        %v2718 = vadd.f32 %v2716, %v2717
        %v2719 = vsel %vm2175, %v2664, 0.0
        %v2720 = vadd.f32 %v2718, %v2719
        %v2721 = vsel %vm2175, %v2665, 0.0
        %v2722 = vadd.f32 %v2720, %v2721
        %v2723 = vsel %vm2175, %v2666, 0.0
        %v2724 = vadd.f32 %v2722, %v2723
        %v2725 = vsel %vm2175, %v2667, 0.0
        %v2726 = vadd.f32 %v2724, %v2725
        %v2727 = vsel %vm2175, %v2668, 0.0
        %v2728 = vadd.f32 %v2726, %v2727
        %v2729 = vsel %vm2175, %v2669, 0.0
        %v2730 = vadd.f32 %v2728, %v2729
        %v2731 = vsel %vm2175, %v2670, 0.0
        %v2732 = vadd.f32 %v2730, %v2731
        %v2733 = vsel %vm2175, %v2671, 0.0
        %v2734 = vadd.f32 %v2732, %v2733
        %v2735 = vrot.slane %v2734, 4
        %v2736 = vadd.f32 %v2734, %v2735
        %v2737 = vrot.slane %v2736, 2
        %v2738 = vadd.f32 %v2736, %v2737
        %v2739 = vrot.slane %v2738, 1
        %v2740 = vadd.f32 %v2738, %v2739
        %2741 = vst.msk [vmem:[%s269 + $0x1] sm:$0x1] %vm2277, %v2740
        %p2742 = scmp.lt.s32.totalorder %s24, 1
        %s2743 = scalar_select %p2742, %s24, 1
        %s2744 = smul.addr %s2743, 32
        %s2745 = smul.addr %s2744, 8
        %s2746 = scalar_lea.vmem %s3, %s2745
        %s2747 = sand.u32 %s126, 1
        %s2748 = scalar_lea.sflag [#allocation5], %s2747
        %s2749 = sand.u32 %s126, 1
        %s2750 = smul.addr %s2749, 2
        %s2751 = scalar_lea.vmem [#allocation4], %s2750
        %p2752 = scmp.lt.s32.totalorder %s24, 1
        %s2753 = scalar_select %p2752, %s24, 1
        %s2754 = smul.addr %s2753, 32
        %s2755 = smul.addr %s2754, 8
        %s2756 = scalar_lea.vmem %s5, %s2755
        %s2757 = sand.u32 %s178, 1
        %s2758 = scalar_lea.sflag [#allocation7], %s2757
        %s2759 = sand.u32 %s178, 1
        %s2760 = smul.addr %s2759, 2
        %s2761 = scalar_lea.vmem [#allocation6], %s2760
        // Predicated region
        $region33: #{tpu_custom_call.1} parent=31 // pred_check
          %p2762 = pneg %p110
        $region34: #{tpu_custom_call.1} parent=31 // pred_check_branch
          %2764 = sbr.rel (%p2762) target = $region36
        $region35: #{tpu_custom_call.1} parent=31 // pred_region
          _
        $region36: #{tpu_custom_call.1} parent=31 // pred_fallthru
          _
        // Predicated region
        $region37: #{tpu_custom_call.1} parent=31 // pred_check
          %p2765 = pneg %p136
        $region38: #{tpu_custom_call.1} parent=31 // pred_check_branch
          %2767 = sbr.rel (%p2765) target = $region40
        $region39: #{tpu_custom_call.1} parent=31 // pred_region
          %2769 = vsyncadd %s2748, 0
          %s2770 = smul.addr %s24, 2
          %s2771 = scalar_lea.hbm %s4, %s2770
          %s2773 = sshll.u32 %s2751, 4
          %s2774 = int_to_ptr.vmem [resolvable:$true] %s2773
          %s2775 = sshll.u32 %s2771, 4
          %s2776 = int_to_ptr.hbm [resolvable:$true] %s2775
          %2778 = dma.vmem_to_hbm [thread:$0]  %s2774, 32, %s2776, %s2748
        $region40: #{tpu_custom_call.1} parent=31 // pred_fallthru
          _
        // Predicated region
        $region41: #{tpu_custom_call.1} parent=31 // pred_check
          %p2779 = pneg %p162
        $region42: #{tpu_custom_call.1} parent=31 // pred_check_branch
          %2781 = sbr.rel (%p2779) target = $region44
        $region43: #{tpu_custom_call.1} parent=31 // pred_region
          _
        $region44: #{tpu_custom_call.1} parent=31 // pred_fallthru
          _
        // Predicated region
        $region45: #{tpu_custom_call.1} parent=31 // pred_check
          %p2782 = pneg %p188
        $region46: #{tpu_custom_call.1} parent=31 // pred_check_branch
          %2784 = sbr.rel (%p2782) target = $region48
        $region47: #{tpu_custom_call.1} parent=31 // pred_region
          %2786 = vsyncadd %s2758, 0
          %s2787 = smul.addr %s24, 2
          %s2788 = scalar_lea.hbm %s6, %s2787
          %s2790 = sshll.u32 %s2761, 4
          %s2791 = int_to_ptr.vmem [resolvable:$true] %s2790
          %s2792 = sshll.u32 %s2788, 4
          %s2793 = int_to_ptr.hbm [resolvable:$true] %s2792
          %2795 = dma.vmem_to_hbm [thread:$0]  %s2791, 32, %s2793, %s2758
        $region48: #{tpu_custom_call.1} parent=31 // pred_fallthru
          _
      $region32: #{tpu_custom_call.1} parent=5 // pred_fallthru
        _
      %p2796 = scmp.le.s32.totalorder 2, %s19
      // Predicated region
      $region49: #{tpu_custom_call.1} parent=5 // pred_check
        %p2797 = pneg %p2796
      $region50: #{tpu_custom_call.1} parent=5 // pred_check_branch
        %2799 = sbr.rel (%p2797) target = $region52
      $region51: #{tpu_custom_call.1} parent=5 // pred_region
        %s2800 = ssub.s32 %s19, 2
        // Predicated region
        $region53: #{tpu_custom_call.1} parent=51 // pred_check
          %p2801 = pneg %p116
        $region54: #{tpu_custom_call.1} parent=51 // pred_check_branch
          %2803 = sbr.rel (%p2801) target = $region56
        $region55: #{tpu_custom_call.1} parent=51 // pred_region
          %p2804 = scmp.lt.s32.totalorder %s25, 1
          %s2805 = scalar_select %p2804, %s25, 1
          %s2806 = smul.addr %s2805, 32
          %s2807 = smul.addr %s2806, 8
          %s2808 = scalar_lea.vmem %s3, %s2807
        $region56: #{tpu_custom_call.1} parent=51 // pred_fallthru
          _
        // Predicated region
        $region57: #{tpu_custom_call.1} parent=51 // pred_check
          %p2809 = pneg %p142
        $region58: #{tpu_custom_call.1} parent=51 // pred_check_branch
          %2811 = sbr.rel (%p2809) target = $region60
        $region59: #{tpu_custom_call.1} parent=51 // pred_region
          %s2812 = sand.u32 %s127, 1
          %s2813 = scalar_lea.sflag [#allocation5], %s2812
          %s2814 = sand.u32 %s127, 1
          %s2815 = smul.addr %s2814, 2
          %s2816 = scalar_lea.vmem [#allocation4], %s2815
          %2818 = dma.done %s2813, 32
        $region60: #{tpu_custom_call.1} parent=51 // pred_fallthru
          _
        // Predicated region
        $region61: #{tpu_custom_call.1} parent=51 // pred_check
          %p2819 = pneg %p168
        $region62: #{tpu_custom_call.1} parent=51 // pred_check_branch
          %2821 = sbr.rel (%p2819) target = $region64
        $region63: #{tpu_custom_call.1} parent=51 // pred_region
          %p2822 = scmp.lt.s32.totalorder %s25, 1
          %s2823 = scalar_select %p2822, %s25, 1
          %s2824 = smul.addr %s2823, 32
          %s2825 = smul.addr %s2824, 8
          %s2826 = scalar_lea.vmem %s5, %s2825
        $region64: #{tpu_custom_call.1} parent=51 // pred_fallthru
          _
        // Predicated region
        $region65: #{tpu_custom_call.1} parent=51 // pred_check
          %p2827 = pneg %p194
        $region66: #{tpu_custom_call.1} parent=51 // pred_check_branch
          %2829 = sbr.rel (%p2827) target = $region68
        $region67: #{tpu_custom_call.1} parent=51 // pred_region
          %s2830 = sand.u32 %s179, 1
          %s2831 = scalar_lea.sflag [#allocation7], %s2830
          %s2832 = sand.u32 %s179, 1
          %s2833 = smul.addr %s2832, 2
          %s2834 = scalar_lea.vmem [#allocation6], %s2833
          %2836 = dma.done %s2831, 32
        $region68: #{tpu_custom_call.1} parent=51 // pred_fallthru
          _
      $region52: #{tpu_custom_call.1} parent=5 // pred_fallthru
        _
    $region6: #{tpu_custom_call.1} parent=1 // loop_footer
      %s23 = sadd.s32 1, %s19
    $region7: #{tpu_custom_call.1} parent=1 // loop_footer_branch
      %18 = sbr.rel target = $region3
    $region8: #{tpu_custom_call.1} parent=1 // loop_exit
      _
    %2837 = vsyncpa [#allocation5], 1
    %s2838 = scalar_lea.sflag [#allocation5], 1
    %2839 = vsyncpa %s2838, 1
    %2840 = vsyncpa [#allocation7], 1
    %s2841 = scalar_lea.sflag [#allocation7], 1
    %2842 = vsyncpa %s2841, 1

</llo_original>
